<compile_context>
chip_gen: v6e
topology: v6e:2x2x1
jax: 0.10.0
libtpu: 0.0.40
codegen_flags: <defaults>
</compile_context>

<pallas_src>
from functools import partial

import numpy as np

import jax
import jax.numpy as jnp
from jax.experimental import pallas as pl
from jax.experimental.pallas import tpu as pltpu


# ------------------------------- fused kernel ---------------------------------

def _cnn_fused_kernel(x_ref, w1_ref, b1_ref, w2_ref, b2_ref, wfc_ref, bfc_ref,
                      o_ref, s1_ref, s2_ref):
    f32 = jnp.float32
    nb = o_ref.shape[0]                       # images in this grid step

    # ---- stage conv1 input with zero padding rows (y-pad); pads are rewritten
    #      every step so megacore grid-sharding can never see uninitialized VMEM.
    s1_ref[0:1] = jnp.zeros((1, nb, 28), f32)
    s1_ref[29:30] = jnp.zeros((1, nb, 28), f32)
    s1_ref[1:29] = x_ref[...]                                   # rows 1..28 = image
    s2_ref[0:1] = jnp.zeros((1, nb, 128), f32)
    s2_ref[15:16] = jnp.zeros((1, nb, 128), f32)

    # ---- conv1 (3x3, 1->8) + bias + ReLU: 3 matmuls, M = 28*nb, N = 256 ---------
    # Output row-group y uses staged groups y, y+1, y+2 for kernel rows 0,1,2.
    acc1 = jnp.dot(s1_ref[0:28].reshape(28 * nb, 28), w1_ref[0],
                   preferred_element_type=f32)
    acc1 = acc1 + jnp.dot(s1_ref[1:29].reshape(28 * nb, 28), w1_ref[1],
                          preferred_element_type=f32)
    acc1 = acc1 + jnp.dot(s1_ref[2:30].reshape(28 * nb, 28), w1_ref[2],
                          preferred_element_type=f32)
    r1 = jnp.maximum(acc1 + b1_ref[...], 0.0)                   # (28*nb, 256)

    # ---- max-pool #1: parity max (lanes) + row-pair max (sublane slabs) ---------
    xp1 = jnp.maximum(r1[:, :128], r1[:, 128:])                 # (28*nb, 128)
    xp1 = xp1.reshape(14, 2, nb, 128)
    # Result is conv2's zero-x-padded input (slots 0/15 stay 0); store into the
    # y-padded staging buffer rows 1..14.
    s2_ref[1:15] = jnp.maximum(xp1[:, 0], xp1[:, 1])            # (14, nb, 128)

    # ---- conv2 (3x3, 8->16) + bias + ReLU: 3 matmuls, M = 14*nb, K = 128, N = 256
    acc2 = jnp.dot(s2_ref[0:14].reshape(14 * nb, 128), w2_ref[0],
                   preferred_element_type=f32)
    acc2 = acc2 + jnp.dot(s2_ref[1:15].reshape(14 * nb, 128), w2_ref[1],
                          preferred_element_type=f32)
    acc2 = acc2 + jnp.dot(s2_ref[2:16].reshape(14 * nb, 128), w2_ref[2],
                          preferred_element_type=f32)
    r2 = jnp.maximum(acc2 + b2_ref[...], 0.0)                   # (14*nb, 256)

    # ---- max-pool #2 ------------------------------------------------------------
    xp2 = jnp.maximum(r2[:, :128], r2[:, 128:])                 # (14*nb, 128)
    xp2 = xp2.reshape(7, 2, nb, 128)
    pooled2 = jnp.maximum(xp2[:, 0], xp2[:, 1])                 # (7, nb, 128)

    # ---- fc (784 -> 10): 7 matmuls with M = nb, accumulated in vregs ------------
    acc = jnp.zeros((nb, 10), f32)
    for y in range(7):
        acc = acc + jnp.dot(pooled2[y], wfc_ref[y], preferred_element_type=f32)
    o_ref[...] = (acc + bfc_ref[...]).astype(o_ref.dtype)


# --------------------------- parameter preparation -----------------------------

def prepare_params(w1, b1, w2, b2, wfc, bfc):
    """Re-layout PyTorch-convention parameters for the fused kernel (done once).

    conv1 RHS w1r[ky]: (28, 256).  Column = 128*par + 8*slot + cout, slot in 1..14
      holds conv1 output x = 2*(slot-1)+par; row = unpadded input x; slots 0/15 and
      out-of-range horizontal taps are zero (they provide conv2's x zero-pad).
    conv2 RHS w2r[ky]: (128, 256).  Row = 8*in_slot + cin (in_slot = padded x),
      column = 128*par + 16*s + cout, s in 0..6 holds conv2 output x = 2*s+par;
      output slot 7 is zero (zero FC rows).
    fc wfcr: (7, 128, 10) with lane 16*x + c matching pooled conv2's layout and
      PyTorch's flatten order c*49 + y*7 + x.
    """
    w1 = np.asarray(w1, np.float32)     # (8, 1, 3, 3)
    b1 = np.asarray(b1, np.float32)     # (8,)
    w2 = np.asarray(w2, np.float32)     # (16, 8, 3, 3)
    b2 = np.asarray(b2, np.float32)     # (16,)
    wfc = np.asarray(wfc, np.float32)   # (10, 784)
    bfc = np.asarray(bfc, np.float32)   # (10,)
    C1, C2 = 8, 16

    w1r = np.zeros((3, 28, 256), np.float32)
    b1r = np.zeros((1, 256), np.float32)
    for ky in range(3):
        for par in range(2):
            for s in range(1, 15):                      # output slot -> conv2 pad slot
                xo = s - 1
                for dx in range(3):
                    xin = 2 * xo + par + dx - 1
                    if 0 <= xin < 28:
                        w1r[ky, xin, 128 * par + 8 * s:128 * par + 8 * s + C1] = \
                            w1[:, 0, ky, dx]
    for par in range(2):
        for s in range(1, 15):
            b1r[0, 128 * par + 8 * s:128 * par + 8 * s + C1] = b1

    w2r = np.zeros((3, 128, 256), np.float32)
    b2r = np.zeros((1, 256), np.float32)
    for ky in range(3):
        for par in range(2):
            for s in range(7):
                for dx in range(3):
                    sin = 2 * s + par + dx              # padded input x slot, 0..15
                    w2r[ky, sin * C1:(sin + 1) * C1,
                        128 * par + C2 * s:128 * par + C2 * (s + 1)] = \
                        w2[:, :, ky, dx].T              # (cin, cout)
    for par in range(2):
        for s in range(7):
            b2r[0, 128 * par + C2 * s:128 * par + C2 * (s + 1)] = b2

    wfcr = np.zeros((7, 128, 10), np.float32)
    for y in range(7):
        for x in range(7):
            for c in range(C2):
                wfcr[y, C2 * x + c, :] = wfc[:, c * 49 + y * 7 + x]
    bfcr = bfc[None, :]                                 # (1, 10)
    return tuple(jnp.asarray(a) for a in (w1r, b1r, w2r, b2r, wfcr, bfcr))


# --------------------------------- forward -------------------------------------

@partial(jax.jit, static_argnames=("block_b",))
def cnn_forward(x_nchw, prepped, block_b=8):
    w1r, b1r, w2r, b2r, wfcr, bfcr = prepped
    assert block_b % 8 == 0, "block_b must be a multiple of 8 (sublane tiling)"
    B = x_nchw.shape[0]
    Bp = ((B + block_b - 1) // block_b) * block_b
    x = x_nchw[:, 0, :, :].astype(jnp.float32)          # (B, 28, 28)
    if Bp != B:
        x = jnp.pad(x, ((0, Bp - B), (0, 0), (0, 0)))
    xt = jnp.transpose(x, (1, 0, 2))                    # (28, Bp, 28): row-major stacking

    out = pl.pallas_call(
        _cnn_fused_kernel,
        out_shape=jax.ShapeDtypeStruct((Bp, 10), jnp.float32),
        grid=(Bp // block_b,),
        in_specs=[
            pl.BlockSpec((28, block_b, 28), lambda i: (0, i, 0)),
            pl.BlockSpec(w1r.shape, lambda i: (0, 0, 0)),   # weights: constant index
            pl.BlockSpec(b1r.shape, lambda i: (0, 0)),      #  -> fetched once, VMEM-resident
            pl.BlockSpec(w2r.shape, lambda i: (0, 0, 0)),
            pl.BlockSpec(b2r.shape, lambda i: (0, 0)),
            pl.BlockSpec(wfcr.shape, lambda i: (0, 0, 0)),
            pl.BlockSpec(bfcr.shape, lambda i: (0, 0)),
        ],
        out_specs=pl.BlockSpec((block_b, 10), lambda i: (i, 0)),
        scratch_shapes=[
            pltpu.VMEM((30, block_b, 28), jnp.float32),   # conv1 input, y-zero-padded
            pltpu.VMEM((16, block_b, 128), jnp.float32),  # conv2 input, y-zero-padded
        ],
        compiler_params=pltpu.CompilerParams(
            dimension_semantics=("parallel",)),
    )(xt, w1r, b1r, w2r, b2r, wfcr, bfcr)
    return out[:B]


# ----------------------------- pure-JAX reference ------------------------------

def cnn_reference(x_nchw, params):
    w1, b1, w2, b2, wfc, bfc = params
    dn = ("NCHW", "OIHW", "NCHW")
    hp = jax.lax.Precision.HIGHEST

    def conv_relu(x, w, b):
        y = jax.lax.conv_general_dilated(x, w, (1, 1), ((1, 1), (1, 1)),
                                         dimension_numbers=dn, precision=hp)
        return jnp.maximum(y + b.reshape(1, -1, 1, 1), 0.0)

    def pool(x):
        return jax.lax.reduce_window(x, -jnp.inf, jax.lax.max,
                                     (1, 1, 2, 2), (1, 1, 2, 2), "VALID")

    x = pool(conv_relu(x_nchw, w1, b1))
    x = pool(conv_relu(x, w2, b2))
    x = x.reshape(x.shape[0], -1)
    return jnp.dot(x, wfc.T, precision=hp) + bfc


# ----------------------------------- main ---------------------------------------

if __name__ == "__main__":
    key = jax.random.PRNGKey(0)
    ks = jax.random.split(key, 7)
    B = 32                                   # 4 grid steps of 8 images each
    # IN_CHANNEL = 784 = 16*7*7 implies a 28x28 single-channel input (MNIST-like).
    x = jax.random.normal(ks[0], (B, 1, 28, 28), jnp.float32)

    def uinit(k, shape, fan_in):
        bound = 1.0 / (fan_in ** 0.5)
        return jax.random.uniform(k, shape, jnp.float32, -bound, bound)

    w1 = uinit(ks[1], (8, 1, 3, 3), 1 * 9)
    b1 = uinit(ks[2], (8,), 1 * 9)
    w2 = uinit(ks[3], (16, 8, 3, 3), 8 * 9)
    b2 = uinit(ks[4], (16,), 8 * 9)
    wfc = uinit(ks[5], (10, 784), 784)
    bfc = uinit(ks[6], (10,), 784)
    params = (w1, b1, w2, b2, wfc, bfc)

    prepped = prepare_params(*params)
    out = jax.block_until_ready(cnn_forward(x, prepped, block_b=8))
    ref = cnn_reference(x, params)
    assert out.shape == (B, 10), out.shape
    assert jnp.allclose(out, ref, atol=1e-2, rtol=1e-2), \
        float(jnp.max(jnp.abs(out - ref)))
    print("KERNEL_OK")
</pallas_src>

<mosaic_0001>
module attributes {stable_mosaic.version = 11 : i64} {
  func.func @_cnn_fused_kernel(%arg0: i32, %arg1: memref<28x8x28xf32, #tpu.memory_space<vmem>>, %arg2: memref<3x28x256xf32, #tpu.memory_space<vmem>>, %arg3: memref<1x256xf32, #tpu.memory_space<vmem>>, %arg4: memref<3x128x256xf32, #tpu.memory_space<vmem>>, %arg5: memref<1x256xf32, #tpu.memory_space<vmem>>, %arg6: memref<7x128x10xf32, #tpu.memory_space<vmem>>, %arg7: memref<1x10xf32, #tpu.memory_space<vmem>>, %arg8: memref<8x10xf32, #tpu.memory_space<vmem>>, %arg9: memref<30x8x28xf32, #tpu.memory_space<vmem>>, %arg10: memref<16x8x128xf32, #tpu.memory_space<vmem>>) attributes {dimension_semantics = [#tpu.dimension_semantics<parallel>], iteration_bounds = array<i64: 4>, scalar_prefetch = 0 : i64, scratch_operands = 2 : i64, tpu.core_type = #tpu.core_type<tc>, window_params = [{transform_indices = @transform_0, window_bounds = array<i64: 28, 8, 28>}, {pipeline_mode = #tpu.pipeline_mode<synchronous>, transform_indices = @transform_1, window_bounds = array<i64: 3, 28, 256>}, {pipeline_mode = #tpu.pipeline_mode<synchronous>, transform_indices = @transform_2, window_bounds = array<i64: 1, 256>}, {pipeline_mode = #tpu.pipeline_mode<synchronous>, transform_indices = @transform_3, window_bounds = array<i64: 3, 128, 256>}, {pipeline_mode = #tpu.pipeline_mode<synchronous>, transform_indices = @transform_4, window_bounds = array<i64: 1, 256>}, {pipeline_mode = #tpu.pipeline_mode<synchronous>, transform_indices = @transform_5, window_bounds = array<i64: 7, 128, 10>}, {pipeline_mode = #tpu.pipeline_mode<synchronous>, transform_indices = @transform_6, window_bounds = array<i64: 1, 10>}, {transform_indices = @transform_7, window_bounds = array<i64: 8, 10>}]} {
    %cst = arith.constant 0.000000e+00 : f32
    %0 = vector.broadcast %cst : f32 to vector<1x8x28xf32>
    %c0 = arith.constant 0 : index
    %c0_0 = arith.constant 0 : index
    %c0_1 = arith.constant 0 : index
    %1 = vector.load %arg9[%c0, %c0_0, %c0_1] : memref<30x8x28xf32, #tpu.memory_space<vmem>>, vector<1x8x28xf32>
    tpu.vector_store %arg9[%c0, %c0_0, %c0_1], %0 {strides = array<i32>} : memref<30x8x28xf32, #tpu.memory_space<vmem>>, vector<1x8x28xf32>,
    %cst_2 = arith.constant 0.000000e+00 : f32
    %2 = vector.broadcast %cst_2 : f32 to vector<1x8x28xf32>
    %c29 = arith.constant 29 : index
    %c0_3 = arith.constant 0 : index
    %c0_4 = arith.constant 0 : index
    %3 = vector.load %arg9[%c29, %c0_3, %c0_4] : memref<30x8x28xf32, #tpu.memory_space<vmem>>, vector<1x8x28xf32>
    tpu.vector_store %arg9[%c29, %c0_3, %c0_4], %2 {strides = array<i32>} : memref<30x8x28xf32, #tpu.memory_space<vmem>>, vector<1x8x28xf32>,
    %c0_5 = arith.constant 0 : index
    %c0_6 = arith.constant 0 : index
    %c0_7 = arith.constant 0 : index
    %4 = vector.load %arg1[%c0_5, %c0_6, %c0_7] : memref<28x8x28xf32, #tpu.memory_space<vmem>>, vector<28x8x28xf32>
    %c1 = arith.constant 1 : index
    %c0_8 = arith.constant 0 : index
    %c0_9 = arith.constant 0 : index
    %5 = vector.load %arg9[%c1, %c0_8, %c0_9] : memref<30x8x28xf32, #tpu.memory_space<vmem>>, vector<28x8x28xf32>
    tpu.vector_store %arg9[%c1, %c0_8, %c0_9], %4 {strides = array<i32>} : memref<30x8x28xf32, #tpu.memory_space<vmem>>, vector<28x8x28xf32>,
    %cst_10 = arith.constant 0.000000e+00 : f32
    %6 = vector.broadcast %cst_10 : f32 to vector<1x8x128xf32>
    %c0_11 = arith.constant 0 : index
    %c0_12 = arith.constant 0 : index
    %c0_13 = arith.constant 0 : index
    %7 = vector.load %arg10[%c0_11, %c0_12, %c0_13] : memref<16x8x128xf32, #tpu.memory_space<vmem>>, vector<1x8x128xf32>
    tpu.vector_store %arg10[%c0_11, %c0_12, %c0_13], %6 {strides = array<i32>} : memref<16x8x128xf32, #tpu.memory_space<vmem>>, vector<1x8x128xf32>,
    %cst_14 = arith.constant 0.000000e+00 : f32
    %8 = vector.broadcast %cst_14 : f32 to vector<1x8x128xf32>
    %c15 = arith.constant 15 : index
    %c0_15 = arith.constant 0 : index
    %c0_16 = arith.constant 0 : index
    %9 = vector.load %arg10[%c15, %c0_15, %c0_16] : memref<16x8x128xf32, #tpu.memory_space<vmem>>, vector<1x8x128xf32>
    tpu.vector_store %arg10[%c15, %c0_15, %c0_16], %8 {strides = array<i32>} : memref<16x8x128xf32, #tpu.memory_space<vmem>>, vector<1x8x128xf32>,
    %c0_17 = arith.constant 0 : index
    %c0_18 = arith.constant 0 : index
    %c0_19 = arith.constant 0 : index
    %10 = vector.load %arg9[%c0_17, %c0_18, %c0_19] : memref<30x8x28xf32, #tpu.memory_space<vmem>>, vector<28x8x28xf32>
    %11 = vector.shape_cast %10 : vector<28x8x28xf32> to vector<224x28xf32>
    %c0_20 = arith.constant 0 : index
    %c0_21 = arith.constant 0 : index
    %c0_22 = arith.constant 0 : index
    %12 = vector.load %arg2[%c0_20, %c0_21, %c0_22] : memref<3x28x256xf32, #tpu.memory_space<vmem>>, vector<1x28x256xf32>
    %13 = vector.shape_cast %12 : vector<1x28x256xf32> to vector<28x256xf32>
    %cst_23 = arith.constant dense<0.000000e+00> : vector<224x256xf32>
    %14 = tpu.matmul %11, %13, %cst_23 {dimension_numbers = #tpu.dot_dimension_numbers<[1], [0], [0], [1], [0, 0, 1, 1], [], []>} : vector<224x28xf32>, vector<28x256xf32>, vector<224x256xf32> -> vector<224x256xf32>
    %c1_24 = arith.constant 1 : index
    %c0_25 = arith.constant 0 : index
    %c0_26 = arith.constant 0 : index
    %15 = vector.load %arg9[%c1_24, %c0_25, %c0_26] : memref<30x8x28xf32, #tpu.memory_space<vmem>>, vector<28x8x28xf32>
    %16 = vector.shape_cast %15 : vector<28x8x28xf32> to vector<224x28xf32>
    %c1_27 = arith.constant 1 : index
    %c0_28 = arith.constant 0 : index
    %c0_29 = arith.constant 0 : index
    %17 = vector.load %arg2[%c1_27, %c0_28, %c0_29] : memref<3x28x256xf32, #tpu.memory_space<vmem>>, vector<1x28x256xf32>
    %18 = vector.shape_cast %17 : vector<1x28x256xf32> to vector<28x256xf32>
    %cst_30 = arith.constant dense<0.000000e+00> : vector<224x256xf32>
    %19 = tpu.matmul %16, %18, %cst_30 {dimension_numbers = #tpu.dot_dimension_numbers<[1], [0], [0], [1], [0, 0, 1, 1], [], []>} : vector<224x28xf32>, vector<28x256xf32>, vector<224x256xf32> -> vector<224x256xf32>
    %20 = arith.addf %14, %19 : vector<224x256xf32>
    %c2 = arith.constant 2 : index
    %c0_31 = arith.constant 0 : index
    %c0_32 = arith.constant 0 : index
    %21 = vector.load %arg9[%c2, %c0_31, %c0_32] : memref<30x8x28xf32, #tpu.memory_space<vmem>>, vector<28x8x28xf32>
    %22 = vector.shape_cast %21 : vector<28x8x28xf32> to vector<224x28xf32>
    %c2_33 = arith.constant 2 : index
    %c0_34 = arith.constant 0 : index
    %c0_35 = arith.constant 0 : index
    %23 = vector.load %arg2[%c2_33, %c0_34, %c0_35] : memref<3x28x256xf32, #tpu.memory_space<vmem>>, vector<1x28x256xf32>
    %24 = vector.shape_cast %23 : vector<1x28x256xf32> to vector<28x256xf32>
    %cst_36 = arith.constant dense<0.000000e+00> : vector<224x256xf32>
    %25 = tpu.matmul %22, %24, %cst_36 {dimension_numbers = #tpu.dot_dimension_numbers<[1], [0], [0], [1], [0, 0, 1, 1], [], []>} : vector<224x28xf32>, vector<28x256xf32>, vector<224x256xf32> -> vector<224x256xf32>
    %26 = arith.addf %20, %25 : vector<224x256xf32>
    %c0_37 = arith.constant 0 : index
    %c0_38 = arith.constant 0 : index
    %27 = vector.load %arg3[%c0_37, %c0_38] : memref<1x256xf32, #tpu.memory_space<vmem>>, vector<1x256xf32>
    %28 = vector.broadcast %27 : vector<1x256xf32> to vector<224x256xf32>
    %29 = arith.addf %26, %28 : vector<224x256xf32>
    %cst_39 = arith.constant 0.000000e+00 : f32
    %30 = vector.broadcast %cst_39 : f32 to vector<224x256xf32>
    %31 = arith.maximumf %29, %30 : vector<224x256xf32>
    %32 = vector.extract_strided_slice %31 {offsets = [0, 0], sizes = [224, 128], strides = [1, 1]} : vector<224x256xf32> to vector<224x128xf32>
    %33 = vector.extract_strided_slice %31 {offsets = [0, 128], sizes = [224, 128], strides = [1, 1]} : vector<224x256xf32> to vector<224x128xf32>
    %34 = arith.maximumf %32, %33 : vector<224x128xf32>
    %35 = vector.shape_cast %34 : vector<224x128xf32> to vector<14x2x8x128xf32>
    %36 = vector.extract_strided_slice %35 {offsets = [0, 0, 0, 0], sizes = [14, 1, 8, 128], strides = [1, 1, 1, 1]} : vector<14x2x8x128xf32> to vector<14x1x8x128xf32>
    %37 = vector.shape_cast %36 : vector<14x1x8x128xf32> to vector<14x8x128xf32>
    %38 = vector.extract_strided_slice %35 {offsets = [0, 1, 0, 0], sizes = [14, 1, 8, 128], strides = [1, 1, 1, 1]} : vector<14x2x8x128xf32> to vector<14x1x8x128xf32>
    %39 = vector.shape_cast %38 : vector<14x1x8x128xf32> to vector<14x8x128xf32>
    %40 = arith.maximumf %37, %39 : vector<14x8x128xf32>
    %c1_40 = arith.constant 1 : index
    %c0_41 = arith.constant 0 : index
    %c0_42 = arith.constant 0 : index
    %41 = vector.load %arg10[%c1_40, %c0_41, %c0_42] : memref<16x8x128xf32, #tpu.memory_space<vmem>>, vector<14x8x128xf32>
    tpu.vector_store %arg10[%c1_40, %c0_41, %c0_42], %40 {strides = array<i32>} : memref<16x8x128xf32, #tpu.memory_space<vmem>>, vector<14x8x128xf32>,
    %c0_43 = arith.constant 0 : index
    %c0_44 = arith.constant 0 : index
    %c0_45 = arith.constant 0 : index
    %42 = vector.load %arg10[%c0_43, %c0_44, %c0_45] : memref<16x8x128xf32, #tpu.memory_space<vmem>>, vector<14x8x128xf32>
    %43 = vector.shape_cast %42 : vector<14x8x128xf32> to vector<112x128xf32>
    %c0_46 = arith.constant 0 : index
    %c0_47 = arith.constant 0 : index
    %c0_48 = arith.constant 0 : index
    %44 = vector.load %arg4[%c0_46, %c0_47, %c0_48] : memref<3x128x256xf32, #tpu.memory_space<vmem>>, vector<1x128x256xf32>
    %45 = vector.shape_cast %44 : vector<1x128x256xf32> to vector<128x256xf32>
    %cst_49 = arith.constant dense<0.000000e+00> : vector<112x256xf32>
    %46 = tpu.matmul %43, %45, %cst_49 {dimension_numbers = #tpu.dot_dimension_numbers<[1], [0], [0], [1], [0, 0, 1, 1], [], []>} : vector<112x128xf32>, vector<128x256xf32>, vector<112x256xf32> -> vector<112x256xf32>
    %c1_50 = arith.constant 1 : index
    %c0_51 = arith.constant 0 : index
    %c0_52 = arith.constant 0 : index
    %47 = vector.load %arg10[%c1_50, %c0_51, %c0_52] : memref<16x8x128xf32, #tpu.memory_space<vmem>>, vector<14x8x128xf32>
    %48 = vector.shape_cast %47 : vector<14x8x128xf32> to vector<112x128xf32>
    %c1_53 = arith.constant 1 : index
    %c0_54 = arith.constant 0 : index
    %c0_55 = arith.constant 0 : index
    %49 = vector.load %arg4[%c1_53, %c0_54, %c0_55] : memref<3x128x256xf32, #tpu.memory_space<vmem>>, vector<1x128x256xf32>
    %50 = vector.shape_cast %49 : vector<1x128x256xf32> to vector<128x256xf32>
    %cst_56 = arith.constant dense<0.000000e+00> : vector<112x256xf32>
    %51 = tpu.matmul %48, %50, %cst_56 {dimension_numbers = #tpu.dot_dimension_numbers<[1], [0], [0], [1], [0, 0, 1, 1], [], []>} : vector<112x128xf32>, vector<128x256xf32>, vector<112x256xf32> -> vector<112x256xf32>
    %52 = arith.addf %46, %51 : vector<112x256xf32>
    %c2_57 = arith.constant 2 : index
    %c0_58 = arith.constant 0 : index
    %c0_59 = arith.constant 0 : index
    %53 = vector.load %arg10[%c2_57, %c0_58, %c0_59] : memref<16x8x128xf32, #tpu.memory_space<vmem>>, vector<14x8x128xf32>
    %54 = vector.shape_cast %53 : vector<14x8x128xf32> to vector<112x128xf32>
    %c2_60 = arith.constant 2 : index
    %c0_61 = arith.constant 0 : index
    %c0_62 = arith.constant 0 : index
    %55 = vector.load %arg4[%c2_60, %c0_61, %c0_62] : memref<3x128x256xf32, #tpu.memory_space<vmem>>, vector<1x128x256xf32>
    %56 = vector.shape_cast %55 : vector<1x128x256xf32> to vector<128x256xf32>
    %cst_63 = arith.constant dense<0.000000e+00> : vector<112x256xf32>
    %57 = tpu.matmul %54, %56, %cst_63 {dimension_numbers = #tpu.dot_dimension_numbers<[1], [0], [0], [1], [0, 0, 1, 1], [], []>} : vector<112x128xf32>, vector<128x256xf32>, vector<112x256xf32> -> vector<112x256xf32>
    %58 = arith.addf %52, %57 : vector<112x256xf32>
    %c0_64 = arith.constant 0 : index
    %c0_65 = arith.constant 0 : index
    %59 = vector.load %arg5[%c0_64, %c0_65] : memref<1x256xf32, #tpu.memory_space<vmem>>, vector<1x256xf32>
    %60 = vector.broadcast %59 : vector<1x256xf32> to vector<112x256xf32>
    %61 = arith.addf %58, %60 : vector<112x256xf32>
    %cst_66 = arith.constant 0.000000e+00 : f32
    %62 = vector.broadcast %cst_66 : f32 to vector<112x256xf32>
    %63 = arith.maximumf %61, %62 : vector<112x256xf32>
    %64 = vector.extract_strided_slice %63 {offsets = [0, 0], sizes = [112, 128], strides = [1, 1]} : vector<112x256xf32> to vector<112x128xf32>
    %65 = vector.extract_strided_slice %63 {offsets = [0, 128], sizes = [112, 128], strides = [1, 1]} : vector<112x256xf32> to vector<112x128xf32>
    %66 = arith.maximumf %64, %65 : vector<112x128xf32>
    %67 = vector.shape_cast %66 : vector<112x128xf32> to vector<7x2x8x128xf32>
    %68 = vector.extract_strided_slice %67 {offsets = [0, 0, 0, 0], sizes = [7, 1, 8, 128], strides = [1, 1, 1, 1]} : vector<7x2x8x128xf32> to vector<7x1x8x128xf32>
    %69 = vector.shape_cast %68 : vector<7x1x8x128xf32> to vector<7x8x128xf32>
    %70 = vector.extract_strided_slice %67 {offsets = [0, 1, 0, 0], sizes = [7, 1, 8, 128], strides = [1, 1, 1, 1]} : vector<7x2x8x128xf32> to vector<7x1x8x128xf32>
    %71 = vector.shape_cast %70 : vector<7x1x8x128xf32> to vector<7x8x128xf32>
    %72 = arith.maximumf %69, %71 : vector<7x8x128xf32>
    %cst_67 = arith.constant 0.000000e+00 : f32
    %73 = vector.broadcast %cst_67 : f32 to vector<8x10xf32>
    %74 = vector.extract_strided_slice %72 {offsets = [0, 0, 0], sizes = [1, 8, 128], strides = [1, 1, 1]} : vector<7x8x128xf32> to vector<1x8x128xf32>
    %75 = vector.shape_cast %74 : vector<1x8x128xf32> to vector<8x128xf32>
    %c0_68 = arith.constant 0 : index
    %c0_69 = arith.constant 0 : index
    %c0_70 = arith.constant 0 : index
    %76 = vector.load %arg6[%c0_68, %c0_69, %c0_70] : memref<7x128x10xf32, #tpu.memory_space<vmem>>, vector<1x128x10xf32>
    %77 = vector.shape_cast %76 : vector<1x128x10xf32> to vector<128x10xf32>
    %cst_71 = arith.constant dense<0.000000e+00> : vector<8x10xf32>
    %78 = tpu.matmul %75, %77, %cst_71 {dimension_numbers = #tpu.dot_dimension_numbers<[1], [0], [0], [1], [0, 0, 1, 1], [], []>} : vector<8x128xf32>, vector<128x10xf32>, vector<8x10xf32> -> vector<8x10xf32>
    %79 = arith.addf %73, %78 : vector<8x10xf32>
    %80 = vector.extract_strided_slice %72 {offsets = [1, 0, 0], sizes = [1, 8, 128], strides = [1, 1, 1]} : vector<7x8x128xf32> to vector<1x8x128xf32>
    %81 = vector.shape_cast %80 : vector<1x8x128xf32> to vector<8x128xf32>
    %c1_72 = arith.constant 1 : index
    %c0_73 = arith.constant 0 : index
    %c0_74 = arith.constant 0 : index
    %82 = vector.load %arg6[%c1_72, %c0_73, %c0_74] : memref<7x128x10xf32, #tpu.memory_space<vmem>>, vector<1x128x10xf32>
    %83 = vector.shape_cast %82 : vector<1x128x10xf32> to vector<128x10xf32>
    %cst_75 = arith.constant dense<0.000000e+00> : vector<8x10xf32>
    %84 = tpu.matmul %81, %83, %cst_75 {dimension_numbers = #tpu.dot_dimension_numbers<[1], [0], [0], [1], [0, 0, 1, 1], [], []>} : vector<8x128xf32>, vector<128x10xf32>, vector<8x10xf32> -> vector<8x10xf32>
    %85 = arith.addf %79, %84 : vector<8x10xf32>
    %86 = vector.extract_strided_slice %72 {offsets = [2, 0, 0], sizes = [1, 8, 128], strides = [1, 1, 1]} : vector<7x8x128xf32> to vector<1x8x128xf32>
    %87 = vector.shape_cast %86 : vector<1x8x128xf32> to vector<8x128xf32>
    %c2_76 = arith.constant 2 : index
    %c0_77 = arith.constant 0 : index
    %c0_78 = arith.constant 0 : index
    %88 = vector.load %arg6[%c2_76, %c0_77, %c0_78] : memref<7x128x10xf32, #tpu.memory_space<vmem>>, vector<1x128x10xf32>
    %89 = vector.shape_cast %88 : vector<1x128x10xf32> to vector<128x10xf32>
    %cst_79 = arith.constant dense<0.000000e+00> : vector<8x10xf32>
    %90 = tpu.matmul %87, %89, %cst_79 {dimension_numbers = #tpu.dot_dimension_numbers<[1], [0], [0], [1], [0, 0, 1, 1], [], []>} : vector<8x128xf32>, vector<128x10xf32>, vector<8x10xf32> -> vector<8x10xf32>
    %91 = arith.addf %85, %90 : vector<8x10xf32>
    %92 = vector.extract_strided_slice %72 {offsets = [3, 0, 0], sizes = [1, 8, 128], strides = [1, 1, 1]} : vector<7x8x128xf32> to vector<1x8x128xf32>
    %93 = vector.shape_cast %92 : vector<1x8x128xf32> to vector<8x128xf32>
    %c3 = arith.constant 3 : index
    %c0_80 = arith.constant 0 : index
    %c0_81 = arith.constant 0 : index
    %94 = vector.load %arg6[%c3, %c0_80, %c0_81] : memref<7x128x10xf32, #tpu.memory_space<vmem>>, vector<1x128x10xf32>
    %95 = vector.shape_cast %94 : vector<1x128x10xf32> to vector<128x10xf32>
    %cst_82 = arith.constant dense<0.000000e+00> : vector<8x10xf32>
    %96 = tpu.matmul %93, %95, %cst_82 {dimension_numbers = #tpu.dot_dimension_numbers<[1], [0], [0], [1], [0, 0, 1, 1], [], []>} : vector<8x128xf32>, vector<128x10xf32>, vector<8x10xf32> -> vector<8x10xf32>
    %97 = arith.addf %91, %96 : vector<8x10xf32>
    %98 = vector.extract_strided_slice %72 {offsets = [4, 0, 0], sizes = [1, 8, 128], strides = [1, 1, 1]} : vector<7x8x128xf32> to vector<1x8x128xf32>
    %99 = vector.shape_cast %98 : vector<1x8x128xf32> to vector<8x128xf32>
    %c4 = arith.constant 4 : index
    %c0_83 = arith.constant 0 : index
    %c0_84 = arith.constant 0 : index
    %100 = vector.load %arg6[%c4, %c0_83, %c0_84] : memref<7x128x10xf32, #tpu.memory_space<vmem>>, vector<1x128x10xf32>
    %101 = vector.shape_cast %100 : vector<1x128x10xf32> to vector<128x10xf32>
    %cst_85 = arith.constant dense<0.000000e+00> : vector<8x10xf32>
    %102 = tpu.matmul %99, %101, %cst_85 {dimension_numbers = #tpu.dot_dimension_numbers<[1], [0], [0], [1], [0, 0, 1, 1], [], []>} : vector<8x128xf32>, vector<128x10xf32>, vector<8x10xf32> -> vector<8x10xf32>
    %103 = arith.addf %97, %102 : vector<8x10xf32>
    %104 = vector.extract_strided_slice %72 {offsets = [5, 0, 0], sizes = [1, 8, 128], strides = [1, 1, 1]} : vector<7x8x128xf32> to vector<1x8x128xf32>
    %105 = vector.shape_cast %104 : vector<1x8x128xf32> to vector<8x128xf32>
    %c5 = arith.constant 5 : index
    %c0_86 = arith.constant 0 : index
    %c0_87 = arith.constant 0 : index
    %106 = vector.load %arg6[%c5, %c0_86, %c0_87] : memref<7x128x10xf32, #tpu.memory_space<vmem>>, vector<1x128x10xf32>
    %107 = vector.shape_cast %106 : vector<1x128x10xf32> to vector<128x10xf32>
    %cst_88 = arith.constant dense<0.000000e+00> : vector<8x10xf32>
    %108 = tpu.matmul %105, %107, %cst_88 {dimension_numbers = #tpu.dot_dimension_numbers<[1], [0], [0], [1], [0, 0, 1, 1], [], []>} : vector<8x128xf32>, vector<128x10xf32>, vector<8x10xf32> -> vector<8x10xf32>
    %109 = arith.addf %103, %108 : vector<8x10xf32>
    %110 = vector.extract_strided_slice %72 {offsets = [6, 0, 0], sizes = [1, 8, 128], strides = [1, 1, 1]} : vector<7x8x128xf32> to vector<1x8x128xf32>
    %111 = vector.shape_cast %110 : vector<1x8x128xf32> to vector<8x128xf32>
    %c6 = arith.constant 6 : index
    %c0_89 = arith.constant 0 : index
    %c0_90 = arith.constant 0 : index
    %112 = vector.load %arg6[%c6, %c0_89, %c0_90] : memref<7x128x10xf32, #tpu.memory_space<vmem>>, vector<1x128x10xf32>
    %113 = vector.shape_cast %112 : vector<1x128x10xf32> to vector<128x10xf32>
    %cst_91 = arith.constant dense<0.000000e+00> : vector<8x10xf32>
    %114 = tpu.matmul %111, %113, %cst_91 {dimension_numbers = #tpu.dot_dimension_numbers<[1], [0], [0], [1], [0, 0, 1, 1], [], []>} : vector<8x128xf32>, vector<128x10xf32>, vector<8x10xf32> -> vector<8x10xf32>
    %115 = arith.addf %109, %114 : vector<8x10xf32>
    %c0_92 = arith.constant 0 : index
    %c0_93 = arith.constant 0 : index
    %116 = vector.load %arg7[%c0_92, %c0_93] : memref<1x10xf32, #tpu.memory_space<vmem>>, vector<1x10xf32>
    %117 = vector.broadcast %116 : vector<1x10xf32> to vector<8x10xf32>
    %118 = arith.addf %115, %117 : vector<8x10xf32>
    %c0_94 = arith.constant 0 : index
    %c0_95 = arith.constant 0 : index
    %119 = vector.load %arg8[%c0_94, %c0_95] : memref<8x10xf32, #tpu.memory_space<vmem>>, vector<8x10xf32>
    tpu.vector_store %arg8[%c0_94, %c0_95], %118 {strides = array<i32>} : memref<8x10xf32, #tpu.memory_space<vmem>>, vector<8x10xf32>,
    return
  }
  func.func @transform_0(%arg0: i32) -> (i32, i32, i32) {
    %c0_i32 = arith.constant 0 : i32
    %c0_i32_0 = arith.constant 0 : i32
    %c0_i32_1 = arith.constant 0 : i32
    return %c0_i32, %arg0, %c0_i32_0 : i32, i32, i32
  }
  func.func @transform_1(%arg0: i32) -> (i32, i32, i32) {
    %c0_i32 = arith.constant 0 : i32
    %c0_i32_0 = arith.constant 0 : i32
    %c0_i32_1 = arith.constant 0 : i32
    %c0_i32_2 = arith.constant 0 : i32
    return %c0_i32, %c0_i32_0, %c0_i32_1 : i32, i32, i32
  }
  func.func @transform_2(%arg0: i32) -> (i32, i32) {
    %c0_i32 = arith.constant 0 : i32
    %c0_i32_0 = arith.constant 0 : i32
    %c0_i32_1 = arith.constant 0 : i32
    return %c0_i32, %c0_i32_0 : i32, i32
  }
  func.func @transform_3(%arg0: i32) -> (i32, i32, i32) {
    %c0_i32 = arith.constant 0 : i32
    %c0_i32_0 = arith.constant 0 : i32
    %c0_i32_1 = arith.constant 0 : i32
    %c0_i32_2 = arith.constant 0 : i32
    return %c0_i32, %c0_i32_0, %c0_i32_1 : i32, i32, i32
  }
  func.func @transform_4(%arg0: i32) -> (i32, i32) {
    %c0_i32 = arith.constant 0 : i32
    %c0_i32_0 = arith.constant 0 : i32
    %c0_i32_1 = arith.constant 0 : i32
    return %c0_i32, %c0_i32_0 : i32, i32
  }
  func.func @transform_5(%arg0: i32) -> (i32, i32, i32) {
    %c0_i32 = arith.constant 0 : i32
    %c0_i32_0 = arith.constant 0 : i32
    %c0_i32_1 = arith.constant 0 : i32
    %c0_i32_2 = arith.constant 0 : i32
    return %c0_i32, %c0_i32_0, %c0_i32_1 : i32, i32, i32
  }
  func.func @transform_6(%arg0: i32) -> (i32, i32) {
    %c0_i32 = arith.constant 0 : i32
    %c0_i32_0 = arith.constant 0 : i32
    %c0_i32_1 = arith.constant 0 : i32
    return %c0_i32, %c0_i32_0 : i32, i32
  }
  func.func @transform_7(%arg0: i32) -> (i32, i32) {
    %c0_i32 = arith.constant 0 : i32
    %c0_i32_0 = arith.constant 0 : i32
    return %arg0, %c0_i32 : i32, i32
  }
}

</mosaic_0001>

<llo_original>
// kernel: cnn_forward.1
$region0: #{cnn_forward.1}
  #allocation0 [shape = 'u32[]', space=smem, size = 0x4, offset = 0x4, fixed_abs, tag = 'smem constant byte address 0x4 - core index']
  #allocation1 [shape = 'u32[144,128]{1,0:T(1,128)}', space=vmem, size = 0x12000, scoped, tag = 'internal scratch']
  #allocation2 [shape = 'f32[30,8,28]{2,1,0:T(8,128)}', space=vmem, size = 0x1e000, scoped, tag = 'scratch operand']
  #allocation3 [shape = 'f32[16,8,128]{2,1,0:T(8,128)}', space=vmem, size = 0x10000, scoped, tag = 'scratch operand']
  %s0 = inlined_call_operand.vmem [shape: f32[28,32,28], index: 0, kind: input, shape index: {}]
  %s1 = inlined_call_operand.vmem [shape: f32[3,28,256], index: 1, kind: input, shape index: {}]
  %s2 = inlined_call_operand.vmem [shape: f32[1,256], index: 2, kind: input, shape index: {}]
  %s3 = inlined_call_operand.vmem [shape: f32[3,128,256], index: 3, kind: input, shape index: {}]
  %s4 = inlined_call_operand.vmem [shape: f32[1,256], index: 4, kind: input, shape index: {}]
  %s5 = inlined_call_operand.vmem [shape: f32[7,128,10], index: 5, kind: input, shape index: {}]
  %s6 = inlined_call_operand.vmem [shape: f32[1,10], index: 6, kind: input, shape index: {}]
  %s7 = inlined_call_operand.vmem [shape: f32[32,10], index: 7, kind: output, shape index: {}]
  %s8 = sld [smem:[#allocation0]]
  $region99: #{cnn_forward.1} parent=0
    _
  %s10 = ssub.s32 1, %s8
  %s11 = scalar_select 0, %s10, %s8
  $region1: #{cnn_forward.1} parent=0
    #allocation4 [shape = 'u8[229376]{0}', space=vmem, size = 0x38000, scoped, tag = 'input window, operand 0']
    loop: start=0, step=1, limit=6
    $region2: #{cnn_forward.1} parent=1 // loop_pre_header
      _
    $region3: #{cnn_forward.1} parent=1 // loop_header
      %s13 = sphi 0, %s17
      %p14 = scmp.ge.s32.totalorder %s13, 6
      %s23 = sphi 0, %s25
      %s26 = sphi 0, %s23
      %s27 = sphi 0, %s26
      %s43 = sphi 0, %s27
      %s47 = sphi 0, %s47
      %s49 = sphi 0, %s47
      %s50 = sphi 0, %s49
      %s64 = sphi 0, %s50
      %s68 = sphi 0, %s68
      %s70 = sphi 0, %s68
      %s71 = sphi 0, %s70
      %s85 = sphi 0, %s71
      %s89 = sphi 0, %s89
      %s91 = sphi 0, %s89
      %s92 = sphi 0, %s91
      %s106 = sphi 0, %s92
      %s110 = sphi 0, %s110
      %s112 = sphi 0, %s110
      %s113 = sphi 0, %s112
      %s127 = sphi 0, %s113
      %s131 = sphi 0, %s131
      %s133 = sphi 0, %s131
      %s134 = sphi 0, %s133
      %s148 = sphi 0, %s134
      %s152 = sphi 0, %s152
      %s154 = sphi 0, %s152
      %s155 = sphi 0, %s154
      %s169 = sphi 0, %s155
      %s175 = sphi 0, %s177
      %s178 = sphi 0, %s175
      %s179 = sphi 0, %s178
      %s195 = sphi 0, %s179
    $region4: #{cnn_forward.1} parent=1 // loop_header_branch
      %16 = sbr.rel (%p14) target = $region8
    $region5: #{cnn_forward.1} parent=1 // loop_body
      %s18 = ssub.s32 %s13, 1
      %s19 = ssub.s32 %s13, 2
      %s20 = sadd.s32 %s13, 1
      %s21 = ssub.s32 %s13, %s20
      %p22 = scmp.eq.s32.totalorder %s21, 0
      %s24 = sadd.s32 %s23, 1
      %s25 = scalar_select %p22, %s23, %s24
      %p28 = pneg %p22
      %p29 = scmp.eq.s32.totalorder %s13, 3
      %p30 = por %p28, %p29
      %p31 = scmp.ne.s32.totalorder %s23, %s26
      %p32 = scmp.eq.s32.totalorder %s13, 0
      %p33 = por %p31, %p32
      %p34 = scmp.ne.s32.totalorder %s23, %s26
      %p35 = scmp.eq.s32.totalorder %s18, 3
      %p36 = por %p34, %p35
      %p37 = scmp.ne.s32.totalorder %s26, %s27
      %p38 = scmp.eq.s32.totalorder %s18, 0
      %p39 = por %p37, %p38
      %p40 = scmp.ne.s32.totalorder %s26, %s27
      %p41 = scmp.eq.s32.totalorder %s19, 3
      %p42 = por %p40, %p41
      %p44 = scmp.ne.s32.totalorder %s27, %s43
      %p45 = scmp.eq.s32.totalorder %s19, 0
      %p46 = por %p44, %p45
      %s48 = sadd.s32 %s47, 1
      %p51 = scmp.eq.s32.totalorder %s13, 3
      %p52 = scmp.ne.s32.totalorder %s47, %s49
      %p53 = scmp.eq.s32.totalorder %s13, 0
      %p54 = por %p52, %p53
      %p55 = scmp.ne.s32.totalorder %s47, %s49
      %p56 = scmp.eq.s32.totalorder %s18, 3
      %p57 = por %p55, %p56
      %p58 = scmp.ne.s32.totalorder %s49, %s50
      %p59 = scmp.eq.s32.totalorder %s18, 0
      %p60 = por %p58, %p59
      %p61 = scmp.ne.s32.totalorder %s49, %s50
      %p62 = scmp.eq.s32.totalorder %s19, 3
      %p63 = por %p61, %p62
      %p65 = scmp.ne.s32.totalorder %s50, %s64
      %p66 = scmp.eq.s32.totalorder %s19, 0
      %p67 = por %p65, %p66
      %s69 = sadd.s32 %s68, 1
      %p72 = scmp.eq.s32.totalorder %s13, 3
      %p73 = scmp.ne.s32.totalorder %s68, %s70
      %p74 = scmp.eq.s32.totalorder %s13, 0
      %p75 = por %p73, %p74
      %p76 = scmp.ne.s32.totalorder %s68, %s70
      %p77 = scmp.eq.s32.totalorder %s18, 3
      %p78 = por %p76, %p77
      %p79 = scmp.ne.s32.totalorder %s70, %s71
      %p80 = scmp.eq.s32.totalorder %s18, 0
      %p81 = por %p79, %p80
      %p82 = scmp.ne.s32.totalorder %s70, %s71
      %p83 = scmp.eq.s32.totalorder %s19, 3
      %p84 = por %p82, %p83
      %p86 = scmp.ne.s32.totalorder %s71, %s85
      %p87 = scmp.eq.s32.totalorder %s19, 0
      %p88 = por %p86, %p87
      %s90 = sadd.s32 %s89, 1
      %p93 = scmp.eq.s32.totalorder %s13, 3
      %p94 = scmp.ne.s32.totalorder %s89, %s91
      %p95 = scmp.eq.s32.totalorder %s13, 0
      %p96 = por %p94, %p95
      %p97 = scmp.ne.s32.totalorder %s89, %s91
      %p98 = scmp.eq.s32.totalorder %s18, 3
      %p99 = por %p97, %p98
      %p100 = scmp.ne.s32.totalorder %s91, %s92
      %p101 = scmp.eq.s32.totalorder %s18, 0
      %p102 = por %p100, %p101
      %p103 = scmp.ne.s32.totalorder %s91, %s92
      %p104 = scmp.eq.s32.totalorder %s19, 3
      %p105 = por %p103, %p104
      %p107 = scmp.ne.s32.totalorder %s92, %s106
      %p108 = scmp.eq.s32.totalorder %s19, 0
      %p109 = por %p107, %p108
      %s111 = sadd.s32 %s110, 1
      %p114 = scmp.eq.s32.totalorder %s13, 3
      %p115 = scmp.ne.s32.totalorder %s110, %s112
      %p116 = scmp.eq.s32.totalorder %s13, 0
      %p117 = por %p115, %p116
      %p118 = scmp.ne.s32.totalorder %s110, %s112
      %p119 = scmp.eq.s32.totalorder %s18, 3
      %p120 = por %p118, %p119
      %p121 = scmp.ne.s32.totalorder %s112, %s113
      %p122 = scmp.eq.s32.totalorder %s18, 0
      %p123 = por %p121, %p122
      %p124 = scmp.ne.s32.totalorder %s112, %s113
      %p125 = scmp.eq.s32.totalorder %s19, 3
      %p126 = por %p124, %p125
      %p128 = scmp.ne.s32.totalorder %s113, %s127
      %p129 = scmp.eq.s32.totalorder %s19, 0
      %p130 = por %p128, %p129
      %s132 = sadd.s32 %s131, 1
      %p135 = scmp.eq.s32.totalorder %s13, 3
      %p136 = scmp.ne.s32.totalorder %s131, %s133
      %p137 = scmp.eq.s32.totalorder %s13, 0
      %p138 = por %p136, %p137
      %p139 = scmp.ne.s32.totalorder %s131, %s133
      %p140 = scmp.eq.s32.totalorder %s18, 3
      %p141 = por %p139, %p140
      %p142 = scmp.ne.s32.totalorder %s133, %s134
      %p143 = scmp.eq.s32.totalorder %s18, 0
      %p144 = por %p142, %p143
      %p145 = scmp.ne.s32.totalorder %s133, %s134
      %p146 = scmp.eq.s32.totalorder %s19, 3
      %p147 = por %p145, %p146
      %p149 = scmp.ne.s32.totalorder %s134, %s148
      %p150 = scmp.eq.s32.totalorder %s19, 0
      %p151 = por %p149, %p150
      %s153 = sadd.s32 %s152, 1
      %p156 = scmp.eq.s32.totalorder %s13, 3
      %p157 = scmp.ne.s32.totalorder %s152, %s154
      %p158 = scmp.eq.s32.totalorder %s13, 0
      %p159 = por %p157, %p158
      %p160 = scmp.ne.s32.totalorder %s152, %s154
      %p161 = scmp.eq.s32.totalorder %s18, 3
      %p162 = por %p160, %p161
      %p163 = scmp.ne.s32.totalorder %s154, %s155
      %p164 = scmp.eq.s32.totalorder %s18, 0
      %p165 = por %p163, %p164
      %p166 = scmp.ne.s32.totalorder %s154, %s155
      %p167 = scmp.eq.s32.totalorder %s19, 3
      %p168 = por %p166, %p167
      %p170 = scmp.ne.s32.totalorder %s155, %s169
      %p171 = scmp.eq.s32.totalorder %s19, 0
      %p172 = por %p170, %p171
      %s173 = ssub.s32 %s13, %s20
      %p174 = scmp.eq.s32.totalorder %s173, 0
      %s176 = sadd.s32 %s175, 1
      %s177 = scalar_select %p174, %s175, %s176
      %p180 = pneg %p174
      %p181 = scmp.eq.s32.totalorder %s13, 3
      %p182 = por %p180, %p181
      %p183 = scmp.ne.s32.totalorder %s175, %s178
      %p184 = scmp.eq.s32.totalorder %s13, 0
      %p185 = por %p183, %p184
      %p186 = scmp.ne.s32.totalorder %s175, %s178
      %p187 = scmp.eq.s32.totalorder %s18, 3
      %p188 = por %p186, %p187
      %p189 = scmp.ne.s32.totalorder %s178, %s179
      %p190 = scmp.eq.s32.totalorder %s18, 0
      %p191 = por %p189, %p190
      %p192 = scmp.ne.s32.totalorder %s178, %s179
      %p193 = scmp.eq.s32.totalorder %s19, 3
      %p194 = por %p192, %p193
      %p196 = scmp.ne.s32.totalorder %s179, %s195
      %p197 = scmp.eq.s32.totalorder %s19, 0
      %p198 = por %p196, %p197
      %p199 = scmp.le.s32.totalorder 1, %s13
      %p200 = scmp.lt.s32.totalorder %s13, 5
      %p201 = pnand %p199, %p200
      %p202 = pneg %p201
      // Predicated region
      $region9: #{cnn_forward.1} parent=5 // pred_check
        _
      $region10: #{cnn_forward.1} parent=5 // pred_check_branch
        %204 = sbr.rel (%p201) target = $region12
      $region11: #{cnn_forward.1} parent=5 // pred_region
        %s205 = ssub.s32 %s13, 1
        // Predicated region
        $region13: #{cnn_forward.1} parent=11 // pred_check
          %p206 = pneg %p60
        $region14: #{cnn_forward.1} parent=11 // pred_check_branch
          %208 = sbr.rel (%p206) target = $region16
        $region15: #{cnn_forward.1} parent=11 // pred_region
          _
        $region16: #{cnn_forward.1} parent=11 // pred_fallthru
          _
        // Predicated region
        $region17: #{cnn_forward.1} parent=11 // pred_check
          %p209 = pneg %p81
        $region18: #{cnn_forward.1} parent=11 // pred_check_branch
          %211 = sbr.rel (%p209) target = $region20
        $region19: #{cnn_forward.1} parent=11 // pred_region
          _
        $region20: #{cnn_forward.1} parent=11 // pred_fallthru
          _
        // Predicated region
        $region21: #{cnn_forward.1} parent=11 // pred_check
          %p212 = pneg %p102
        $region22: #{cnn_forward.1} parent=11 // pred_check_branch
          %214 = sbr.rel (%p212) target = $region24
        $region23: #{cnn_forward.1} parent=11 // pred_region
          _
        $region24: #{cnn_forward.1} parent=11 // pred_fallthru
          _
        // Predicated region
        $region25: #{cnn_forward.1} parent=11 // pred_check
          %p215 = pneg %p123
        $region26: #{cnn_forward.1} parent=11 // pred_check_branch
          %217 = sbr.rel (%p215) target = $region28
        $region27: #{cnn_forward.1} parent=11 // pred_region
          _
        $region28: #{cnn_forward.1} parent=11 // pred_fallthru
          _
        // Predicated region
        $region29: #{cnn_forward.1} parent=11 // pred_check
          %p218 = pneg %p144
        $region30: #{cnn_forward.1} parent=11 // pred_check_branch
          %220 = sbr.rel (%p218) target = $region32
        $region31: #{cnn_forward.1} parent=11 // pred_region
          _
        $region32: #{cnn_forward.1} parent=11 // pred_fallthru
          _
        // Predicated region
        $region33: #{cnn_forward.1} parent=11 // pred_check
          %p221 = pneg %p165
        $region34: #{cnn_forward.1} parent=11 // pred_check_branch
          %223 = sbr.rel (%p221) target = $region36
        $region35: #{cnn_forward.1} parent=11 // pred_region
          _
        $region36: #{cnn_forward.1} parent=11 // pred_fallthru
          _
      $region12: #{cnn_forward.1} parent=5 // pred_fallthru
        _
      %p224 = scmp.lt.s32.totalorder %s13, 4
      // Predicated region
      $region37: #{cnn_forward.1} parent=5 // pred_check
        %p225 = pneg %p224
      $region38: #{cnn_forward.1} parent=5 // pred_check_branch
        %227 = sbr.rel (%p225) target = $region40
      $region39: #{cnn_forward.1} parent=5 // pred_region
        // Predicated region
        $region41: #{cnn_forward.1} parent=39 // pred_check
          %p228 = pneg %p33
        $region42: #{cnn_forward.1} parent=39 // pred_check_branch
          %230 = sbr.rel (%p228) target = $region44
        $region43: #{cnn_forward.1} parent=39 // pred_region
          %s231 = sand.u32 %s23, 1
          %s232 = sand.u32 %s23, 1
          %s233 = smul.addr %s232, 224
          %s234 = scalar_lea.vmem [#allocation4], %s233
          %s235 = smul.addr %s13, 8
          %s236 = scalar_lea.vmem %s0, %s235
          // Predicated region
          $region45: #{cnn_forward.1} parent=43 // pred_check
            _
          $region46: #{cnn_forward.1} parent=43 // pred_check_branch
            %238 = sbr.rel (0) target = $region48
          $region47: #{cnn_forward.1} parent=43 // pred_region
            // Predicated region
            $region49: #{cnn_forward.1} parent=47 // pred_check
              _
            $region50: #{cnn_forward.1} parent=47 // pred_check_branch
              %240 = sbr.rel (0) target = $region52
            $region51: #{cnn_forward.1} parent=47 // pred_region
              // Predicated region
              $region64: #{cnn_forward.1} parent=51 // pred_check
                _
              $region65: #{cnn_forward.1} parent=51 // pred_check_branch
                %310 = sbr.rel (0) target = $region67
              $region66: #{cnn_forward.1} parent=51 // pred_region
                loop: start=0, step=1, limit=1
                $region68: #{cnn_forward.1} parent=66 // loop_pre_header
                  _
                $region69: #{cnn_forward.1} parent=66 // loop_header
                  %s312 = sphi 0, %s316
                  %p313 = scmp.ge.s32.totalorder %s312, 1
                  %s317 = sphi %s236, %s236
                  %s318 = sphi %s234, %s234
                $region70: #{cnn_forward.1} parent=66 // loop_header_branch
                  %315 = sbr.rel (%p313) target = $region74
                $region71: #{cnn_forward.1} parent=66 // loop_body
                  %v319 = vld [vmem:[%s317] sm:$0xff]
                  %320 = vst [vmem:[%s318] sm:$0xff] %v319
                  %v321 = vld [vmem:[%s317 + $0x20] sm:$0xff]
                  %322 = vst [vmem:[%s318 + $0x8] sm:$0xff] %v321
                  %v323 = vld [vmem:[%s317 + $0x40] sm:$0xff]
                  %324 = vst [vmem:[%s318 + $0x10] sm:$0xff] %v323
                  %v325 = vld [vmem:[%s317 + $0x60] sm:$0xff]
                  %326 = vst [vmem:[%s318 + $0x18] sm:$0xff] %v325
                  %v327 = vld [vmem:[%s317 + $0x80] sm:$0xff]
                  %328 = vst [vmem:[%s318 + $0x20] sm:$0xff] %v327
                  %v329 = vld [vmem:[%s317 + $0xa0] sm:$0xff]
                  %330 = vst [vmem:[%s318 + $0x28] sm:$0xff] %v329
                  %v331 = vld [vmem:[%s317 + $0xc0] sm:$0xff]
                  %332 = vst [vmem:[%s318 + $0x30] sm:$0xff] %v331
                  %v333 = vld [vmem:[%s317 + $0xe0] sm:$0xff]
                  %334 = vst [vmem:[%s318 + $0x38] sm:$0xff] %v333
                  %v335 = vld [vmem:[%s317 + $0x100] sm:$0xff]
                  %336 = vst [vmem:[%s318 + $0x40] sm:$0xff] %v335
                  %v337 = vld [vmem:[%s317 + $0x120] sm:$0xff]
                  %338 = vst [vmem:[%s318 + $0x48] sm:$0xff] %v337
                  %v339 = vld [vmem:[%s317 + $0x140] sm:$0xff]
                  %340 = vst [vmem:[%s318 + $0x50] sm:$0xff] %v339
                  %v341 = vld [vmem:[%s317 + $0x160] sm:$0xff]
                  %342 = vst [vmem:[%s318 + $0x58] sm:$0xff] %v341
                  %v343 = vld [vmem:[%s317 + $0x180] sm:$0xff]
                  %344 = vst [vmem:[%s318 + $0x60] sm:$0xff] %v343
                  %v345 = vld [vmem:[%s317 + $0x1a0] sm:$0xff]
                  %346 = vst [vmem:[%s318 + $0x68] sm:$0xff] %v345
                  %v347 = vld [vmem:[%s317 + $0x1c0] sm:$0xff]
                  %348 = vst [vmem:[%s318 + $0x70] sm:$0xff] %v347
                  %v349 = vld [vmem:[%s317 + $0x1e0] sm:$0xff]
                  %350 = vst [vmem:[%s318 + $0x78] sm:$0xff] %v349
                  %v351 = vld [vmem:[%s317 + $0x200] sm:$0xff]
                  %352 = vst [vmem:[%s318 + $0x80] sm:$0xff] %v351
                  %v353 = vld [vmem:[%s317 + $0x220] sm:$0xff]
                  %354 = vst [vmem:[%s318 + $0x88] sm:$0xff] %v353
                  %v355 = vld [vmem:[%s317 + $0x240] sm:$0xff]
                  %356 = vst [vmem:[%s318 + $0x90] sm:$0xff] %v355
                  %v357 = vld [vmem:[%s317 + $0x260] sm:$0xff]
                  %358 = vst [vmem:[%s318 + $0x98] sm:$0xff] %v357
                  %v359 = vld [vmem:[%s317 + $0x280] sm:$0xff]
                  %360 = vst [vmem:[%s318 + $0xa0] sm:$0xff] %v359
                  %v361 = vld [vmem:[%s317 + $0x2a0] sm:$0xff]
                  %362 = vst [vmem:[%s318 + $0xa8] sm:$0xff] %v361
                  %v363 = vld [vmem:[%s317 + $0x2c0] sm:$0xff]
                  %364 = vst [vmem:[%s318 + $0xb0] sm:$0xff] %v363
                  %v365 = vld [vmem:[%s317 + $0x2e0] sm:$0xff]
                  %366 = vst [vmem:[%s318 + $0xb8] sm:$0xff] %v365
                  %v367 = vld [vmem:[%s317 + $0x300] sm:$0xff]
                  %368 = vst [vmem:[%s318 + $0xc0] sm:$0xff] %v367
                  %v369 = vld [vmem:[%s317 + $0x320] sm:$0xff]
                  %370 = vst [vmem:[%s318 + $0xc8] sm:$0xff] %v369
                  %v371 = vld [vmem:[%s317 + $0x340] sm:$0xff]
                  %372 = vst [vmem:[%s318 + $0xd0] sm:$0xff] %v371
                  %v373 = vld [vmem:[%s317 + $0x360] sm:$0xff]
                  %374 = vst [vmem:[%s318 + $0xd8] sm:$0xff] %v373
                $region72: #{cnn_forward.1} parent=66 // loop_footer
                  %s316 = sadd.s32 1, %s312
                $region73: #{cnn_forward.1} parent=66 // loop_footer_branch
                  %311 = sbr.rel target = $region69
                $region74: #{cnn_forward.1} parent=66 // loop_exit
                  _
              $region67: #{cnn_forward.1} parent=51 // pred_fallthru
                _
              // Predicated region
              $region75: #{cnn_forward.1} parent=51 // pred_check
                _
              $region76: #{cnn_forward.1} parent=51 // pred_check_branch
                %376 = sbr.rel target = $region78
              $region77: #{cnn_forward.1} parent=51 // pred_region
                _
              $region78: #{cnn_forward.1} parent=51 // pred_fallthru
                _
            $region52: #{cnn_forward.1} parent=47 // pred_fallthru
              _
            // Predicated region
            $region53: #{cnn_forward.1} parent=47 // pred_check
              _
            $region54: #{cnn_forward.1} parent=47 // pred_check_branch
              %242 = sbr.rel target = $region56
            $region55: #{cnn_forward.1} parent=47 // pred_region
              %s244 = ssub.s32 256, 1
              loop: start=0, step=1, limit=1
              $region57: #{cnn_forward.1} parent=55 // loop_pre_header
                _
              $region58: #{cnn_forward.1} parent=55 // loop_header
                %s246 = sphi 0, %s250
                %p247 = scmp.ge.s32.totalorder %s246, 1
                %s251 = sphi %s236, %s236
                %s252 = sphi %s234, %s234
              $region59: #{cnn_forward.1} parent=55 // loop_header_branch
                %249 = sbr.rel (%p247) target = $region63
              $region60: #{cnn_forward.1} parent=55 // loop_body
                %v253 = vld [vmem:[%s251] sm:%s244]
                %254 = vst [vmem:[%s252] sm:%s244] %v253
                %v255 = vld [vmem:[%s251 + $0x20] sm:%s244]
                %256 = vst [vmem:[%s252 + $0x8] sm:%s244] %v255
                %v257 = vld [vmem:[%s251 + $0x40] sm:%s244]
                %258 = vst [vmem:[%s252 + $0x10] sm:%s244] %v257
                %v259 = vld [vmem:[%s251 + $0x60] sm:%s244]
                %260 = vst [vmem:[%s252 + $0x18] sm:%s244] %v259
                %v261 = vld [vmem:[%s251 + $0x80] sm:%s244]
                %262 = vst [vmem:[%s252 + $0x20] sm:%s244] %v261
                %v263 = vld [vmem:[%s251 + $0xa0] sm:%s244]
                %264 = vst [vmem:[%s252 + $0x28] sm:%s244] %v263
                %v265 = vld [vmem:[%s251 + $0xc0] sm:%s244]
                %266 = vst [vmem:[%s252 + $0x30] sm:%s244] %v265
                %v267 = vld [vmem:[%s251 + $0xe0] sm:%s244]
                %268 = vst [vmem:[%s252 + $0x38] sm:%s244] %v267
                %v269 = vld [vmem:[%s251 + $0x100] sm:%s244]
                %270 = vst [vmem:[%s252 + $0x40] sm:%s244] %v269
                %v271 = vld [vmem:[%s251 + $0x120] sm:%s244]
                %272 = vst [vmem:[%s252 + $0x48] sm:%s244] %v271
                %v273 = vld [vmem:[%s251 + $0x140] sm:%s244]
                %274 = vst [vmem:[%s252 + $0x50] sm:%s244] %v273
                %v275 = vld [vmem:[%s251 + $0x160] sm:%s244]
                %276 = vst [vmem:[%s252 + $0x58] sm:%s244] %v275
                %v277 = vld [vmem:[%s251 + $0x180] sm:%s244]
                %278 = vst [vmem:[%s252 + $0x60] sm:%s244] %v277
                %v279 = vld [vmem:[%s251 + $0x1a0] sm:%s244]
                %280 = vst [vmem:[%s252 + $0x68] sm:%s244] %v279
                %v281 = vld [vmem:[%s251 + $0x1c0] sm:%s244]
                %282 = vst [vmem:[%s252 + $0x70] sm:%s244] %v281
                %v283 = vld [vmem:[%s251 + $0x1e0] sm:%s244]
                %284 = vst [vmem:[%s252 + $0x78] sm:%s244] %v283
                %v285 = vld [vmem:[%s251 + $0x200] sm:%s244]
                %286 = vst [vmem:[%s252 + $0x80] sm:%s244] %v285
                %v287 = vld [vmem:[%s251 + $0x220] sm:%s244]
                %288 = vst [vmem:[%s252 + $0x88] sm:%s244] %v287
                %v289 = vld [vmem:[%s251 + $0x240] sm:%s244]
                %290 = vst [vmem:[%s252 + $0x90] sm:%s244] %v289
                %v291 = vld [vmem:[%s251 + $0x260] sm:%s244]
                %292 = vst [vmem:[%s252 + $0x98] sm:%s244] %v291
                %v293 = vld [vmem:[%s251 + $0x280] sm:%s244]
                %294 = vst [vmem:[%s252 + $0xa0] sm:%s244] %v293
                %v295 = vld [vmem:[%s251 + $0x2a0] sm:%s244]
                %296 = vst [vmem:[%s252 + $0xa8] sm:%s244] %v295
                %v297 = vld [vmem:[%s251 + $0x2c0] sm:%s244]
                %298 = vst [vmem:[%s252 + $0xb0] sm:%s244] %v297
                %v299 = vld [vmem:[%s251 + $0x2e0] sm:%s244]
                %300 = vst [vmem:[%s252 + $0xb8] sm:%s244] %v299
                %v301 = vld [vmem:[%s251 + $0x300] sm:%s244]
                %302 = vst [vmem:[%s252 + $0xc0] sm:%s244] %v301
                %v303 = vld [vmem:[%s251 + $0x320] sm:%s244]
                %304 = vst [vmem:[%s252 + $0xc8] sm:%s244] %v303
                %v305 = vld [vmem:[%s251 + $0x340] sm:%s244]
                %306 = vst [vmem:[%s252 + $0xd0] sm:%s244] %v305
                %v307 = vld [vmem:[%s251 + $0x360] sm:%s244]
                %308 = vst [vmem:[%s252 + $0xd8] sm:%s244] %v307
              $region61: #{cnn_forward.1} parent=55 // loop_footer
                %s250 = sadd.s32 1, %s246
              $region62: #{cnn_forward.1} parent=55 // loop_footer_branch
                %245 = sbr.rel target = $region58
              $region63: #{cnn_forward.1} parent=55 // loop_exit
                _
            $region56: #{cnn_forward.1} parent=47 // pred_fallthru
              _
          $region48: #{cnn_forward.1} parent=43 // pred_fallthru
            _
          %377 = vnop
        $region44: #{cnn_forward.1} parent=39 // pred_fallthru
          _
      $region40: #{cnn_forward.1} parent=5 // pred_fallthru
        _
      %p378 = scmp.le.s32.totalorder 1, %s13
      %p379 = scmp.lt.s32.totalorder %s13, 5
      %p380 = pnand %p378, %p379
      %p381 = pneg %p380
      // Predicated region
      $region79: #{cnn_forward.1} parent=5 // pred_check
        _
      $region80: #{cnn_forward.1} parent=5 // pred_check_branch
        %383 = sbr.rel (%p380) target = $region82
      $region81: #{cnn_forward.1} parent=5 // pred_region
        %s384 = ssub.s32 %s13, 1
        %s385 = sand.u32 %s26, 1
        %s386 = sand.u32 %s26, 1
        %s387 = smul.addr %s386, 224
        %s388 = scalar_lea.vmem [#allocation4], %s387
        // Predicated region
        $region83: #{cnn_forward.1} parent=81 // pred_check
          %p389 = pneg %p39
        $region84: #{cnn_forward.1} parent=81 // pred_check_branch
          %391 = sbr.rel (%p389) target = $region86
        $region85: #{cnn_forward.1} parent=81 // pred_region
          _
        $region86: #{cnn_forward.1} parent=81 // pred_fallthru
          _
        %s392 = sand.u32 %s26, 1
        %s393 = sand.u32 %s26, 1
        %s394 = smul.addr %s393, 224
        %s395 = scalar_lea.vmem [#allocation4], %s394
        %p396 = pneg %p39
        %p397 = pneg %p36
        %p398 = pneg %p60
        %p399 = pneg %p57
        %p400 = pneg %p81
        %p401 = pneg %p78
        %p402 = pneg %p102
        %p403 = pneg %p99
        %p404 = pneg %p123
        %p405 = pneg %p120
        %p406 = pneg %p144
        %p407 = pneg %p141
        %p408 = pneg %p165
        %p409 = pneg %p162
        %p410 = pneg %p191
        %p411 = pneg %p188
        %p412 = scmp.lt.s32.totalorder %s18, 3
        %s413 = scalar_select %p412, %s18, 3
        %s414 = smul.addr %s413, 8
        %s415 = scalar_lea.vmem %s7, %s414
        %p416 = scmp.lt.s32.totalorder %s18, 3
        %s417 = scalar_select %p416, %s18, 3
        %s418 = smul.addr %s417, 8
        %s419 = scalar_lea.vmem %s7, %s418
        %vm420 = vcmask 228352
        %421 = vst.msk [vmem:[#allocation2] sm:$0xff] %vm420, 0.0
        %s422 = scalar_lea.vmem [#allocation2], 232
        %423 = vst.msk [vmem:[%s422] sm:$0xff] %vm420, 0.0
        %v424 = vld [vmem:[%s388] sm:$0xff]
        %v425 = vld [vmem:[%s388 + $0x8] sm:$0xff]
        %v426 = vld [vmem:[%s388 + $0x10] sm:$0xff]
        %v427 = vld [vmem:[%s388 + $0x18] sm:$0xff]
        %v428 = vld [vmem:[%s388 + $0x20] sm:$0xff]
        %v429 = vld [vmem:[%s388 + $0x28] sm:$0xff]
        %v430 = vld [vmem:[%s388 + $0x30] sm:$0xff]
        %v431 = vld [vmem:[%s388 + $0x38] sm:$0xff]
        %v432 = vld [vmem:[%s388 + $0x40] sm:$0xff]
        %v433 = vld [vmem:[%s388 + $0x48] sm:$0xff]
        %v434 = vld [vmem:[%s388 + $0x50] sm:$0xff]
        %v435 = vld [vmem:[%s388 + $0x58] sm:$0xff]
        %v436 = vld [vmem:[%s388 + $0x60] sm:$0xff]
        %v437 = vld [vmem:[%s388 + $0x68] sm:$0xff]
        %v438 = vld [vmem:[%s388 + $0x70] sm:$0xff]
        %v439 = vld [vmem:[%s388 + $0x78] sm:$0xff]
        %v440 = vld [vmem:[%s388 + $0x80] sm:$0xff]
        %v441 = vld [vmem:[%s388 + $0x88] sm:$0xff]
        %v442 = vld [vmem:[%s388 + $0x90] sm:$0xff]
        %v443 = vld [vmem:[%s388 + $0x98] sm:$0xff]
        %v444 = vld [vmem:[%s388 + $0xa0] sm:$0xff]
        %v445 = vld [vmem:[%s388 + $0xa8] sm:$0xff]
        %v446 = vld [vmem:[%s388 + $0xb0] sm:$0xff]
        %v447 = vld [vmem:[%s388 + $0xb8] sm:$0xff]
        %v448 = vld [vmem:[%s388 + $0xc0] sm:$0xff]
        %v449 = vld [vmem:[%s388 + $0xc8] sm:$0xff]
        %v450 = vld [vmem:[%s388 + $0xd0] sm:$0xff]
        %v451 = vld [vmem:[%s388 + $0xd8] sm:$0xff]
        %s452 = scalar_lea.vmem [#allocation2], 8
        %453 = vst.msk [vmem:[%s452] sm:$0xff] %vm420, %v424
        %454 = vst.msk [vmem:[%s452 + $0x8] sm:$0xff] %vm420, %v425
        %455 = vst.msk [vmem:[%s452 + $0x10] sm:$0xff] %vm420, %v426
        %456 = vst.msk [vmem:[%s452 + $0x18] sm:$0xff] %vm420, %v427
        %457 = vst.msk [vmem:[%s452 + $0x20] sm:$0xff] %vm420, %v428
        %458 = vst.msk [vmem:[%s452 + $0x28] sm:$0xff] %vm420, %v429
        %459 = vst.msk [vmem:[%s452 + $0x30] sm:$0xff] %vm420, %v430
        %460 = vst.msk [vmem:[%s452 + $0x38] sm:$0xff] %vm420, %v431
        %461 = vst.msk [vmem:[%s452 + $0x40] sm:$0xff] %vm420, %v432
        %462 = vst.msk [vmem:[%s452 + $0x48] sm:$0xff] %vm420, %v433
        %463 = vst.msk [vmem:[%s452 + $0x50] sm:$0xff] %vm420, %v434
        %464 = vst.msk [vmem:[%s452 + $0x58] sm:$0xff] %vm420, %v435
        %465 = vst.msk [vmem:[%s452 + $0x60] sm:$0xff] %vm420, %v436
        %466 = vst.msk [vmem:[%s452 + $0x68] sm:$0xff] %vm420, %v437
        %467 = vst.msk [vmem:[%s452 + $0x70] sm:$0xff] %vm420, %v438
        %468 = vst.msk [vmem:[%s452 + $0x78] sm:$0xff] %vm420, %v439
        %469 = vst.msk [vmem:[%s452 + $0x80] sm:$0xff] %vm420, %v440
        %470 = vst.msk [vmem:[%s452 + $0x88] sm:$0xff] %vm420, %v441
        %471 = vst.msk [vmem:[%s452 + $0x90] sm:$0xff] %vm420, %v442
        %472 = vst.msk [vmem:[%s452 + $0x98] sm:$0xff] %vm420, %v443
        %473 = vst.msk [vmem:[%s452 + $0xa0] sm:$0xff] %vm420, %v444
        %474 = vst.msk [vmem:[%s452 + $0xa8] sm:$0xff] %vm420, %v445
        %475 = vst.msk [vmem:[%s452 + $0xb0] sm:$0xff] %vm420, %v446
        %476 = vst.msk [vmem:[%s452 + $0xb8] sm:$0xff] %vm420, %v447
        %477 = vst.msk [vmem:[%s452 + $0xc0] sm:$0xff] %vm420, %v448
        %478 = vst.msk [vmem:[%s452 + $0xc8] sm:$0xff] %vm420, %v449
        %479 = vst.msk [vmem:[%s452 + $0xd0] sm:$0xff] %vm420, %v450
        %480 = vst.msk [vmem:[%s452 + $0xd8] sm:$0xff] %vm420, %v451
        %481 = vst [vmem:[#allocation3] sm:$0xff] 0.0
        %s482 = scalar_lea.vmem [#allocation3], 120
        %483 = vst [vmem:[%s482] sm:$0xff] 0.0
        %v484 = vld [vmem:[#allocation2] sm:$0xff]
        %v485 = vld [vmem:[#allocation2 + $0x8] sm:$0xff]
        %v486 = vld [vmem:[#allocation2 + $0x10] sm:$0xff]
        %v487 = vld [vmem:[#allocation2 + $0x18] sm:$0xff]
        %v488 = vld [vmem:[#allocation2 + $0x20] sm:$0xff]
        %v489 = vld [vmem:[#allocation2 + $0x28] sm:$0xff]
        %v490 = vld [vmem:[#allocation2 + $0x30] sm:$0xff]
        %v491 = vld [vmem:[#allocation2 + $0x38] sm:$0xff]
        %v492 = vld [vmem:[#allocation2 + $0x40] sm:$0xff]
        %v493 = vld [vmem:[#allocation2 + $0x48] sm:$0xff]
        %v494 = vld [vmem:[#allocation2 + $0x50] sm:$0xff]
        %v495 = vld [vmem:[#allocation2 + $0x58] sm:$0xff]
        %v496 = vld [vmem:[#allocation2 + $0x60] sm:$0xff]
        %v497 = vld [vmem:[#allocation2 + $0x68] sm:$0xff]
        %v498 = vld [vmem:[#allocation2 + $0x70] sm:$0xff]
        %v499 = vld [vmem:[#allocation2 + $0x78] sm:$0xff]
        %v500 = vld [vmem:[#allocation2 + $0x80] sm:$0xff]
        %v501 = vld [vmem:[#allocation2 + $0x88] sm:$0xff]
        %v502 = vld [vmem:[#allocation2 + $0x90] sm:$0xff]
        %v503 = vld [vmem:[#allocation2 + $0x98] sm:$0xff]
        %v504 = vld [vmem:[#allocation2 + $0xa0] sm:$0xff]
        %v505 = vld [vmem:[#allocation2 + $0xa8] sm:$0xff]
        %v506 = vld [vmem:[#allocation2 + $0xb0] sm:$0xff]
        %v507 = vld [vmem:[#allocation2 + $0xb8] sm:$0xff]
        %v508 = vld [vmem:[#allocation2 + $0xc0] sm:$0xff]
        %v509 = vld [vmem:[#allocation2 + $0xc8] sm:$0xff]
        %v510 = vld [vmem:[#allocation2 + $0xd0] sm:$0xff]
        %v511 = vld [vmem:[#allocation2 + $0xd8] sm:$0xff]
        %v512 = vld [vmem:[%s1] sm:$0xff]
        %v513 = vld [vmem:[%s1 + $0x8] sm:$0xff]
        %v514 = vld [vmem:[%s1 + $0x10] sm:$0xff]
        %v515 = vld [vmem:[%s1 + $0x18] sm:$0xff]
        %v516 = vld [vmem:[%s1 + $0x20] sm:$0xff]
        %v517 = vld [vmem:[%s1 + $0x28] sm:$0xff]
        %v518 = vld [vmem:[%s1 + $0x30] sm:$0xf]
        %v519 = vld [vmem:[%s1 + $0x38] sm:$0xf]
        %v520 = vld [vmem:[%s452] sm:$0xff]
        %v521 = vld [vmem:[%s452 + $0x8] sm:$0xff]
        %v522 = vld [vmem:[%s452 + $0x10] sm:$0xff]
        %v523 = vld [vmem:[%s452 + $0x18] sm:$0xff]
        %v524 = vld [vmem:[%s452 + $0x20] sm:$0xff]
        %v525 = vld [vmem:[%s452 + $0x28] sm:$0xff]
        %v526 = vld [vmem:[%s452 + $0x30] sm:$0xff]
        %v527 = vld [vmem:[%s452 + $0x38] sm:$0xff]
        %v528 = vld [vmem:[%s452 + $0x40] sm:$0xff]
        %v529 = vld [vmem:[%s452 + $0x48] sm:$0xff]
        %v530 = vld [vmem:[%s452 + $0x50] sm:$0xff]
        %v531 = vld [vmem:[%s452 + $0x58] sm:$0xff]
        %v532 = vld [vmem:[%s452 + $0x60] sm:$0xff]
        %v533 = vld [vmem:[%s452 + $0x68] sm:$0xff]
        %v534 = vld [vmem:[%s452 + $0x70] sm:$0xff]
        %v535 = vld [vmem:[%s452 + $0x78] sm:$0xff]
        %v536 = vld [vmem:[%s452 + $0x80] sm:$0xff]
        %v537 = vld [vmem:[%s452 + $0x88] sm:$0xff]
        %v538 = vld [vmem:[%s452 + $0x90] sm:$0xff]
        %v539 = vld [vmem:[%s452 + $0x98] sm:$0xff]
        %v540 = vld [vmem:[%s452 + $0xa0] sm:$0xff]
        %v541 = vld [vmem:[%s452 + $0xa8] sm:$0xff]
        %v542 = vld [vmem:[%s452 + $0xb0] sm:$0xff]
        %v543 = vld [vmem:[%s452 + $0xb8] sm:$0xff]
        %v544 = vld [vmem:[%s452 + $0xc0] sm:$0xff]
        %v545 = vld [vmem:[%s452 + $0xc8] sm:$0xff]
        %v546 = vld [vmem:[%s452 + $0xd0] sm:$0xff]
        %v547 = vld [vmem:[%s452 + $0xd8] sm:$0xff]
        %s548 = scalar_lea.vmem %s1, 64
        %v549 = vld [vmem:[%s548] sm:$0xff]
        %v550 = vld [vmem:[%s548 + $0x8] sm:$0xff]
        %v551 = vld [vmem:[%s548 + $0x10] sm:$0xff]
        %v552 = vld [vmem:[%s548 + $0x18] sm:$0xff]
        %v553 = vld [vmem:[%s548 + $0x20] sm:$0xff]
        %v554 = vld [vmem:[%s548 + $0x28] sm:$0xff]
        %v555 = vld [vmem:[%s548 + $0x30] sm:$0xf]
        %v556 = vld [vmem:[%s548 + $0x38] sm:$0xf]
        %v558 = vsel %vm420, %v520, 0
        %v561 = vsel %vm420, %v521, 0
        %v564 = vsel %vm420, %v522, 0
        %v567 = vsel %vm420, %v523, 0
        %v570 = vsel %vm420, %v524, 0
        %v573 = vsel %vm420, %v525, 0
        %v576 = vsel %vm420, %v526, 0
        %v579 = vsel %vm420, %v527, 0
        %v582 = vsel %vm420, %v528, 0
        %v585 = vsel %vm420, %v529, 0
        %v588 = vsel %vm420, %v530, 0
        %v591 = vsel %vm420, %v531, 0
        %v594 = vsel %vm420, %v532, 0
        %v597 = vsel %vm420, %v533, 0
        %v600 = vsel %vm420, %v534, 0
        %v603 = vsel %vm420, %v535, 0
        %v606 = vsel %vm420, %v536, 0
        %v609 = vsel %vm420, %v537, 0
        %v612 = vsel %vm420, %v538, 0
        %v615 = vsel %vm420, %v539, 0
        %v618 = vsel %vm420, %v540, 0
        %v621 = vsel %vm420, %v541, 0
        %v624 = vsel %vm420, %v542, 0
        %v627 = vsel %vm420, %v543, 0
        %v630 = vsel %vm420, %v544, 0
        %v633 = vsel %vm420, %v545, 0
        %v636 = vsel %vm420, %v546, 0
        %v639 = vsel %vm420, %v547, 0
        %vm641 = vcmask 1043456
        %v643 = vsel %vm641, %v555, 0
        %v646 = vsel %vm641, %v556, 0
        %648 = vmatprep.subr.mxu0 0.0
        %649 = vmatpush1.msra.mxu0 0.0
        %650 = vmatprep.subr.mxu0 0.0
        %651 = vmatpush1.msra.mxu0 0.0
        %652 = vmatprep.subr.mxu0 0.0
        %653 = vmatpush1.msra.mxu0 0.0
        %654 = vmatprep.subr.mxu0 0.0
        %655 = vmatpush1.msra.mxu0 0.0
        %656 = vmatprep.subr.mxu0 0.0
        %657 = vmatpush1.msra.mxu0 0.0
        %658 = vmatprep.subr.mxu0 0.0
        %659 = vmatpush1.msra.mxu0 0.0
        %660 = vmatprep.subr.mxu0 0.0
        %661 = vmatpush1.msra.mxu0 0.0
        %662 = vmatprep.subr.mxu0 0.0
        %663 = vmatpush1.msra.mxu0 0.0
        %664 = vmatprep.subr.mxu0 0.0
        %665 = vmatpush1.msra.mxu0 0.0
        %666 = vmatprep.subr.mxu0 0.0
        %667 = vmatpush1.msra.mxu0 0.0
        %668 = vmatprep.subr.mxu0 0.0
        %669 = vmatpush1.msra.mxu0 0.0
        %670 = vmatprep.subr.mxu0 0.0
        %671 = vmatpush1.msra.mxu0 0.0
        %672 = vmatprep.subr.mxu0 %v646
        %673 = vmatpush1.msra.mxu0 %v643
        %674 = vmatprep.subr.mxu0 %v554
        %675 = vmatpush1.msra.mxu0 %v553
        %676 = vmatprep.subr.mxu0 %v552
        %677 = vmatpush1.msra.mxu0 %v551
        %678 = vmatprep.subr.mxu0 %v550
        %679 = vmatpush1.msra.mxu0 %v549
        %680 = vmatprep.subr.mxu0 0.0
        %681 = vmatpush2.msra.mxu0 0.0
        %682 = vmatprep.subr.mxu0 0.0
        %683 = vmatpush2.msra.mxu0 0.0
        %684 = vmatprep.subr.mxu0 0.0
        %685 = vmatpush2.msra.mxu0 0.0
        %686 = vmatprep.subr.mxu0 0.0
        %687 = vmatpush2.msra.mxu0 0.0
        %688 = vmatprep.subr.mxu0 0.0
        %689 = vmatpush2.msra.mxu0 0.0
        %690 = vmatprep.subr.mxu0 0.0
        %691 = vmatpush2.msra.mxu0 0.0
        %692 = vmatprep.subr.mxu0 0.0
        %693 = vmatpush2.msra.mxu0 0.0
        %694 = vmatprep.subr.mxu0 0.0
        %695 = vmatpush2.msra.mxu0 0.0
        %696 = vmatprep.subr.mxu0 0.0
        %697 = vmatpush2.msra.mxu0 0.0
        %698 = vmatprep.subr.mxu0 0.0
        %699 = vmatpush2.msra.mxu0 0.0
        %700 = vmatprep.subr.mxu0 0.0
        %701 = vmatpush2.msra.mxu0 0.0
        %702 = vmatprep.subr.mxu0 0.0
        %703 = vmatpush2.msra.mxu0 0.0
        %704 = vmatprep.subr.mxu0 0.0
        %705 = vmatpush2.msra.mxu0 0.0
        %706 = vmatprep.subr.mxu0 0.0
        %707 = vmatpush2.msra.mxu0 0.0
        %708 = vmatprep.subr.mxu0 0.0
        %709 = vmatpush2.msra.mxu0 0.0
        %710 = vmatprep.subr.mxu0 0.0
        %711 = vmatpush2.msra.mxu0 0.0
        %712 = vmatprep.mubr.f32.mxu0 0.0
        %713 = vmatmul.mubr.f32.gmra.mxu0 %v558
        %v714 = vpop.f32.mrf.mxu0
        %v715 = vadd.f32 0.0, %v714
        %v716 = vpop.f32.mrf.mxu0
        %v717 = vadd.f32 0.0, %v716
        %718 = vmatprep.mubr.f32.mxu0 0.0
        %719 = vmatmul.mubr.f32.gmra.mxu0 %v561
        %v720 = vpop.f32.mrf.mxu0
        %v721 = vadd.f32 0.0, %v720
        %v722 = vpop.f32.mrf.mxu0
        %v723 = vadd.f32 0.0, %v722
        %724 = vmatprep.mubr.f32.mxu0 0.0
        %725 = vmatmul.mubr.f32.gmra.mxu0 %v564
        %v726 = vpop.f32.mrf.mxu0
        %v727 = vadd.f32 0.0, %v726
        %v728 = vpop.f32.mrf.mxu0
        %v729 = vadd.f32 0.0, %v728
        %730 = vmatprep.mubr.f32.mxu0 0.0
        %731 = vmatmul.mubr.f32.gmra.mxu0 %v567
        %v732 = vpop.f32.mrf.mxu0
        %v733 = vadd.f32 0.0, %v732
        %v734 = vpop.f32.mrf.mxu0
        %v735 = vadd.f32 0.0, %v734
        %736 = vmatprep.mubr.f32.mxu0 0.0
        %737 = vmatmul.mubr.f32.gmra.mxu0 %v570
        %v738 = vpop.f32.mrf.mxu0
        %v739 = vadd.f32 0.0, %v738
        %v740 = vpop.f32.mrf.mxu0
        %v741 = vadd.f32 0.0, %v740
        %742 = vmatprep.mubr.f32.mxu0 0.0
        %743 = vmatmul.mubr.f32.gmra.mxu0 %v573
        %v744 = vpop.f32.mrf.mxu0
        %v745 = vadd.f32 0.0, %v744
        %v746 = vpop.f32.mrf.mxu0
        %v747 = vadd.f32 0.0, %v746
        %748 = vmatprep.mubr.f32.mxu0 0.0
        %749 = vmatmul.mubr.f32.gmra.mxu0 %v576
        %v750 = vpop.f32.mrf.mxu0
        %v751 = vadd.f32 0.0, %v750
        %v752 = vpop.f32.mrf.mxu0
        %v753 = vadd.f32 0.0, %v752
        %754 = vmatprep.mubr.f32.mxu0 0.0
        %755 = vmatmul.mubr.f32.gmra.mxu0 %v579
        %v756 = vpop.f32.mrf.mxu0
        %v757 = vadd.f32 0.0, %v756
        %v758 = vpop.f32.mrf.mxu0
        %v759 = vadd.f32 0.0, %v758
        %760 = vmatprep.mubr.f32.mxu0 0.0
        %761 = vmatmul.mubr.f32.gmra.mxu0 %v582
        %v762 = vpop.f32.mrf.mxu0
        %v763 = vadd.f32 0.0, %v762
        %v764 = vpop.f32.mrf.mxu0
        %v765 = vadd.f32 0.0, %v764
        %766 = vmatprep.mubr.f32.mxu0 0.0
        %767 = vmatmul.mubr.f32.gmra.mxu0 %v585
        %v768 = vpop.f32.mrf.mxu0
        %v769 = vadd.f32 0.0, %v768
        %v770 = vpop.f32.mrf.mxu0
        %v771 = vadd.f32 0.0, %v770
        %772 = vmatprep.mubr.f32.mxu0 0.0
        %773 = vmatmul.mubr.f32.gmra.mxu0 %v588
        %v774 = vpop.f32.mrf.mxu0
        %v775 = vadd.f32 0.0, %v774
        %v776 = vpop.f32.mrf.mxu0
        %v777 = vadd.f32 0.0, %v776
        %778 = vmatprep.mubr.f32.mxu0 0.0
        %779 = vmatmul.mubr.f32.gmra.mxu0 %v591
        %v780 = vpop.f32.mrf.mxu0
        %v781 = vadd.f32 0.0, %v780
        %v782 = vpop.f32.mrf.mxu0
        %v783 = vadd.f32 0.0, %v782
        %784 = vmatprep.mubr.f32.mxu0 0.0
        %785 = vmatmul.mubr.f32.gmra.mxu0 %v594
        %v786 = vpop.f32.mrf.mxu0
        %v787 = vadd.f32 0.0, %v786
        %v788 = vpop.f32.mrf.mxu0
        %v789 = vadd.f32 0.0, %v788
        %790 = vmatprep.mubr.f32.mxu0 0.0
        %791 = vmatmul.mubr.f32.gmra.mxu0 %v597
        %v792 = vpop.f32.mrf.mxu0
        %v793 = vadd.f32 0.0, %v792
        %v794 = vpop.f32.mrf.mxu0
        %v795 = vadd.f32 0.0, %v794
        %796 = vmatprep.mubr.f32.mxu0 0.0
        %797 = vmatmul.mubr.f32.gmra.mxu0 %v600
        %v798 = vpop.f32.mrf.mxu0
        %v799 = vadd.f32 0.0, %v798
        %v800 = vpop.f32.mrf.mxu0
        %v801 = vadd.f32 0.0, %v800
        %802 = vmatprep.mubr.f32.mxu0 0.0
        %803 = vmatmul.mubr.f32.gmra.mxu0 %v603
        %v804 = vpop.f32.mrf.mxu0
        %v805 = vadd.f32 0.0, %v804
        %v806 = vpop.f32.mrf.mxu0
        %v807 = vadd.f32 0.0, %v806
        %808 = vmatprep.mubr.f32.mxu0 0.0
        %809 = vmatmul.mubr.f32.gmra.mxu0 %v606
        %v810 = vpop.f32.mrf.mxu0
        %v811 = vadd.f32 0.0, %v810
        %v812 = vpop.f32.mrf.mxu0
        %v813 = vadd.f32 0.0, %v812
        %814 = vmatprep.mubr.f32.mxu0 0.0
        %815 = vmatmul.mubr.f32.gmra.mxu0 %v609
        %v816 = vpop.f32.mrf.mxu0
        %v817 = vadd.f32 0.0, %v816
        %v818 = vpop.f32.mrf.mxu0
        %v819 = vadd.f32 0.0, %v818
        %820 = vmatprep.mubr.f32.mxu0 0.0
        %821 = vmatmul.mubr.f32.gmra.mxu0 %v612
        %v822 = vpop.f32.mrf.mxu0
        %v823 = vadd.f32 0.0, %v822
        %v824 = vpop.f32.mrf.mxu0
        %v825 = vadd.f32 0.0, %v824
        %826 = vmatprep.mubr.f32.mxu0 0.0
        %827 = vmatmul.mubr.f32.gmra.mxu0 %v615
        %v828 = vpop.f32.mrf.mxu0
        %v829 = vadd.f32 0.0, %v828
        %v830 = vpop.f32.mrf.mxu0
        %v831 = vadd.f32 0.0, %v830
        %832 = vmatprep.mubr.f32.mxu0 0.0
        %833 = vmatmul.mubr.f32.gmra.mxu0 %v618
        %v834 = vpop.f32.mrf.mxu0
        %v835 = vadd.f32 0.0, %v834
        %v836 = vpop.f32.mrf.mxu0
        %v837 = vadd.f32 0.0, %v836
        %838 = vmatprep.mubr.f32.mxu0 0.0
        %839 = vmatmul.mubr.f32.gmra.mxu0 %v621
        %v840 = vpop.f32.mrf.mxu0
        %v841 = vadd.f32 0.0, %v840
        %v842 = vpop.f32.mrf.mxu0
        %v843 = vadd.f32 0.0, %v842
        %844 = vmatprep.mubr.f32.mxu0 0.0
        %845 = vmatmul.mubr.f32.gmra.mxu0 %v624
        %v846 = vpop.f32.mrf.mxu0
        %v847 = vadd.f32 0.0, %v846
        %v848 = vpop.f32.mrf.mxu0
        %v849 = vadd.f32 0.0, %v848
        %850 = vmatprep.mubr.f32.mxu0 0.0
        %851 = vmatmul.mubr.f32.gmra.mxu0 %v627
        %v852 = vpop.f32.mrf.mxu0
        %v853 = vadd.f32 0.0, %v852
        %v854 = vpop.f32.mrf.mxu0
        %v855 = vadd.f32 0.0, %v854
        %856 = vmatprep.mubr.f32.mxu0 0.0
        %857 = vmatmul.mubr.f32.gmra.mxu0 %v630
        %v858 = vpop.f32.mrf.mxu0
        %v859 = vadd.f32 0.0, %v858
        %v860 = vpop.f32.mrf.mxu0
        %v861 = vadd.f32 0.0, %v860
        %862 = vmatprep.mubr.f32.mxu0 0.0
        %863 = vmatmul.mubr.f32.gmra.mxu0 %v633
        %v864 = vpop.f32.mrf.mxu0
        %v865 = vadd.f32 0.0, %v864
        %v866 = vpop.f32.mrf.mxu0
        %v867 = vadd.f32 0.0, %v866
        %868 = vmatprep.mubr.f32.mxu0 0.0
        %869 = vmatmul.mubr.f32.gmra.mxu0 %v636
        %v870 = vpop.f32.mrf.mxu0
        %v871 = vadd.f32 0.0, %v870
        %v872 = vpop.f32.mrf.mxu0
        %v873 = vadd.f32 0.0, %v872
        %874 = vmatprep.mubr.f32.mxu0 0.0
        %875 = vmatmul.mubr.f32.gmra.mxu0 %v639
        %v876 = vpop.f32.mrf.mxu0
        %v877 = vadd.f32 0.0, %v876
        %v878 = vpop.f32.mrf.mxu0
        %v879 = vadd.f32 0.0, %v878
        %880 = vdwg.mxu0
        %v882 = vsel %vm420, %v484, 0
        %v885 = vsel %vm420, %v485, 0
        %v888 = vsel %vm420, %v486, 0
        %v891 = vsel %vm420, %v487, 0
        %v894 = vsel %vm420, %v488, 0
        %v897 = vsel %vm420, %v489, 0
        %v900 = vsel %vm420, %v490, 0
        %v903 = vsel %vm420, %v491, 0
        %v906 = vsel %vm420, %v492, 0
        %v909 = vsel %vm420, %v493, 0
        %v912 = vsel %vm420, %v494, 0
        %v915 = vsel %vm420, %v495, 0
        %v918 = vsel %vm420, %v496, 0
        %v921 = vsel %vm420, %v497, 0
        %v924 = vsel %vm420, %v498, 0
        %v927 = vsel %vm420, %v499, 0
        %v930 = vsel %vm420, %v500, 0
        %v933 = vsel %vm420, %v501, 0
        %v936 = vsel %vm420, %v502, 0
        %v939 = vsel %vm420, %v503, 0
        %v942 = vsel %vm420, %v504, 0
        %v945 = vsel %vm420, %v505, 0
        %v948 = vsel %vm420, %v506, 0
        %v951 = vsel %vm420, %v507, 0
        %v954 = vsel %vm420, %v508, 0
        %v957 = vsel %vm420, %v509, 0
        %v960 = vsel %vm420, %v510, 0
        %v963 = vsel %vm420, %v511, 0
        %v966 = vsel %vm641, %v518, 0
        %v969 = vsel %vm641, %v519, 0
        %971 = vmatprep.subr.mxu0 0.0
        %972 = vmatpush1.msra.mxu0 0.0
        %973 = vmatprep.subr.mxu0 0.0
        %974 = vmatpush1.msra.mxu0 0.0
        %975 = vmatprep.subr.mxu0 0.0
        %976 = vmatpush1.msra.mxu0 0.0
        %977 = vmatprep.subr.mxu0 0.0
        %978 = vmatpush1.msra.mxu0 0.0
        %979 = vmatprep.subr.mxu0 0.0
        %980 = vmatpush1.msra.mxu0 0.0
        %981 = vmatprep.subr.mxu0 0.0
        %982 = vmatpush1.msra.mxu0 0.0
        %983 = vmatprep.subr.mxu0 0.0
        %984 = vmatpush1.msra.mxu0 0.0
        %985 = vmatprep.subr.mxu0 0.0
        %986 = vmatpush1.msra.mxu0 0.0
        %987 = vmatprep.subr.mxu0 0.0
        %988 = vmatpush1.msra.mxu0 0.0
        %989 = vmatprep.subr.mxu0 0.0
        %990 = vmatpush1.msra.mxu0 0.0
        %991 = vmatprep.subr.mxu0 0.0
        %992 = vmatpush1.msra.mxu0 0.0
        %993 = vmatprep.subr.mxu0 0.0
        %994 = vmatpush1.msra.mxu0 0.0
        %995 = vmatprep.subr.mxu0 %v969
        %996 = vmatpush1.msra.mxu0 %v966
        %997 = vmatprep.subr.mxu0 %v517
        %998 = vmatpush1.msra.mxu0 %v516
        %999 = vmatprep.subr.mxu0 %v515
        %1000 = vmatpush1.msra.mxu0 %v514
        %1001 = vmatprep.subr.mxu0 %v513
        %1002 = vmatpush1.msra.mxu0 %v512
        %1003 = vmatprep.subr.mxu0 0.0
        %1004 = vmatpush2.msra.mxu0 0.0
        %1005 = vmatprep.subr.mxu0 0.0
        %1006 = vmatpush2.msra.mxu0 0.0
        %1007 = vmatprep.subr.mxu0 0.0
        %1008 = vmatpush2.msra.mxu0 0.0
        %1009 = vmatprep.subr.mxu0 0.0
        %1010 = vmatpush2.msra.mxu0 0.0
        %1011 = vmatprep.subr.mxu0 0.0
        %1012 = vmatpush2.msra.mxu0 0.0
        %1013 = vmatprep.subr.mxu0 0.0
        %1014 = vmatpush2.msra.mxu0 0.0
        %1015 = vmatprep.subr.mxu0 0.0
        %1016 = vmatpush2.msra.mxu0 0.0
        %1017 = vmatprep.subr.mxu0 0.0
        %1018 = vmatpush2.msra.mxu0 0.0
        %1019 = vmatprep.subr.mxu0 0.0
        %1020 = vmatpush2.msra.mxu0 0.0
        %1021 = vmatprep.subr.mxu0 0.0
        %1022 = vmatpush2.msra.mxu0 0.0
        %1023 = vmatprep.subr.mxu0 0.0
        %1024 = vmatpush2.msra.mxu0 0.0
        %1025 = vmatprep.subr.mxu0 0.0
        %1026 = vmatpush2.msra.mxu0 0.0
        %1027 = vmatprep.subr.mxu0 0.0
        %1028 = vmatpush2.msra.mxu0 0.0
        %1029 = vmatprep.subr.mxu0 0.0
        %1030 = vmatpush2.msra.mxu0 0.0
        %1031 = vmatprep.subr.mxu0 0.0
        %1032 = vmatpush2.msra.mxu0 0.0
        %1033 = vmatprep.subr.mxu0 0.0
        %1034 = vmatpush2.msra.mxu0 0.0
        %1035 = vmatprep.mubr.f32.mxu0 0.0
        %1036 = vmatmul.mubr.f32.gmra.mxu0 %v882
        %v1037 = vpop.f32.mrf.mxu0
        %v1038 = vadd.f32 %v715, %v1037
        %v1039 = vpop.f32.mrf.mxu0
        %v1040 = vadd.f32 %v717, %v1039
        %1041 = vmatprep.mubr.f32.mxu0 0.0
        %1042 = vmatmul.mubr.f32.gmra.mxu0 %v885
        %v1043 = vpop.f32.mrf.mxu0
        %v1044 = vadd.f32 %v721, %v1043
        %v1045 = vpop.f32.mrf.mxu0
        %v1046 = vadd.f32 %v723, %v1045
        %1047 = vmatprep.mubr.f32.mxu0 0.0
        %1048 = vmatmul.mubr.f32.gmra.mxu0 %v888
        %v1049 = vpop.f32.mrf.mxu0
        %v1050 = vadd.f32 %v727, %v1049
        %v1051 = vpop.f32.mrf.mxu0
        %v1052 = vadd.f32 %v729, %v1051
        %1053 = vmatprep.mubr.f32.mxu0 0.0
        %1054 = vmatmul.mubr.f32.gmra.mxu0 %v891
        %v1055 = vpop.f32.mrf.mxu0
        %v1056 = vadd.f32 %v733, %v1055
        %v1057 = vpop.f32.mrf.mxu0
        %v1058 = vadd.f32 %v735, %v1057
        %1059 = vmatprep.mubr.f32.mxu0 0.0
        %1060 = vmatmul.mubr.f32.gmra.mxu0 %v894
        %v1061 = vpop.f32.mrf.mxu0
        %v1062 = vadd.f32 %v739, %v1061
        %v1063 = vpop.f32.mrf.mxu0
        %v1064 = vadd.f32 %v741, %v1063
        %1065 = vmatprep.mubr.f32.mxu0 0.0
        %1066 = vmatmul.mubr.f32.gmra.mxu0 %v897
        %v1067 = vpop.f32.mrf.mxu0
        %v1068 = vadd.f32 %v745, %v1067
        %v1069 = vpop.f32.mrf.mxu0
        %v1070 = vadd.f32 %v747, %v1069
        %1071 = vmatprep.mubr.f32.mxu0 0.0
        %1072 = vmatmul.mubr.f32.gmra.mxu0 %v900
        %v1073 = vpop.f32.mrf.mxu0
        %v1074 = vadd.f32 %v751, %v1073
        %v1075 = vpop.f32.mrf.mxu0
        %v1076 = vadd.f32 %v753, %v1075
        %1077 = vmatprep.mubr.f32.mxu0 0.0
        %1078 = vmatmul.mubr.f32.gmra.mxu0 %v903
        %v1079 = vpop.f32.mrf.mxu0
        %v1080 = vadd.f32 %v757, %v1079
        %v1081 = vpop.f32.mrf.mxu0
        %v1082 = vadd.f32 %v759, %v1081
        %1083 = vmatprep.mubr.f32.mxu0 0.0
        %1084 = vmatmul.mubr.f32.gmra.mxu0 %v906
        %v1085 = vpop.f32.mrf.mxu0
        %v1086 = vadd.f32 %v763, %v1085
        %v1087 = vpop.f32.mrf.mxu0
        %v1088 = vadd.f32 %v765, %v1087
        %1089 = vmatprep.mubr.f32.mxu0 0.0
        %1090 = vmatmul.mubr.f32.gmra.mxu0 %v909
        %v1091 = vpop.f32.mrf.mxu0
        %v1092 = vadd.f32 %v769, %v1091
        %v1093 = vpop.f32.mrf.mxu0
        %v1094 = vadd.f32 %v771, %v1093
        %1095 = vmatprep.mubr.f32.mxu0 0.0
        %1096 = vmatmul.mubr.f32.gmra.mxu0 %v912
        %v1097 = vpop.f32.mrf.mxu0
        %v1098 = vadd.f32 %v775, %v1097
        %v1099 = vpop.f32.mrf.mxu0
        %v1100 = vadd.f32 %v777, %v1099
        %1101 = vmatprep.mubr.f32.mxu0 0.0
        %1102 = vmatmul.mubr.f32.gmra.mxu0 %v915
        %v1103 = vpop.f32.mrf.mxu0
        %v1104 = vadd.f32 %v781, %v1103
        %v1105 = vpop.f32.mrf.mxu0
        %v1106 = vadd.f32 %v783, %v1105
        %1107 = vmatprep.mubr.f32.mxu0 0.0
        %1108 = vmatmul.mubr.f32.gmra.mxu0 %v918
        %v1109 = vpop.f32.mrf.mxu0
        %v1110 = vadd.f32 %v787, %v1109
        %v1111 = vpop.f32.mrf.mxu0
        %v1112 = vadd.f32 %v789, %v1111
        %1113 = vmatprep.mubr.f32.mxu0 0.0
        %1114 = vmatmul.mubr.f32.gmra.mxu0 %v921
        %v1115 = vpop.f32.mrf.mxu0
        %v1116 = vadd.f32 %v793, %v1115
        %v1117 = vpop.f32.mrf.mxu0
        %v1118 = vadd.f32 %v795, %v1117
        %1119 = vmatprep.mubr.f32.mxu0 0.0
        %1120 = vmatmul.mubr.f32.gmra.mxu0 %v924
        %v1121 = vpop.f32.mrf.mxu0
        %v1122 = vadd.f32 %v799, %v1121
        %v1123 = vpop.f32.mrf.mxu0
        %v1124 = vadd.f32 %v801, %v1123
        %1125 = vmatprep.mubr.f32.mxu0 0.0
        %1126 = vmatmul.mubr.f32.gmra.mxu0 %v927
        %v1127 = vpop.f32.mrf.mxu0
        %v1128 = vadd.f32 %v805, %v1127
        %v1129 = vpop.f32.mrf.mxu0
        %v1130 = vadd.f32 %v807, %v1129
        %1131 = vmatprep.mubr.f32.mxu0 0.0
        %1132 = vmatmul.mubr.f32.gmra.mxu0 %v930
        %v1133 = vpop.f32.mrf.mxu0
        %v1134 = vadd.f32 %v811, %v1133
        %v1135 = vpop.f32.mrf.mxu0
        %v1136 = vadd.f32 %v813, %v1135
        %1137 = vmatprep.mubr.f32.mxu0 0.0
        %1138 = vmatmul.mubr.f32.gmra.mxu0 %v933
        %v1139 = vpop.f32.mrf.mxu0
        %v1140 = vadd.f32 %v817, %v1139
        %v1141 = vpop.f32.mrf.mxu0
        %v1142 = vadd.f32 %v819, %v1141
        %1143 = vmatprep.mubr.f32.mxu0 0.0
        %1144 = vmatmul.mubr.f32.gmra.mxu0 %v936
        %v1145 = vpop.f32.mrf.mxu0
        %v1146 = vadd.f32 %v823, %v1145
        %v1147 = vpop.f32.mrf.mxu0
        %v1148 = vadd.f32 %v825, %v1147
        %1149 = vmatprep.mubr.f32.mxu0 0.0
        %1150 = vmatmul.mubr.f32.gmra.mxu0 %v939
        %v1151 = vpop.f32.mrf.mxu0
        %v1152 = vadd.f32 %v829, %v1151
        %v1153 = vpop.f32.mrf.mxu0
        %v1154 = vadd.f32 %v831, %v1153
        %1155 = vmatprep.mubr.f32.mxu0 0.0
        %1156 = vmatmul.mubr.f32.gmra.mxu0 %v942
        %v1157 = vpop.f32.mrf.mxu0
        %v1158 = vadd.f32 %v835, %v1157
        %v1159 = vpop.f32.mrf.mxu0
        %v1160 = vadd.f32 %v837, %v1159
        %1161 = vmatprep.mubr.f32.mxu0 0.0
        %1162 = vmatmul.mubr.f32.gmra.mxu0 %v945
        %v1163 = vpop.f32.mrf.mxu0
        %v1164 = vadd.f32 %v841, %v1163
        %v1165 = vpop.f32.mrf.mxu0
        %v1166 = vadd.f32 %v843, %v1165
        %1167 = vmatprep.mubr.f32.mxu0 0.0
        %1168 = vmatmul.mubr.f32.gmra.mxu0 %v948
        %v1169 = vpop.f32.mrf.mxu0
        %v1170 = vadd.f32 %v847, %v1169
        %v1171 = vpop.f32.mrf.mxu0
        %v1172 = vadd.f32 %v849, %v1171
        %1173 = vmatprep.mubr.f32.mxu0 0.0
        %1174 = vmatmul.mubr.f32.gmra.mxu0 %v951
        %v1175 = vpop.f32.mrf.mxu0
        %v1176 = vadd.f32 %v853, %v1175
        %v1177 = vpop.f32.mrf.mxu0
        %v1178 = vadd.f32 %v855, %v1177
        %1179 = vmatprep.mubr.f32.mxu0 0.0
        %1180 = vmatmul.mubr.f32.gmra.mxu0 %v954
        %v1181 = vpop.f32.mrf.mxu0
        %v1182 = vadd.f32 %v859, %v1181
        %v1183 = vpop.f32.mrf.mxu0
        %v1184 = vadd.f32 %v861, %v1183
        %1185 = vmatprep.mubr.f32.mxu0 0.0
        %1186 = vmatmul.mubr.f32.gmra.mxu0 %v957
        %v1187 = vpop.f32.mrf.mxu0
        %v1188 = vadd.f32 %v865, %v1187
        %v1189 = vpop.f32.mrf.mxu0
        %v1190 = vadd.f32 %v867, %v1189
        %1191 = vmatprep.mubr.f32.mxu0 0.0
        %1192 = vmatmul.mubr.f32.gmra.mxu0 %v960
        %v1193 = vpop.f32.mrf.mxu0
        %v1194 = vadd.f32 %v871, %v1193
        %v1195 = vpop.f32.mrf.mxu0
        %v1196 = vadd.f32 %v873, %v1195
        %1197 = vmatprep.mubr.f32.mxu0 0.0
        %1198 = vmatmul.mubr.f32.gmra.mxu0 %v963
        %v1199 = vpop.f32.mrf.mxu0
        %v1200 = vadd.f32 %v877, %v1199
        %v1201 = vpop.f32.mrf.mxu0
        %v1202 = vadd.f32 %v879, %v1201
        %1203 = vdwg.mxu0
        %s1204 = scalar_lea.vmem [#allocation2], 16
        %v1205 = vld [vmem:[%s1204] sm:$0xff]
        %v1206 = vld [vmem:[%s1204 + $0x8] sm:$0xff]
        %v1207 = vld [vmem:[%s1204 + $0x10] sm:$0xff]
        %v1208 = vld [vmem:[%s1204 + $0x18] sm:$0xff]
        %v1209 = vld [vmem:[%s1204 + $0x20] sm:$0xff]
        %v1210 = vld [vmem:[%s1204 + $0x28] sm:$0xff]
        %v1211 = vld [vmem:[%s1204 + $0x30] sm:$0xff]
        %v1212 = vld [vmem:[%s1204 + $0x38] sm:$0xff]
        %v1213 = vld [vmem:[%s1204 + $0x40] sm:$0xff]
        %v1214 = vld [vmem:[%s1204 + $0x48] sm:$0xff]
        %v1215 = vld [vmem:[%s1204 + $0x50] sm:$0xff]
        %v1216 = vld [vmem:[%s1204 + $0x58] sm:$0xff]
        %v1217 = vld [vmem:[%s1204 + $0x60] sm:$0xff]
        %v1218 = vld [vmem:[%s1204 + $0x68] sm:$0xff]
        %v1219 = vld [vmem:[%s1204 + $0x70] sm:$0xff]
        %v1220 = vld [vmem:[%s1204 + $0x78] sm:$0xff]
        %v1221 = vld [vmem:[%s1204 + $0x80] sm:$0xff]
        %v1222 = vld [vmem:[%s1204 + $0x88] sm:$0xff]
        %v1223 = vld [vmem:[%s1204 + $0x90] sm:$0xff]
        %v1224 = vld [vmem:[%s1204 + $0x98] sm:$0xff]
        %v1225 = vld [vmem:[%s1204 + $0xa0] sm:$0xff]
        %v1226 = vld [vmem:[%s1204 + $0xa8] sm:$0xff]
        %v1227 = vld [vmem:[%s1204 + $0xb0] sm:$0xff]
        %v1228 = vld [vmem:[%s1204 + $0xb8] sm:$0xff]
        %v1229 = vld [vmem:[%s1204 + $0xc0] sm:$0xff]
        %v1230 = vld [vmem:[%s1204 + $0xc8] sm:$0xff]
        %v1231 = vld [vmem:[%s1204 + $0xd0] sm:$0xff]
        %v1232 = vld [vmem:[%s1204 + $0xd8] sm:$0xff]
        %s1233 = scalar_lea.vmem %s1, 128
        %v1234 = vld [vmem:[%s1233] sm:$0xff]
        %v1235 = vld [vmem:[%s1233 + $0x8] sm:$0xff]
        %v1236 = vld [vmem:[%s1233 + $0x10] sm:$0xff]
        %v1237 = vld [vmem:[%s1233 + $0x18] sm:$0xff]
        %v1238 = vld [vmem:[%s1233 + $0x20] sm:$0xff]
        %v1239 = vld [vmem:[%s1233 + $0x28] sm:$0xff]
        %v1240 = vld [vmem:[%s1233 + $0x30] sm:$0xf]
        %v1241 = vld [vmem:[%s1233 + $0x38] sm:$0xf]
        %v1243 = vsel %vm420, %v1205, 0
        %v1246 = vsel %vm420, %v1206, 0
        %v1249 = vsel %vm420, %v1207, 0
        %v1252 = vsel %vm420, %v1208, 0
        %v1255 = vsel %vm420, %v1209, 0
        %v1258 = vsel %vm420, %v1210, 0
        %v1261 = vsel %vm420, %v1211, 0
        %v1264 = vsel %vm420, %v1212, 0
        %v1267 = vsel %vm420, %v1213, 0
        %v1270 = vsel %vm420, %v1214, 0
        %v1273 = vsel %vm420, %v1215, 0
        %v1276 = vsel %vm420, %v1216, 0
        %v1279 = vsel %vm420, %v1217, 0
        %v1282 = vsel %vm420, %v1218, 0
        %v1285 = vsel %vm420, %v1219, 0
        %v1288 = vsel %vm420, %v1220, 0
        %v1291 = vsel %vm420, %v1221, 0
        %v1294 = vsel %vm420, %v1222, 0
        %v1297 = vsel %vm420, %v1223, 0
        %v1300 = vsel %vm420, %v1224, 0
        %v1303 = vsel %vm420, %v1225, 0
        %v1306 = vsel %vm420, %v1226, 0
        %v1309 = vsel %vm420, %v1227, 0
        %v1312 = vsel %vm420, %v1228, 0
        %v1315 = vsel %vm420, %v1229, 0
        %v1318 = vsel %vm420, %v1230, 0
        %v1321 = vsel %vm420, %v1231, 0
        %v1324 = vsel %vm420, %v1232, 0
        %v1327 = vsel %vm641, %v1240, 0
        %v1330 = vsel %vm641, %v1241, 0
        %1332 = vmatprep.subr.mxu0 0.0
        %1333 = vmatpush1.msra.mxu0 0.0
        %1334 = vmatprep.subr.mxu0 0.0
        %1335 = vmatpush1.msra.mxu0 0.0
        %1336 = vmatprep.subr.mxu0 0.0
        %1337 = vmatpush1.msra.mxu0 0.0
        %1338 = vmatprep.subr.mxu0 0.0
        %1339 = vmatpush1.msra.mxu0 0.0
        %1340 = vmatprep.subr.mxu0 0.0
        %1341 = vmatpush1.msra.mxu0 0.0
        %1342 = vmatprep.subr.mxu0 0.0
        %1343 = vmatpush1.msra.mxu0 0.0
        %1344 = vmatprep.subr.mxu0 0.0
        %1345 = vmatpush1.msra.mxu0 0.0
        %1346 = vmatprep.subr.mxu0 0.0
        %1347 = vmatpush1.msra.mxu0 0.0
        %1348 = vmatprep.subr.mxu0 0.0
        %1349 = vmatpush1.msra.mxu0 0.0
        %1350 = vmatprep.subr.mxu0 0.0
        %1351 = vmatpush1.msra.mxu0 0.0
        %1352 = vmatprep.subr.mxu0 0.0
        %1353 = vmatpush1.msra.mxu0 0.0
        %1354 = vmatprep.subr.mxu0 0.0
        %1355 = vmatpush1.msra.mxu0 0.0
        %1356 = vmatprep.subr.mxu0 %v1330
        %1357 = vmatpush1.msra.mxu0 %v1327
        %1358 = vmatprep.subr.mxu0 %v1239
        %1359 = vmatpush1.msra.mxu0 %v1238
        %1360 = vmatprep.subr.mxu0 %v1237
        %1361 = vmatpush1.msra.mxu0 %v1236
        %1362 = vmatprep.subr.mxu0 %v1235
        %1363 = vmatpush1.msra.mxu0 %v1234
        %1364 = vmatprep.subr.mxu0 0.0
        %1365 = vmatpush2.msra.mxu0 0.0
        %1366 = vmatprep.subr.mxu0 0.0
        %1367 = vmatpush2.msra.mxu0 0.0
        %1368 = vmatprep.subr.mxu0 0.0
        %1369 = vmatpush2.msra.mxu0 0.0
        %1370 = vmatprep.subr.mxu0 0.0
        %1371 = vmatpush2.msra.mxu0 0.0
        %1372 = vmatprep.subr.mxu0 0.0
        %1373 = vmatpush2.msra.mxu0 0.0
        %1374 = vmatprep.subr.mxu0 0.0
        %1375 = vmatpush2.msra.mxu0 0.0
        %1376 = vmatprep.subr.mxu0 0.0
        %1377 = vmatpush2.msra.mxu0 0.0
        %1378 = vmatprep.subr.mxu0 0.0
        %1379 = vmatpush2.msra.mxu0 0.0
        %1380 = vmatprep.subr.mxu0 0.0
        %1381 = vmatpush2.msra.mxu0 0.0
        %1382 = vmatprep.subr.mxu0 0.0
        %1383 = vmatpush2.msra.mxu0 0.0
        %1384 = vmatprep.subr.mxu0 0.0
        %1385 = vmatpush2.msra.mxu0 0.0
        %1386 = vmatprep.subr.mxu0 0.0
        %1387 = vmatpush2.msra.mxu0 0.0
        %1388 = vmatprep.subr.mxu0 0.0
        %1389 = vmatpush2.msra.mxu0 0.0
        %1390 = vmatprep.subr.mxu0 0.0
        %1391 = vmatpush2.msra.mxu0 0.0
        %1392 = vmatprep.subr.mxu0 0.0
        %1393 = vmatpush2.msra.mxu0 0.0
        %1394 = vmatprep.subr.mxu0 0.0
        %1395 = vmatpush2.msra.mxu0 0.0
        %1396 = vmatprep.mubr.f32.mxu0 0.0
        %1397 = vmatmul.mubr.f32.gmra.mxu0 %v1243
        %v1398 = vpop.f32.mrf.mxu0
        %v1399 = vadd.f32 0.0, %v1398
        %v1400 = vpop.f32.mrf.mxu0
        %v1401 = vadd.f32 0.0, %v1400
        %1402 = vmatprep.mubr.f32.mxu0 0.0
        %1403 = vmatmul.mubr.f32.gmra.mxu0 %v1246
        %v1404 = vpop.f32.mrf.mxu0
        %v1405 = vadd.f32 0.0, %v1404
        %v1406 = vpop.f32.mrf.mxu0
        %v1407 = vadd.f32 0.0, %v1406
        %1408 = vmatprep.mubr.f32.mxu0 0.0
        %1409 = vmatmul.mubr.f32.gmra.mxu0 %v1249
        %v1410 = vpop.f32.mrf.mxu0
        %v1411 = vadd.f32 0.0, %v1410
        %v1412 = vpop.f32.mrf.mxu0
        %v1413 = vadd.f32 0.0, %v1412
        %1414 = vmatprep.mubr.f32.mxu0 0.0
        %1415 = vmatmul.mubr.f32.gmra.mxu0 %v1252
        %v1416 = vpop.f32.mrf.mxu0
        %v1417 = vadd.f32 0.0, %v1416
        %v1418 = vpop.f32.mrf.mxu0
        %v1419 = vadd.f32 0.0, %v1418
        %1420 = vmatprep.mubr.f32.mxu0 0.0
        %1421 = vmatmul.mubr.f32.gmra.mxu0 %v1255
        %v1422 = vpop.f32.mrf.mxu0
        %v1423 = vadd.f32 0.0, %v1422
        %v1424 = vpop.f32.mrf.mxu0
        %v1425 = vadd.f32 0.0, %v1424
        %1426 = vmatprep.mubr.f32.mxu0 0.0
        %1427 = vmatmul.mubr.f32.gmra.mxu0 %v1258
        %v1428 = vpop.f32.mrf.mxu0
        %v1429 = vadd.f32 0.0, %v1428
        %v1430 = vpop.f32.mrf.mxu0
        %v1431 = vadd.f32 0.0, %v1430
        %1432 = vmatprep.mubr.f32.mxu0 0.0
        %1433 = vmatmul.mubr.f32.gmra.mxu0 %v1261
        %v1434 = vpop.f32.mrf.mxu0
        %v1435 = vadd.f32 0.0, %v1434
        %v1436 = vpop.f32.mrf.mxu0
        %v1437 = vadd.f32 0.0, %v1436
        %1438 = vmatprep.mubr.f32.mxu0 0.0
        %1439 = vmatmul.mubr.f32.gmra.mxu0 %v1264
        %v1440 = vpop.f32.mrf.mxu0
        %v1441 = vadd.f32 0.0, %v1440
        %v1442 = vpop.f32.mrf.mxu0
        %v1443 = vadd.f32 0.0, %v1442
        %1444 = vmatprep.mubr.f32.mxu0 0.0
        %1445 = vmatmul.mubr.f32.gmra.mxu0 %v1267
        %v1446 = vpop.f32.mrf.mxu0
        %v1447 = vadd.f32 0.0, %v1446
        %v1448 = vpop.f32.mrf.mxu0
        %v1449 = vadd.f32 0.0, %v1448
        %1450 = vmatprep.mubr.f32.mxu0 0.0
        %1451 = vmatmul.mubr.f32.gmra.mxu0 %v1270
        %v1452 = vpop.f32.mrf.mxu0
        %v1453 = vadd.f32 0.0, %v1452
        %v1454 = vpop.f32.mrf.mxu0
        %v1455 = vadd.f32 0.0, %v1454
        %1456 = vmatprep.mubr.f32.mxu0 0.0
        %1457 = vmatmul.mubr.f32.gmra.mxu0 %v1273
        %v1458 = vpop.f32.mrf.mxu0
        %v1459 = vadd.f32 0.0, %v1458
        %v1460 = vpop.f32.mrf.mxu0
        %v1461 = vadd.f32 0.0, %v1460
        %1462 = vmatprep.mubr.f32.mxu0 0.0
        %1463 = vmatmul.mubr.f32.gmra.mxu0 %v1276
        %v1464 = vpop.f32.mrf.mxu0
        %v1465 = vadd.f32 0.0, %v1464
        %v1466 = vpop.f32.mrf.mxu0
        %v1467 = vadd.f32 0.0, %v1466
        %1468 = vmatprep.mubr.f32.mxu0 0.0
        %1469 = vmatmul.mubr.f32.gmra.mxu0 %v1279
        %v1470 = vpop.f32.mrf.mxu0
        %v1471 = vadd.f32 0.0, %v1470
        %v1472 = vpop.f32.mrf.mxu0
        %v1473 = vadd.f32 0.0, %v1472
        %1474 = vmatprep.mubr.f32.mxu0 0.0
        %1475 = vmatmul.mubr.f32.gmra.mxu0 %v1282
        %v1476 = vpop.f32.mrf.mxu0
        %v1477 = vadd.f32 0.0, %v1476
        %v1478 = vpop.f32.mrf.mxu0
        %v1479 = vadd.f32 0.0, %v1478
        %1480 = vmatprep.mubr.f32.mxu0 0.0
        %1481 = vmatmul.mubr.f32.gmra.mxu0 %v1285
        %v1482 = vpop.f32.mrf.mxu0
        %v1483 = vadd.f32 0.0, %v1482
        %v1484 = vpop.f32.mrf.mxu0
        %v1485 = vadd.f32 0.0, %v1484
        %1486 = vmatprep.mubr.f32.mxu0 0.0
        %1487 = vmatmul.mubr.f32.gmra.mxu0 %v1288
        %v1488 = vpop.f32.mrf.mxu0
        %v1489 = vadd.f32 0.0, %v1488
        %v1490 = vpop.f32.mrf.mxu0
        %v1491 = vadd.f32 0.0, %v1490
        %1492 = vmatprep.mubr.f32.mxu0 0.0
        %1493 = vmatmul.mubr.f32.gmra.mxu0 %v1291
        %v1494 = vpop.f32.mrf.mxu0
        %v1495 = vadd.f32 0.0, %v1494
        %v1496 = vpop.f32.mrf.mxu0
        %v1497 = vadd.f32 0.0, %v1496
        %1498 = vmatprep.mubr.f32.mxu0 0.0
        %1499 = vmatmul.mubr.f32.gmra.mxu0 %v1294
        %v1500 = vpop.f32.mrf.mxu0
        %v1501 = vadd.f32 0.0, %v1500
        %v1502 = vpop.f32.mrf.mxu0
        %v1503 = vadd.f32 0.0, %v1502
        %1504 = vmatprep.mubr.f32.mxu0 0.0
        %1505 = vmatmul.mubr.f32.gmra.mxu0 %v1297
        %v1506 = vpop.f32.mrf.mxu0
        %v1507 = vadd.f32 0.0, %v1506
        %v1508 = vpop.f32.mrf.mxu0
        %v1509 = vadd.f32 0.0, %v1508
        %1510 = vmatprep.mubr.f32.mxu0 0.0
        %1511 = vmatmul.mubr.f32.gmra.mxu0 %v1300
        %v1512 = vpop.f32.mrf.mxu0
        %v1513 = vadd.f32 0.0, %v1512
        %v1514 = vpop.f32.mrf.mxu0
        %v1515 = vadd.f32 0.0, %v1514
        %1516 = vmatprep.mubr.f32.mxu0 0.0
        %1517 = vmatmul.mubr.f32.gmra.mxu0 %v1303
        %v1518 = vpop.f32.mrf.mxu0
        %v1519 = vadd.f32 0.0, %v1518
        %v1520 = vpop.f32.mrf.mxu0
        %v1521 = vadd.f32 0.0, %v1520
        %1522 = vmatprep.mubr.f32.mxu0 0.0
        %1523 = vmatmul.mubr.f32.gmra.mxu0 %v1306
        %v1524 = vpop.f32.mrf.mxu0
        %v1525 = vadd.f32 0.0, %v1524
        %v1526 = vpop.f32.mrf.mxu0
        %v1527 = vadd.f32 0.0, %v1526
        %1528 = vmatprep.mubr.f32.mxu0 0.0
        %1529 = vmatmul.mubr.f32.gmra.mxu0 %v1309
        %v1530 = vpop.f32.mrf.mxu0
        %v1531 = vadd.f32 0.0, %v1530
        %v1532 = vpop.f32.mrf.mxu0
        %v1533 = vadd.f32 0.0, %v1532
        %1534 = vmatprep.mubr.f32.mxu0 0.0
        %1535 = vmatmul.mubr.f32.gmra.mxu0 %v1312
        %v1536 = vpop.f32.mrf.mxu0
        %v1537 = vadd.f32 0.0, %v1536
        %v1538 = vpop.f32.mrf.mxu0
        %v1539 = vadd.f32 0.0, %v1538
        %1540 = vmatprep.mubr.f32.mxu0 0.0
        %1541 = vmatmul.mubr.f32.gmra.mxu0 %v1315
        %v1542 = vpop.f32.mrf.mxu0
        %v1543 = vadd.f32 0.0, %v1542
        %v1544 = vpop.f32.mrf.mxu0
        %v1545 = vadd.f32 0.0, %v1544
        %1546 = vmatprep.mubr.f32.mxu0 0.0
        %1547 = vmatmul.mubr.f32.gmra.mxu0 %v1318
        %v1548 = vpop.f32.mrf.mxu0
        %v1549 = vadd.f32 0.0, %v1548
        %v1550 = vpop.f32.mrf.mxu0
        %v1551 = vadd.f32 0.0, %v1550
        %1552 = vmatprep.mubr.f32.mxu0 0.0
        %1553 = vmatmul.mubr.f32.gmra.mxu0 %v1321
        %v1554 = vpop.f32.mrf.mxu0
        %v1555 = vadd.f32 0.0, %v1554
        %v1556 = vpop.f32.mrf.mxu0
        %v1557 = vadd.f32 0.0, %v1556
        %1558 = vmatprep.mubr.f32.mxu0 0.0
        %1559 = vmatmul.mubr.f32.gmra.mxu0 %v1324
        %v1560 = vpop.f32.mrf.mxu0
        %v1561 = vadd.f32 0.0, %v1560
        %v1562 = vpop.f32.mrf.mxu0
        %v1563 = vadd.f32 0.0, %v1562
        %1564 = vdwg.mxu0
        %v1565 = vadd.f32 %v1038, %v1399
        %v1566 = vadd.f32 %v1040, %v1401
        %v1567 = vadd.f32 %v1044, %v1405
        %v1568 = vadd.f32 %v1046, %v1407
        %v1569 = vadd.f32 %v1050, %v1411
        %v1570 = vadd.f32 %v1052, %v1413
        %v1571 = vadd.f32 %v1056, %v1417
        %v1572 = vadd.f32 %v1058, %v1419
        %v1573 = vadd.f32 %v1062, %v1423
        %v1574 = vadd.f32 %v1064, %v1425
        %v1575 = vadd.f32 %v1068, %v1429
        %v1576 = vadd.f32 %v1070, %v1431
        %v1577 = vadd.f32 %v1074, %v1435
        %v1578 = vadd.f32 %v1076, %v1437
        %v1579 = vadd.f32 %v1080, %v1441
        %v1580 = vadd.f32 %v1082, %v1443
        %v1581 = vadd.f32 %v1086, %v1447
        %v1582 = vadd.f32 %v1088, %v1449
        %v1583 = vadd.f32 %v1092, %v1453
        %v1584 = vadd.f32 %v1094, %v1455
        %v1585 = vadd.f32 %v1098, %v1459
        %v1586 = vadd.f32 %v1100, %v1461
        %v1587 = vadd.f32 %v1104, %v1465
        %v1588 = vadd.f32 %v1106, %v1467
        %v1589 = vadd.f32 %v1110, %v1471
        %v1590 = vadd.f32 %v1112, %v1473
        %v1591 = vadd.f32 %v1116, %v1477
        %v1592 = vadd.f32 %v1118, %v1479
        %v1593 = vadd.f32 %v1122, %v1483
        %v1594 = vadd.f32 %v1124, %v1485
        %v1595 = vadd.f32 %v1128, %v1489
        %v1596 = vadd.f32 %v1130, %v1491
        %v1597 = vadd.f32 %v1134, %v1495
        %v1598 = vadd.f32 %v1136, %v1497
        %v1599 = vadd.f32 %v1140, %v1501
        %v1600 = vadd.f32 %v1142, %v1503
        %v1601 = vadd.f32 %v1146, %v1507
        %v1602 = vadd.f32 %v1148, %v1509
        %v1603 = vadd.f32 %v1152, %v1513
        %v1604 = vadd.f32 %v1154, %v1515
        %v1605 = vadd.f32 %v1158, %v1519
        %v1606 = vadd.f32 %v1160, %v1521
        %v1607 = vadd.f32 %v1164, %v1525
        %v1608 = vadd.f32 %v1166, %v1527
        %v1609 = vadd.f32 %v1170, %v1531
        %v1610 = vadd.f32 %v1172, %v1533
        %v1611 = vadd.f32 %v1176, %v1537
        %v1612 = vadd.f32 %v1178, %v1539
        %v1613 = vadd.f32 %v1182, %v1543
        %v1614 = vadd.f32 %v1184, %v1545
        %v1615 = vadd.f32 %v1188, %v1549
        %v1616 = vadd.f32 %v1190, %v1551
        %v1617 = vadd.f32 %v1194, %v1555
        %v1618 = vadd.f32 %v1196, %v1557
        %v1619 = vadd.f32 %v1200, %v1561
        %v1620 = vadd.f32 %v1202, %v1563
        %v1621 = vld [vmem:[%s2] sm:$0x3]
        %v1623 = vlaneseq
        %v1624 = vshrl.u32 %v1623, 7
        %v1625 = vsub.s32 0, %v1624
        %v1626 = vrot.slane %v1621, %v1625
        %v1627 = vlaneseq
        %v1628 = vshrl.u32 %v1627, 7
        %v1629 = vsub.s32 1, %v1628
        %v1630 = vrot.slane %v1621, %v1629
        %v1633 = vadd.f32 %v1565, %v1626
        %v1634 = vadd.f32 %v1566, %v1630
        %v1635 = vadd.f32 %v1567, %v1626
        %v1636 = vadd.f32 %v1568, %v1630
        %v1637 = vadd.f32 %v1569, %v1626
        %v1638 = vadd.f32 %v1570, %v1630
        %v1639 = vadd.f32 %v1571, %v1626
        %v1640 = vadd.f32 %v1572, %v1630
        %v1641 = vadd.f32 %v1573, %v1626
        %v1642 = vadd.f32 %v1574, %v1630
        %v1643 = vadd.f32 %v1575, %v1626
        %v1644 = vadd.f32 %v1576, %v1630
        %v1645 = vadd.f32 %v1577, %v1626
        %v1646 = vadd.f32 %v1578, %v1630
        %v1647 = vadd.f32 %v1579, %v1626
        %v1648 = vadd.f32 %v1580, %v1630
        %v1649 = vadd.f32 %v1581, %v1626
        %v1650 = vadd.f32 %v1582, %v1630
        %v1651 = vadd.f32 %v1583, %v1626
        %v1652 = vadd.f32 %v1584, %v1630
        %v1653 = vadd.f32 %v1585, %v1626
        %v1654 = vadd.f32 %v1586, %v1630
        %v1655 = vadd.f32 %v1587, %v1626
        %v1656 = vadd.f32 %v1588, %v1630
        %v1657 = vadd.f32 %v1589, %v1626
        %v1658 = vadd.f32 %v1590, %v1630
        %v1659 = vadd.f32 %v1591, %v1626
        %v1660 = vadd.f32 %v1592, %v1630
        %v1661 = vadd.f32 %v1593, %v1626
        %v1662 = vadd.f32 %v1594, %v1630
        %v1663 = vadd.f32 %v1595, %v1626
        %v1664 = vadd.f32 %v1596, %v1630
        %v1665 = vadd.f32 %v1597, %v1626
        %v1666 = vadd.f32 %v1598, %v1630
        %v1667 = vadd.f32 %v1599, %v1626
        %v1668 = vadd.f32 %v1600, %v1630
        %v1669 = vadd.f32 %v1601, %v1626
        %v1670 = vadd.f32 %v1602, %v1630
        %v1671 = vadd.f32 %v1603, %v1626
        %v1672 = vadd.f32 %v1604, %v1630
        %v1673 = vadd.f32 %v1605, %v1626
        %v1674 = vadd.f32 %v1606, %v1630
        %v1675 = vadd.f32 %v1607, %v1626
        %v1676 = vadd.f32 %v1608, %v1630
        %v1677 = vadd.f32 %v1609, %v1626
        %v1678 = vadd.f32 %v1610, %v1630
        %v1679 = vadd.f32 %v1611, %v1626
        %v1680 = vadd.f32 %v1612, %v1630
        %v1681 = vadd.f32 %v1613, %v1626
        %v1682 = vadd.f32 %v1614, %v1630
        %v1683 = vadd.f32 %v1615, %v1626
        %v1684 = vadd.f32 %v1616, %v1630
        %v1685 = vadd.f32 %v1617, %v1626
        %v1686 = vadd.f32 %v1618, %v1630
        %v1687 = vadd.f32 %v1619, %v1626
        %v1688 = vadd.f32 %v1620, %v1630
        %v1689 = vmax.f32 %v1633, 0.0
        %v1690 = vmax.f32 %v1634, 0.0
        %v1691 = vmax.f32 %v1635, 0.0
        %v1692 = vmax.f32 %v1636, 0.0
        %v1693 = vmax.f32 %v1637, 0.0
        %v1694 = vmax.f32 %v1638, 0.0
        %v1695 = vmax.f32 %v1639, 0.0
        %v1696 = vmax.f32 %v1640, 0.0
        %v1697 = vmax.f32 %v1641, 0.0
        %v1698 = vmax.f32 %v1642, 0.0
        %v1699 = vmax.f32 %v1643, 0.0
        %v1700 = vmax.f32 %v1644, 0.0
        %v1701 = vmax.f32 %v1645, 0.0
        %v1702 = vmax.f32 %v1646, 0.0
        %v1703 = vmax.f32 %v1647, 0.0
        %v1704 = vmax.f32 %v1648, 0.0
        %v1705 = vmax.f32 %v1649, 0.0
        %v1706 = vmax.f32 %v1650, 0.0
        %v1707 = vmax.f32 %v1651, 0.0
        %v1708 = vmax.f32 %v1652, 0.0
        %v1709 = vmax.f32 %v1653, 0.0
        %v1710 = vmax.f32 %v1654, 0.0
        %v1711 = vmax.f32 %v1655, 0.0
        %v1712 = vmax.f32 %v1656, 0.0
        %v1713 = vmax.f32 %v1657, 0.0
        %v1714 = vmax.f32 %v1658, 0.0
        %v1715 = vmax.f32 %v1659, 0.0
        %v1716 = vmax.f32 %v1660, 0.0
        %v1717 = vmax.f32 %v1661, 0.0
        %v1718 = vmax.f32 %v1662, 0.0
        %v1719 = vmax.f32 %v1663, 0.0
        %v1720 = vmax.f32 %v1664, 0.0
        %v1721 = vmax.f32 %v1665, 0.0
        %v1722 = vmax.f32 %v1666, 0.0
        %v1723 = vmax.f32 %v1667, 0.0
        %v1724 = vmax.f32 %v1668, 0.0
        %v1725 = vmax.f32 %v1669, 0.0
        %v1726 = vmax.f32 %v1670, 0.0
        %v1727 = vmax.f32 %v1671, 0.0
        %v1728 = vmax.f32 %v1672, 0.0
        %v1729 = vmax.f32 %v1673, 0.0
        %v1730 = vmax.f32 %v1674, 0.0
        %v1731 = vmax.f32 %v1675, 0.0
        %v1732 = vmax.f32 %v1676, 0.0
        %v1733 = vmax.f32 %v1677, 0.0
        %v1734 = vmax.f32 %v1678, 0.0
        %v1735 = vmax.f32 %v1679, 0.0
        %v1736 = vmax.f32 %v1680, 0.0
        %v1737 = vmax.f32 %v1681, 0.0
        %v1738 = vmax.f32 %v1682, 0.0
        %v1739 = vmax.f32 %v1683, 0.0
        %v1740 = vmax.f32 %v1684, 0.0
        %v1741 = vmax.f32 %v1685, 0.0
        %v1742 = vmax.f32 %v1686, 0.0
        %v1743 = vmax.f32 %v1687, 0.0
        %v1744 = vmax.f32 %v1688, 0.0
        %v1745 = vmax.f32 %v1689, %v1690
        %v1746 = vmax.f32 %v1691, %v1692
        %v1747 = vmax.f32 %v1693, %v1694
        %v1748 = vmax.f32 %v1695, %v1696
        %v1749 = vmax.f32 %v1697, %v1698
        %v1750 = vmax.f32 %v1699, %v1700
        %v1751 = vmax.f32 %v1701, %v1702
        %v1752 = vmax.f32 %v1703, %v1704
        %v1753 = vmax.f32 %v1705, %v1706
        %v1754 = vmax.f32 %v1707, %v1708
        %v1755 = vmax.f32 %v1709, %v1710
        %v1756 = vmax.f32 %v1711, %v1712
        %v1757 = vmax.f32 %v1713, %v1714
        %v1758 = vmax.f32 %v1715, %v1716
        %v1759 = vmax.f32 %v1717, %v1718
        %v1760 = vmax.f32 %v1719, %v1720
        %v1761 = vmax.f32 %v1721, %v1722
        %v1762 = vmax.f32 %v1723, %v1724
        %v1763 = vmax.f32 %v1725, %v1726
        %v1764 = vmax.f32 %v1727, %v1728
        %v1765 = vmax.f32 %v1729, %v1730
        %v1766 = vmax.f32 %v1731, %v1732
        %v1767 = vmax.f32 %v1733, %v1734
        %v1768 = vmax.f32 %v1735, %v1736
        %v1769 = vmax.f32 %v1737, %v1738
        %v1770 = vmax.f32 %v1739, %v1740
        %v1771 = vmax.f32 %v1741, %v1742
        %v1772 = vmax.f32 %v1743, %v1744
        %v1773 = vmax.f32 %v1745, %v1746
        %v1774 = vmax.f32 %v1747, %v1748
        %v1775 = vmax.f32 %v1749, %v1750
        %v1776 = vmax.f32 %v1751, %v1752
        %v1777 = vmax.f32 %v1753, %v1754
        %v1778 = vmax.f32 %v1755, %v1756
        %v1779 = vmax.f32 %v1757, %v1758
        %v1780 = vmax.f32 %v1759, %v1760
        %v1781 = vmax.f32 %v1761, %v1762
        %v1782 = vmax.f32 %v1763, %v1764
        %v1783 = vmax.f32 %v1765, %v1766
        %v1784 = vmax.f32 %v1767, %v1768
        %v1785 = vmax.f32 %v1769, %v1770
        %v1786 = vmax.f32 %v1771, %v1772
        %s1787 = scalar_lea.vmem [#allocation3], 8
        %1788 = vst [vmem:[%s1787] sm:$0xff] %v1773
        %1789 = vst [vmem:[%s1787 + $0x8] sm:$0xff] %v1774
        %1790 = vst [vmem:[%s1787 + $0x10] sm:$0xff] %v1775
        %1791 = vst [vmem:[%s1787 + $0x18] sm:$0xff] %v1776
        %1792 = vst [vmem:[%s1787 + $0x20] sm:$0xff] %v1777
        %1793 = vst [vmem:[%s1787 + $0x28] sm:$0xff] %v1778
        %1794 = vst [vmem:[%s1787 + $0x30] sm:$0xff] %v1779
        %1795 = vst [vmem:[%s1787 + $0x38] sm:$0xff] %v1780
        %1796 = vst [vmem:[%s1787 + $0x40] sm:$0xff] %v1781
        %1797 = vst [vmem:[%s1787 + $0x48] sm:$0xff] %v1782
        %1798 = vst [vmem:[%s1787 + $0x50] sm:$0xff] %v1783
        %1799 = vst [vmem:[%s1787 + $0x58] sm:$0xff] %v1784
        %1800 = vst [vmem:[%s1787 + $0x60] sm:$0xff] %v1785
        %1801 = vst [vmem:[%s1787 + $0x68] sm:$0xff] %v1786
        %v1802 = vld [vmem:[#allocation3] sm:$0xff]
        %v1803 = vld [vmem:[#allocation3 + $0x8] sm:$0xff]
        %v1804 = vld [vmem:[#allocation3 + $0x10] sm:$0xff]
        %v1805 = vld [vmem:[#allocation3 + $0x18] sm:$0xff]
        %v1806 = vld [vmem:[#allocation3 + $0x20] sm:$0xff]
        %v1807 = vld [vmem:[#allocation3 + $0x28] sm:$0xff]
        %v1808 = vld [vmem:[#allocation3 + $0x30] sm:$0xff]
        %v1809 = vld [vmem:[#allocation3 + $0x38] sm:$0xff]
        %v1810 = vld [vmem:[#allocation3 + $0x40] sm:$0xff]
        %v1811 = vld [vmem:[#allocation3 + $0x48] sm:$0xff]
        %v1812 = vld [vmem:[#allocation3 + $0x50] sm:$0xff]
        %v1813 = vld [vmem:[#allocation3 + $0x58] sm:$0xff]
        %v1814 = vld [vmem:[#allocation3 + $0x60] sm:$0xff]
        %v1815 = vld [vmem:[#allocation3 + $0x68] sm:$0xff]
        %v1816 = vld [vmem:[%s3] sm:$0xff]
        %v1817 = vld [vmem:[%s3 + $0x8] sm:$0xff]
        %v1818 = vld [vmem:[%s3 + $0x10] sm:$0xff]
        %v1819 = vld [vmem:[%s3 + $0x18] sm:$0xff]
        %v1820 = vld [vmem:[%s3 + $0x20] sm:$0xff]
        %v1821 = vld [vmem:[%s3 + $0x28] sm:$0xff]
        %v1822 = vld [vmem:[%s3 + $0x30] sm:$0xff]
        %v1823 = vld [vmem:[%s3 + $0x38] sm:$0xff]
        %v1824 = vld [vmem:[%s3 + $0x40] sm:$0xff]
        %v1825 = vld [vmem:[%s3 + $0x48] sm:$0xff]
        %v1826 = vld [vmem:[%s3 + $0x50] sm:$0xff]
        %v1827 = vld [vmem:[%s3 + $0x58] sm:$0xff]
        %v1828 = vld [vmem:[%s3 + $0x60] sm:$0xff]
        %v1829 = vld [vmem:[%s3 + $0x68] sm:$0xff]
        %v1830 = vld [vmem:[%s3 + $0x70] sm:$0xff]
        %v1831 = vld [vmem:[%s3 + $0x78] sm:$0xff]
        %v1832 = vld [vmem:[%s3 + $0x80] sm:$0xff]
        %v1833 = vld [vmem:[%s3 + $0x88] sm:$0xff]
        %v1834 = vld [vmem:[%s3 + $0x90] sm:$0xff]
        %v1835 = vld [vmem:[%s3 + $0x98] sm:$0xff]
        %v1836 = vld [vmem:[%s3 + $0xa0] sm:$0xff]
        %v1837 = vld [vmem:[%s3 + $0xa8] sm:$0xff]
        %v1838 = vld [vmem:[%s3 + $0xb0] sm:$0xff]
        %v1839 = vld [vmem:[%s3 + $0xb8] sm:$0xff]
        %v1840 = vld [vmem:[%s3 + $0xc0] sm:$0xff]
        %v1841 = vld [vmem:[%s3 + $0xc8] sm:$0xff]
        %v1842 = vld [vmem:[%s3 + $0xd0] sm:$0xff]
        %v1843 = vld [vmem:[%s3 + $0xd8] sm:$0xff]
        %v1844 = vld [vmem:[%s3 + $0xe0] sm:$0xff]
        %v1845 = vld [vmem:[%s3 + $0xe8] sm:$0xff]
        %v1846 = vld [vmem:[%s3 + $0xf0] sm:$0xff]
        %v1847 = vld [vmem:[%s3 + $0xf8] sm:$0xff]
        %v1848 = vld [vmem:[%s1787] sm:$0xff]
        %v1849 = vld [vmem:[%s1787 + $0x8] sm:$0xff]
        %v1850 = vld [vmem:[%s1787 + $0x10] sm:$0xff]
        %v1851 = vld [vmem:[%s1787 + $0x18] sm:$0xff]
        %v1852 = vld [vmem:[%s1787 + $0x20] sm:$0xff]
        %v1853 = vld [vmem:[%s1787 + $0x28] sm:$0xff]
        %v1854 = vld [vmem:[%s1787 + $0x30] sm:$0xff]
        %v1855 = vld [vmem:[%s1787 + $0x38] sm:$0xff]
        %v1856 = vld [vmem:[%s1787 + $0x40] sm:$0xff]
        %v1857 = vld [vmem:[%s1787 + $0x48] sm:$0xff]
        %v1858 = vld [vmem:[%s1787 + $0x50] sm:$0xff]
        %v1859 = vld [vmem:[%s1787 + $0x58] sm:$0xff]
        %v1860 = vld [vmem:[%s1787 + $0x60] sm:$0xff]
        %v1861 = vld [vmem:[%s1787 + $0x68] sm:$0xff]
        %s1862 = scalar_lea.vmem %s3, 256
        %v1863 = vld [vmem:[%s1862] sm:$0xff]
        %v1864 = vld [vmem:[%s1862 + $0x8] sm:$0xff]
        %v1865 = vld [vmem:[%s1862 + $0x10] sm:$0xff]
        %v1866 = vld [vmem:[%s1862 + $0x18] sm:$0xff]
        %v1867 = vld [vmem:[%s1862 + $0x20] sm:$0xff]
        %v1868 = vld [vmem:[%s1862 + $0x28] sm:$0xff]
        %v1869 = vld [vmem:[%s1862 + $0x30] sm:$0xff]
        %v1870 = vld [vmem:[%s1862 + $0x38] sm:$0xff]
        %v1871 = vld [vmem:[%s1862 + $0x40] sm:$0xff]
        %v1872 = vld [vmem:[%s1862 + $0x48] sm:$0xff]
        %v1873 = vld [vmem:[%s1862 + $0x50] sm:$0xff]
        %v1874 = vld [vmem:[%s1862 + $0x58] sm:$0xff]
        %v1875 = vld [vmem:[%s1862 + $0x60] sm:$0xff]
        %v1876 = vld [vmem:[%s1862 + $0x68] sm:$0xff]
        %v1877 = vld [vmem:[%s1862 + $0x70] sm:$0xff]
        %v1878 = vld [vmem:[%s1862 + $0x78] sm:$0xff]
        %v1879 = vld [vmem:[%s1862 + $0x80] sm:$0xff]
        %v1880 = vld [vmem:[%s1862 + $0x88] sm:$0xff]
        %v1881 = vld [vmem:[%s1862 + $0x90] sm:$0xff]
        %v1882 = vld [vmem:[%s1862 + $0x98] sm:$0xff]
        %v1883 = vld [vmem:[%s1862 + $0xa0] sm:$0xff]
        %v1884 = vld [vmem:[%s1862 + $0xa8] sm:$0xff]
        %v1885 = vld [vmem:[%s1862 + $0xb0] sm:$0xff]
        %v1886 = vld [vmem:[%s1862 + $0xb8] sm:$0xff]
        %v1887 = vld [vmem:[%s1862 + $0xc0] sm:$0xff]
        %v1888 = vld [vmem:[%s1862 + $0xc8] sm:$0xff]
        %v1889 = vld [vmem:[%s1862 + $0xd0] sm:$0xff]
        %v1890 = vld [vmem:[%s1862 + $0xd8] sm:$0xff]
        %v1891 = vld [vmem:[%s1862 + $0xe0] sm:$0xff]
        %v1892 = vld [vmem:[%s1862 + $0xe8] sm:$0xff]
        %v1893 = vld [vmem:[%s1862 + $0xf0] sm:$0xff]
        %v1894 = vld [vmem:[%s1862 + $0xf8] sm:$0xff]
        %1895 = vmatprep.subr.mxu0 %v1894
        %1896 = vmatpush1.msra.mxu0 %v1893
        %1897 = vmatprep.subr.mxu0 %v1892
        %1898 = vmatpush1.msra.mxu0 %v1891
        %1899 = vmatprep.subr.mxu0 %v1890
        %1900 = vmatpush1.msra.mxu0 %v1889
        %1901 = vmatprep.subr.mxu0 %v1888
        %1902 = vmatpush1.msra.mxu0 %v1887
        %1903 = vmatprep.subr.mxu0 %v1886
        %1904 = vmatpush1.msra.mxu0 %v1885
        %1905 = vmatprep.subr.mxu0 %v1884
        %1906 = vmatpush1.msra.mxu0 %v1883
        %1907 = vmatprep.subr.mxu0 %v1882
        %1908 = vmatpush1.msra.mxu0 %v1881
        %1909 = vmatprep.subr.mxu0 %v1880
        %1910 = vmatpush1.msra.mxu0 %v1879
        %1911 = vmatprep.subr.mxu0 %v1878
        %1912 = vmatpush1.msra.mxu0 %v1877
        %1913 = vmatprep.subr.mxu0 %v1876
        %1914 = vmatpush1.msra.mxu0 %v1875
        %1915 = vmatprep.subr.mxu0 %v1874
        %1916 = vmatpush1.msra.mxu0 %v1873
        %1917 = vmatprep.subr.mxu0 %v1872
        %1918 = vmatpush1.msra.mxu0 %v1871
        %1919 = vmatprep.subr.mxu0 %v1870
        %1920 = vmatpush1.msra.mxu0 %v1869
        %1921 = vmatprep.subr.mxu0 %v1868
        %1922 = vmatpush1.msra.mxu0 %v1867
        %1923 = vmatprep.subr.mxu0 %v1866
        %1924 = vmatpush1.msra.mxu0 %v1865
        %1925 = vmatprep.subr.mxu0 %v1864
        %1926 = vmatpush1.msra.mxu0 %v1863
        %1927 = vmatprep.subr.mxu0 0.0
        %1928 = vmatpush2.msra.mxu0 0.0
        %1929 = vmatprep.subr.mxu0 0.0
        %1930 = vmatpush2.msra.mxu0 0.0
        %1931 = vmatprep.subr.mxu0 0.0
        %1932 = vmatpush2.msra.mxu0 0.0
        %1933 = vmatprep.subr.mxu0 0.0
        %1934 = vmatpush2.msra.mxu0 0.0
        %1935 = vmatprep.subr.mxu0 0.0
        %1936 = vmatpush2.msra.mxu0 0.0
        %1937 = vmatprep.subr.mxu0 0.0
        %1938 = vmatpush2.msra.mxu0 0.0
        %1939 = vmatprep.subr.mxu0 0.0
        %1940 = vmatpush2.msra.mxu0 0.0
        %1941 = vmatprep.subr.mxu0 0.0
        %1942 = vmatpush2.msra.mxu0 0.0
        %1943 = vmatprep.subr.mxu0 0.0
        %1944 = vmatpush2.msra.mxu0 0.0
        %1945 = vmatprep.subr.mxu0 0.0
        %1946 = vmatpush2.msra.mxu0 0.0
        %1947 = vmatprep.subr.mxu0 0.0
        %1948 = vmatpush2.msra.mxu0 0.0
        %1949 = vmatprep.subr.mxu0 0.0
        %1950 = vmatpush2.msra.mxu0 0.0
        %1951 = vmatprep.subr.mxu0 0.0
        %1952 = vmatpush2.msra.mxu0 0.0
        %1953 = vmatprep.subr.mxu0 0.0
        %1954 = vmatpush2.msra.mxu0 0.0
        %1955 = vmatprep.subr.mxu0 0.0
        %1956 = vmatpush2.msra.mxu0 0.0
        %1957 = vmatprep.subr.mxu0 0.0
        %1958 = vmatpush2.msra.mxu0 0.0
        %1959 = vmatprep.mubr.f32.mxu0 0.0
        %1960 = vmatmul.mubr.f32.gmra.mxu0 %v1848
        %v1961 = vpop.f32.mrf.mxu0
        %v1962 = vadd.f32 0.0, %v1961
        %v1963 = vpop.f32.mrf.mxu0
        %v1964 = vadd.f32 0.0, %v1963
        %1965 = vmatprep.mubr.f32.mxu0 0.0
        %1966 = vmatmul.mubr.f32.gmra.mxu0 %v1849
        %v1967 = vpop.f32.mrf.mxu0
        %v1968 = vadd.f32 0.0, %v1967
        %v1969 = vpop.f32.mrf.mxu0
        %v1970 = vadd.f32 0.0, %v1969
        %1971 = vmatprep.mubr.f32.mxu0 0.0
        %1972 = vmatmul.mubr.f32.gmra.mxu0 %v1850
        %v1973 = vpop.f32.mrf.mxu0
        %v1974 = vadd.f32 0.0, %v1973
        %v1975 = vpop.f32.mrf.mxu0
        %v1976 = vadd.f32 0.0, %v1975
        %1977 = vmatprep.mubr.f32.mxu0 0.0
        %1978 = vmatmul.mubr.f32.gmra.mxu0 %v1851
        %v1979 = vpop.f32.mrf.mxu0
        %v1980 = vadd.f32 0.0, %v1979
        %v1981 = vpop.f32.mrf.mxu0
        %v1982 = vadd.f32 0.0, %v1981
        %1983 = vmatprep.mubr.f32.mxu0 0.0
        %1984 = vmatmul.mubr.f32.gmra.mxu0 %v1852
        %v1985 = vpop.f32.mrf.mxu0
        %v1986 = vadd.f32 0.0, %v1985
        %v1987 = vpop.f32.mrf.mxu0
        %v1988 = vadd.f32 0.0, %v1987
        %1989 = vmatprep.mubr.f32.mxu0 0.0
        %1990 = vmatmul.mubr.f32.gmra.mxu0 %v1853
        %v1991 = vpop.f32.mrf.mxu0
        %v1992 = vadd.f32 0.0, %v1991
        %v1993 = vpop.f32.mrf.mxu0
        %v1994 = vadd.f32 0.0, %v1993
        %1995 = vmatprep.mubr.f32.mxu0 0.0
        %1996 = vmatmul.mubr.f32.gmra.mxu0 %v1854
        %v1997 = vpop.f32.mrf.mxu0
        %v1998 = vadd.f32 0.0, %v1997
        %v1999 = vpop.f32.mrf.mxu0
        %v2000 = vadd.f32 0.0, %v1999
        %2001 = vmatprep.mubr.f32.mxu0 0.0
        %2002 = vmatmul.mubr.f32.gmra.mxu0 %v1855
        %v2003 = vpop.f32.mrf.mxu0
        %v2004 = vadd.f32 0.0, %v2003
        %v2005 = vpop.f32.mrf.mxu0
        %v2006 = vadd.f32 0.0, %v2005
        %2007 = vmatprep.mubr.f32.mxu0 0.0
        %2008 = vmatmul.mubr.f32.gmra.mxu0 %v1856
        %v2009 = vpop.f32.mrf.mxu0
        %v2010 = vadd.f32 0.0, %v2009
        %v2011 = vpop.f32.mrf.mxu0
        %v2012 = vadd.f32 0.0, %v2011
        %2013 = vmatprep.mubr.f32.mxu0 0.0
        %2014 = vmatmul.mubr.f32.gmra.mxu0 %v1857
        %v2015 = vpop.f32.mrf.mxu0
        %v2016 = vadd.f32 0.0, %v2015
        %v2017 = vpop.f32.mrf.mxu0
        %v2018 = vadd.f32 0.0, %v2017
        %2019 = vmatprep.mubr.f32.mxu0 0.0
        %2020 = vmatmul.mubr.f32.gmra.mxu0 %v1858
        %v2021 = vpop.f32.mrf.mxu0
        %v2022 = vadd.f32 0.0, %v2021
        %v2023 = vpop.f32.mrf.mxu0
        %v2024 = vadd.f32 0.0, %v2023
        %2025 = vmatprep.mubr.f32.mxu0 0.0
        %2026 = vmatmul.mubr.f32.gmra.mxu0 %v1859
        %v2027 = vpop.f32.mrf.mxu0
        %v2028 = vadd.f32 0.0, %v2027
        %v2029 = vpop.f32.mrf.mxu0
        %v2030 = vadd.f32 0.0, %v2029
        %2031 = vmatprep.mubr.f32.mxu0 0.0
        %2032 = vmatmul.mubr.f32.gmra.mxu0 %v1860
        %v2033 = vpop.f32.mrf.mxu0
        %v2034 = vadd.f32 0.0, %v2033
        %v2035 = vpop.f32.mrf.mxu0
        %v2036 = vadd.f32 0.0, %v2035
        %2037 = vmatprep.mubr.f32.mxu0 0.0
        %2038 = vmatmul.mubr.f32.gmra.mxu0 %v1861
        %v2039 = vpop.f32.mrf.mxu0
        %v2040 = vadd.f32 0.0, %v2039
        %v2041 = vpop.f32.mrf.mxu0
        %v2042 = vadd.f32 0.0, %v2041
        %2043 = vdwg.mxu0
        %2044 = vmatprep.subr.mxu0 %v1847
        %2045 = vmatpush1.msra.mxu0 %v1846
        %2046 = vmatprep.subr.mxu0 %v1845
        %2047 = vmatpush1.msra.mxu0 %v1844
        %2048 = vmatprep.subr.mxu0 %v1843
        %2049 = vmatpush1.msra.mxu0 %v1842
        %2050 = vmatprep.subr.mxu0 %v1841
        %2051 = vmatpush1.msra.mxu0 %v1840
        %2052 = vmatprep.subr.mxu0 %v1839
        %2053 = vmatpush1.msra.mxu0 %v1838
        %2054 = vmatprep.subr.mxu0 %v1837
        %2055 = vmatpush1.msra.mxu0 %v1836
        %2056 = vmatprep.subr.mxu0 %v1835
        %2057 = vmatpush1.msra.mxu0 %v1834
        %2058 = vmatprep.subr.mxu0 %v1833
        %2059 = vmatpush1.msra.mxu0 %v1832
        %2060 = vmatprep.subr.mxu0 %v1831
        %2061 = vmatpush1.msra.mxu0 %v1830
        %2062 = vmatprep.subr.mxu0 %v1829
        %2063 = vmatpush1.msra.mxu0 %v1828
        %2064 = vmatprep.subr.mxu0 %v1827
        %2065 = vmatpush1.msra.mxu0 %v1826
        %2066 = vmatprep.subr.mxu0 %v1825
        %2067 = vmatpush1.msra.mxu0 %v1824
        %2068 = vmatprep.subr.mxu0 %v1823
        %2069 = vmatpush1.msra.mxu0 %v1822
        %2070 = vmatprep.subr.mxu0 %v1821
        %2071 = vmatpush1.msra.mxu0 %v1820
        %2072 = vmatprep.subr.mxu0 %v1819
        %2073 = vmatpush1.msra.mxu0 %v1818
        %2074 = vmatprep.subr.mxu0 %v1817
        %2075 = vmatpush1.msra.mxu0 %v1816
        %2076 = vmatprep.subr.mxu0 0.0
        %2077 = vmatpush2.msra.mxu0 0.0
        %2078 = vmatprep.subr.mxu0 0.0
        %2079 = vmatpush2.msra.mxu0 0.0
        %2080 = vmatprep.subr.mxu0 0.0
        %2081 = vmatpush2.msra.mxu0 0.0
        %2082 = vmatprep.subr.mxu0 0.0
        %2083 = vmatpush2.msra.mxu0 0.0
        %2084 = vmatprep.subr.mxu0 0.0
        %2085 = vmatpush2.msra.mxu0 0.0
        %2086 = vmatprep.subr.mxu0 0.0
        %2087 = vmatpush2.msra.mxu0 0.0
        %2088 = vmatprep.subr.mxu0 0.0
        %2089 = vmatpush2.msra.mxu0 0.0
        %2090 = vmatprep.subr.mxu0 0.0
        %2091 = vmatpush2.msra.mxu0 0.0
        %2092 = vmatprep.subr.mxu0 0.0
        %2093 = vmatpush2.msra.mxu0 0.0
        %2094 = vmatprep.subr.mxu0 0.0
        %2095 = vmatpush2.msra.mxu0 0.0
        %2096 = vmatprep.subr.mxu0 0.0
        %2097 = vmatpush2.msra.mxu0 0.0
        %2098 = vmatprep.subr.mxu0 0.0
        %2099 = vmatpush2.msra.mxu0 0.0
        %2100 = vmatprep.subr.mxu0 0.0
        %2101 = vmatpush2.msra.mxu0 0.0
        %2102 = vmatprep.subr.mxu0 0.0
        %2103 = vmatpush2.msra.mxu0 0.0
        %2104 = vmatprep.subr.mxu0 0.0
        %2105 = vmatpush2.msra.mxu0 0.0
        %2106 = vmatprep.subr.mxu0 0.0
        %2107 = vmatpush2.msra.mxu0 0.0
        %2108 = vmatprep.mubr.f32.mxu0 0.0
        %2109 = vmatmul.mubr.f32.gmra.mxu0 %v1802
        %v2110 = vpop.f32.mrf.mxu0
        %v2111 = vadd.f32 %v1962, %v2110
        %v2112 = vpop.f32.mrf.mxu0
        %v2113 = vadd.f32 %v1964, %v2112
        %2114 = vmatprep.mubr.f32.mxu0 0.0
        %2115 = vmatmul.mubr.f32.gmra.mxu0 %v1803
        %v2116 = vpop.f32.mrf.mxu0
        %v2117 = vadd.f32 %v1968, %v2116
        %v2118 = vpop.f32.mrf.mxu0
        %v2119 = vadd.f32 %v1970, %v2118
        %2120 = vmatprep.mubr.f32.mxu0 0.0
        %2121 = vmatmul.mubr.f32.gmra.mxu0 %v1804
        %v2122 = vpop.f32.mrf.mxu0
        %v2123 = vadd.f32 %v1974, %v2122
        %v2124 = vpop.f32.mrf.mxu0
        %v2125 = vadd.f32 %v1976, %v2124
        %2126 = vmatprep.mubr.f32.mxu0 0.0
        %2127 = vmatmul.mubr.f32.gmra.mxu0 %v1805
        %v2128 = vpop.f32.mrf.mxu0
        %v2129 = vadd.f32 %v1980, %v2128
        %v2130 = vpop.f32.mrf.mxu0
        %v2131 = vadd.f32 %v1982, %v2130
        %2132 = vmatprep.mubr.f32.mxu0 0.0
        %2133 = vmatmul.mubr.f32.gmra.mxu0 %v1806
        %v2134 = vpop.f32.mrf.mxu0
        %v2135 = vadd.f32 %v1986, %v2134
        %v2136 = vpop.f32.mrf.mxu0
        %v2137 = vadd.f32 %v1988, %v2136
        %2138 = vmatprep.mubr.f32.mxu0 0.0
        %2139 = vmatmul.mubr.f32.gmra.mxu0 %v1807
        %v2140 = vpop.f32.mrf.mxu0
        %v2141 = vadd.f32 %v1992, %v2140
        %v2142 = vpop.f32.mrf.mxu0
        %v2143 = vadd.f32 %v1994, %v2142
        %2144 = vmatprep.mubr.f32.mxu0 0.0
        %2145 = vmatmul.mubr.f32.gmra.mxu0 %v1808
        %v2146 = vpop.f32.mrf.mxu0
        %v2147 = vadd.f32 %v1998, %v2146
        %v2148 = vpop.f32.mrf.mxu0
        %v2149 = vadd.f32 %v2000, %v2148
        %2150 = vmatprep.mubr.f32.mxu0 0.0
        %2151 = vmatmul.mubr.f32.gmra.mxu0 %v1809
        %v2152 = vpop.f32.mrf.mxu0
        %v2153 = vadd.f32 %v2004, %v2152
        %v2154 = vpop.f32.mrf.mxu0
        %v2155 = vadd.f32 %v2006, %v2154
        %2156 = vmatprep.mubr.f32.mxu0 0.0
        %2157 = vmatmul.mubr.f32.gmra.mxu0 %v1810
        %v2158 = vpop.f32.mrf.mxu0
        %v2159 = vadd.f32 %v2010, %v2158
        %v2160 = vpop.f32.mrf.mxu0
        %v2161 = vadd.f32 %v2012, %v2160
        %2162 = vmatprep.mubr.f32.mxu0 0.0
        %2163 = vmatmul.mubr.f32.gmra.mxu0 %v1811
        %v2164 = vpop.f32.mrf.mxu0
        %v2165 = vadd.f32 %v2016, %v2164
        %v2166 = vpop.f32.mrf.mxu0
        %v2167 = vadd.f32 %v2018, %v2166
        %2168 = vmatprep.mubr.f32.mxu0 0.0
        %2169 = vmatmul.mubr.f32.gmra.mxu0 %v1812
        %v2170 = vpop.f32.mrf.mxu0
        %v2171 = vadd.f32 %v2022, %v2170
        %v2172 = vpop.f32.mrf.mxu0
        %v2173 = vadd.f32 %v2024, %v2172
        %2174 = vmatprep.mubr.f32.mxu0 0.0
        %2175 = vmatmul.mubr.f32.gmra.mxu0 %v1813
        %v2176 = vpop.f32.mrf.mxu0
        %v2177 = vadd.f32 %v2028, %v2176
        %v2178 = vpop.f32.mrf.mxu0
        %v2179 = vadd.f32 %v2030, %v2178
        %2180 = vmatprep.mubr.f32.mxu0 0.0
        %2181 = vmatmul.mubr.f32.gmra.mxu0 %v1814
        %v2182 = vpop.f32.mrf.mxu0
        %v2183 = vadd.f32 %v2034, %v2182
        %v2184 = vpop.f32.mrf.mxu0
        %v2185 = vadd.f32 %v2036, %v2184
        %2186 = vmatprep.mubr.f32.mxu0 0.0
        %2187 = vmatmul.mubr.f32.gmra.mxu0 %v1815
        %v2188 = vpop.f32.mrf.mxu0
        %v2189 = vadd.f32 %v2040, %v2188
        %v2190 = vpop.f32.mrf.mxu0
        %v2191 = vadd.f32 %v2042, %v2190
        %2192 = vdwg.mxu0
        %s2193 = scalar_lea.vmem [#allocation3], 16
        %v2194 = vld [vmem:[%s2193] sm:$0xff]
        %v2195 = vld [vmem:[%s2193 + $0x8] sm:$0xff]
        %v2196 = vld [vmem:[%s2193 + $0x10] sm:$0xff]
        %v2197 = vld [vmem:[%s2193 + $0x18] sm:$0xff]
        %v2198 = vld [vmem:[%s2193 + $0x20] sm:$0xff]
        %v2199 = vld [vmem:[%s2193 + $0x28] sm:$0xff]
        %v2200 = vld [vmem:[%s2193 + $0x30] sm:$0xff]
        %v2201 = vld [vmem:[%s2193 + $0x38] sm:$0xff]
        %v2202 = vld [vmem:[%s2193 + $0x40] sm:$0xff]
        %v2203 = vld [vmem:[%s2193 + $0x48] sm:$0xff]
        %v2204 = vld [vmem:[%s2193 + $0x50] sm:$0xff]
        %v2205 = vld [vmem:[%s2193 + $0x58] sm:$0xff]
        %v2206 = vld [vmem:[%s2193 + $0x60] sm:$0xff]
        %v2207 = vld [vmem:[%s2193 + $0x68] sm:$0xff]
        %s2208 = scalar_lea.vmem %s3, 512
        %v2209 = vld [vmem:[%s2208] sm:$0xff]
        %v2210 = vld [vmem:[%s2208 + $0x8] sm:$0xff]
        %v2211 = vld [vmem:[%s2208 + $0x10] sm:$0xff]
        %v2212 = vld [vmem:[%s2208 + $0x18] sm:$0xff]
        %v2213 = vld [vmem:[%s2208 + $0x20] sm:$0xff]
        %v2214 = vld [vmem:[%s2208 + $0x28] sm:$0xff]
        %v2215 = vld [vmem:[%s2208 + $0x30] sm:$0xff]
        %v2216 = vld [vmem:[%s2208 + $0x38] sm:$0xff]
        %v2217 = vld [vmem:[%s2208 + $0x40] sm:$0xff]
        %v2218 = vld [vmem:[%s2208 + $0x48] sm:$0xff]
        %v2219 = vld [vmem:[%s2208 + $0x50] sm:$0xff]
        %v2220 = vld [vmem:[%s2208 + $0x58] sm:$0xff]
        %v2221 = vld [vmem:[%s2208 + $0x60] sm:$0xff]
        %v2222 = vld [vmem:[%s2208 + $0x68] sm:$0xff]
        %v2223 = vld [vmem:[%s2208 + $0x70] sm:$0xff]
        %v2224 = vld [vmem:[%s2208 + $0x78] sm:$0xff]
        %v2225 = vld [vmem:[%s2208 + $0x80] sm:$0xff]
        %v2226 = vld [vmem:[%s2208 + $0x88] sm:$0xff]
        %v2227 = vld [vmem:[%s2208 + $0x90] sm:$0xff]
        %v2228 = vld [vmem:[%s2208 + $0x98] sm:$0xff]
        %v2229 = vld [vmem:[%s2208 + $0xa0] sm:$0xff]
        %v2230 = vld [vmem:[%s2208 + $0xa8] sm:$0xff]
        %v2231 = vld [vmem:[%s2208 + $0xb0] sm:$0xff]
        %v2232 = vld [vmem:[%s2208 + $0xb8] sm:$0xff]
        %v2233 = vld [vmem:[%s2208 + $0xc0] sm:$0xff]
        %v2234 = vld [vmem:[%s2208 + $0xc8] sm:$0xff]
        %v2235 = vld [vmem:[%s2208 + $0xd0] sm:$0xff]
        %v2236 = vld [vmem:[%s2208 + $0xd8] sm:$0xff]
        %v2237 = vld [vmem:[%s2208 + $0xe0] sm:$0xff]
        %v2238 = vld [vmem:[%s2208 + $0xe8] sm:$0xff]
        %v2239 = vld [vmem:[%s2208 + $0xf0] sm:$0xff]
        %v2240 = vld [vmem:[%s2208 + $0xf8] sm:$0xff]
        %2241 = vmatprep.subr.mxu0 %v2240
        %2242 = vmatpush1.msra.mxu0 %v2239
        %2243 = vmatprep.subr.mxu0 %v2238
        %2244 = vmatpush1.msra.mxu0 %v2237
        %2245 = vmatprep.subr.mxu0 %v2236
        %2246 = vmatpush1.msra.mxu0 %v2235
        %2247 = vmatprep.subr.mxu0 %v2234
        %2248 = vmatpush1.msra.mxu0 %v2233
        %2249 = vmatprep.subr.mxu0 %v2232
        %2250 = vmatpush1.msra.mxu0 %v2231
        %2251 = vmatprep.subr.mxu0 %v2230
        %2252 = vmatpush1.msra.mxu0 %v2229
        %2253 = vmatprep.subr.mxu0 %v2228
        %2254 = vmatpush1.msra.mxu0 %v2227
        %2255 = vmatprep.subr.mxu0 %v2226
        %2256 = vmatpush1.msra.mxu0 %v2225
        %2257 = vmatprep.subr.mxu0 %v2224
        %2258 = vmatpush1.msra.mxu0 %v2223
        %2259 = vmatprep.subr.mxu0 %v2222
        %2260 = vmatpush1.msra.mxu0 %v2221
        %2261 = vmatprep.subr.mxu0 %v2220
        %2262 = vmatpush1.msra.mxu0 %v2219
        %2263 = vmatprep.subr.mxu0 %v2218
        %2264 = vmatpush1.msra.mxu0 %v2217
        %2265 = vmatprep.subr.mxu0 %v2216
        %2266 = vmatpush1.msra.mxu0 %v2215
        %2267 = vmatprep.subr.mxu0 %v2214
        %2268 = vmatpush1.msra.mxu0 %v2213
        %2269 = vmatprep.subr.mxu0 %v2212
        %2270 = vmatpush1.msra.mxu0 %v2211
        %2271 = vmatprep.subr.mxu0 %v2210
        %2272 = vmatpush1.msra.mxu0 %v2209
        %2273 = vmatprep.subr.mxu0 0.0
        %2274 = vmatpush2.msra.mxu0 0.0
        %2275 = vmatprep.subr.mxu0 0.0
        %2276 = vmatpush2.msra.mxu0 0.0
        %2277 = vmatprep.subr.mxu0 0.0
        %2278 = vmatpush2.msra.mxu0 0.0
        %2279 = vmatprep.subr.mxu0 0.0
        %2280 = vmatpush2.msra.mxu0 0.0
        %2281 = vmatprep.subr.mxu0 0.0
        %2282 = vmatpush2.msra.mxu0 0.0
        %2283 = vmatprep.subr.mxu0 0.0
        %2284 = vmatpush2.msra.mxu0 0.0
        %2285 = vmatprep.subr.mxu0 0.0
        %2286 = vmatpush2.msra.mxu0 0.0
        %2287 = vmatprep.subr.mxu0 0.0
        %2288 = vmatpush2.msra.mxu0 0.0
        %2289 = vmatprep.subr.mxu0 0.0
        %2290 = vmatpush2.msra.mxu0 0.0
        %2291 = vmatprep.subr.mxu0 0.0
        %2292 = vmatpush2.msra.mxu0 0.0
        %2293 = vmatprep.subr.mxu0 0.0
        %2294 = vmatpush2.msra.mxu0 0.0
        %2295 = vmatprep.subr.mxu0 0.0
        %2296 = vmatpush2.msra.mxu0 0.0
        %2297 = vmatprep.subr.mxu0 0.0
        %2298 = vmatpush2.msra.mxu0 0.0
        %2299 = vmatprep.subr.mxu0 0.0
        %2300 = vmatpush2.msra.mxu0 0.0
        %2301 = vmatprep.subr.mxu0 0.0
        %2302 = vmatpush2.msra.mxu0 0.0
        %2303 = vmatprep.subr.mxu0 0.0
        %2304 = vmatpush2.msra.mxu0 0.0
        %2305 = vmatprep.mubr.f32.mxu0 0.0
        %2306 = vmatmul.mubr.f32.gmra.mxu0 %v2194
        %v2307 = vpop.f32.mrf.mxu0
        %v2308 = vadd.f32 0.0, %v2307
        %v2309 = vpop.f32.mrf.mxu0
        %v2310 = vadd.f32 0.0, %v2309
        %2311 = vmatprep.mubr.f32.mxu0 0.0
        %2312 = vmatmul.mubr.f32.gmra.mxu0 %v2195
        %v2313 = vpop.f32.mrf.mxu0
        %v2314 = vadd.f32 0.0, %v2313
        %v2315 = vpop.f32.mrf.mxu0
        %v2316 = vadd.f32 0.0, %v2315
        %2317 = vmatprep.mubr.f32.mxu0 0.0
        %2318 = vmatmul.mubr.f32.gmra.mxu0 %v2196
        %v2319 = vpop.f32.mrf.mxu0
        %v2320 = vadd.f32 0.0, %v2319
        %v2321 = vpop.f32.mrf.mxu0
        %v2322 = vadd.f32 0.0, %v2321
        %2323 = vmatprep.mubr.f32.mxu0 0.0
        %2324 = vmatmul.mubr.f32.gmra.mxu0 %v2197
        %v2325 = vpop.f32.mrf.mxu0
        %v2326 = vadd.f32 0.0, %v2325
        %v2327 = vpop.f32.mrf.mxu0
        %v2328 = vadd.f32 0.0, %v2327
        %2329 = vmatprep.mubr.f32.mxu0 0.0
        %2330 = vmatmul.mubr.f32.gmra.mxu0 %v2198
        %v2331 = vpop.f32.mrf.mxu0
        %v2332 = vadd.f32 0.0, %v2331
        %v2333 = vpop.f32.mrf.mxu0
        %v2334 = vadd.f32 0.0, %v2333
        %2335 = vmatprep.mubr.f32.mxu0 0.0
        %2336 = vmatmul.mubr.f32.gmra.mxu0 %v2199
        %v2337 = vpop.f32.mrf.mxu0
        %v2338 = vadd.f32 0.0, %v2337
        %v2339 = vpop.f32.mrf.mxu0
        %v2340 = vadd.f32 0.0, %v2339
        %2341 = vmatprep.mubr.f32.mxu0 0.0
        %2342 = vmatmul.mubr.f32.gmra.mxu0 %v2200
        %v2343 = vpop.f32.mrf.mxu0
        %v2344 = vadd.f32 0.0, %v2343
        %v2345 = vpop.f32.mrf.mxu0
        %v2346 = vadd.f32 0.0, %v2345
        %2347 = vmatprep.mubr.f32.mxu0 0.0
        %2348 = vmatmul.mubr.f32.gmra.mxu0 %v2201
        %v2349 = vpop.f32.mrf.mxu0
        %v2350 = vadd.f32 0.0, %v2349
        %v2351 = vpop.f32.mrf.mxu0
        %v2352 = vadd.f32 0.0, %v2351
        %2353 = vmatprep.mubr.f32.mxu0 0.0
        %2354 = vmatmul.mubr.f32.gmra.mxu0 %v2202
        %v2355 = vpop.f32.mrf.mxu0
        %v2356 = vadd.f32 0.0, %v2355
        %v2357 = vpop.f32.mrf.mxu0
        %v2358 = vadd.f32 0.0, %v2357
        %2359 = vmatprep.mubr.f32.mxu0 0.0
        %2360 = vmatmul.mubr.f32.gmra.mxu0 %v2203
        %v2361 = vpop.f32.mrf.mxu0
        %v2362 = vadd.f32 0.0, %v2361
        %v2363 = vpop.f32.mrf.mxu0
        %v2364 = vadd.f32 0.0, %v2363
        %2365 = vmatprep.mubr.f32.mxu0 0.0
        %2366 = vmatmul.mubr.f32.gmra.mxu0 %v2204
        %v2367 = vpop.f32.mrf.mxu0
        %v2368 = vadd.f32 0.0, %v2367
        %v2369 = vpop.f32.mrf.mxu0
        %v2370 = vadd.f32 0.0, %v2369
        %2371 = vmatprep.mubr.f32.mxu0 0.0
        %2372 = vmatmul.mubr.f32.gmra.mxu0 %v2205
        %v2373 = vpop.f32.mrf.mxu0
        %v2374 = vadd.f32 0.0, %v2373
        %v2375 = vpop.f32.mrf.mxu0
        %v2376 = vadd.f32 0.0, %v2375
        %2377 = vmatprep.mubr.f32.mxu0 0.0
        %2378 = vmatmul.mubr.f32.gmra.mxu0 %v2206
        %v2379 = vpop.f32.mrf.mxu0
        %v2380 = vadd.f32 0.0, %v2379
        %v2381 = vpop.f32.mrf.mxu0
        %v2382 = vadd.f32 0.0, %v2381
        %2383 = vmatprep.mubr.f32.mxu0 0.0
        %2384 = vmatmul.mubr.f32.gmra.mxu0 %v2207
        %v2385 = vpop.f32.mrf.mxu0
        %v2386 = vadd.f32 0.0, %v2385
        %v2387 = vpop.f32.mrf.mxu0
        %v2388 = vadd.f32 0.0, %v2387
        %2389 = vdwg.mxu0
        %v2390 = vadd.f32 %v2111, %v2308
        %v2391 = vadd.f32 %v2113, %v2310
        %v2392 = vadd.f32 %v2117, %v2314
        %v2393 = vadd.f32 %v2119, %v2316
        %v2394 = vadd.f32 %v2123, %v2320
        %v2395 = vadd.f32 %v2125, %v2322
        %v2396 = vadd.f32 %v2129, %v2326
        %v2397 = vadd.f32 %v2131, %v2328
        %v2398 = vadd.f32 %v2135, %v2332
        %v2399 = vadd.f32 %v2137, %v2334
        %v2400 = vadd.f32 %v2141, %v2338
        %v2401 = vadd.f32 %v2143, %v2340
        %v2402 = vadd.f32 %v2147, %v2344
        %v2403 = vadd.f32 %v2149, %v2346
        %v2404 = vadd.f32 %v2153, %v2350
        %v2405 = vadd.f32 %v2155, %v2352
        %v2406 = vadd.f32 %v2159, %v2356
        %v2407 = vadd.f32 %v2161, %v2358
        %v2408 = vadd.f32 %v2165, %v2362
        %v2409 = vadd.f32 %v2167, %v2364
        %v2410 = vadd.f32 %v2171, %v2368
        %v2411 = vadd.f32 %v2173, %v2370
        %v2412 = vadd.f32 %v2177, %v2374
        %v2413 = vadd.f32 %v2179, %v2376
        %v2414 = vadd.f32 %v2183, %v2380
        %v2415 = vadd.f32 %v2185, %v2382
        %v2416 = vadd.f32 %v2189, %v2386
        %v2417 = vadd.f32 %v2191, %v2388
        %v2418 = vld [vmem:[%s4] sm:$0x3]
        %v2420 = vlaneseq
        %v2421 = vshrl.u32 %v2420, 7
        %v2422 = vsub.s32 0, %v2421
        %v2423 = vrot.slane %v2418, %v2422
        %v2424 = vlaneseq
        %v2425 = vshrl.u32 %v2424, 7
        %v2426 = vsub.s32 1, %v2425
        %v2427 = vrot.slane %v2418, %v2426
        %v2430 = vadd.f32 %v2390, %v2423
        %v2431 = vadd.f32 %v2391, %v2427
        %v2432 = vadd.f32 %v2392, %v2423
        %v2433 = vadd.f32 %v2393, %v2427
        %v2434 = vadd.f32 %v2394, %v2423
        %v2435 = vadd.f32 %v2395, %v2427
        %v2436 = vadd.f32 %v2396, %v2423
        %v2437 = vadd.f32 %v2397, %v2427
        %v2438 = vadd.f32 %v2398, %v2423
        %v2439 = vadd.f32 %v2399, %v2427
        %v2440 = vadd.f32 %v2400, %v2423
        %v2441 = vadd.f32 %v2401, %v2427
        %v2442 = vadd.f32 %v2402, %v2423
        %v2443 = vadd.f32 %v2403, %v2427
        %v2444 = vadd.f32 %v2404, %v2423
        %v2445 = vadd.f32 %v2405, %v2427
        %v2446 = vadd.f32 %v2406, %v2423
        %v2447 = vadd.f32 %v2407, %v2427
        %v2448 = vadd.f32 %v2408, %v2423
        %v2449 = vadd.f32 %v2409, %v2427
        %v2450 = vadd.f32 %v2410, %v2423
        %v2451 = vadd.f32 %v2411, %v2427
        %v2452 = vadd.f32 %v2412, %v2423
        %v2453 = vadd.f32 %v2413, %v2427
        %v2454 = vadd.f32 %v2414, %v2423
        %v2455 = vadd.f32 %v2415, %v2427
        %v2456 = vadd.f32 %v2416, %v2423
        %v2457 = vadd.f32 %v2417, %v2427
        %v2458 = vmax.f32 %v2430, 0.0
        %v2459 = vmax.f32 %v2431, 0.0
        %v2460 = vmax.f32 %v2432, 0.0
        %v2461 = vmax.f32 %v2433, 0.0
        %v2462 = vmax.f32 %v2434, 0.0
        %v2463 = vmax.f32 %v2435, 0.0
        %v2464 = vmax.f32 %v2436, 0.0
        %v2465 = vmax.f32 %v2437, 0.0
        %v2466 = vmax.f32 %v2438, 0.0
        %v2467 = vmax.f32 %v2439, 0.0
        %v2468 = vmax.f32 %v2440, 0.0
        %v2469 = vmax.f32 %v2441, 0.0
        %v2470 = vmax.f32 %v2442, 0.0
        %v2471 = vmax.f32 %v2443, 0.0
        %v2472 = vmax.f32 %v2444, 0.0
        %v2473 = vmax.f32 %v2445, 0.0
        %v2474 = vmax.f32 %v2446, 0.0
        %v2475 = vmax.f32 %v2447, 0.0
        %v2476 = vmax.f32 %v2448, 0.0
        %v2477 = vmax.f32 %v2449, 0.0
        %v2478 = vmax.f32 %v2450, 0.0
        %v2479 = vmax.f32 %v2451, 0.0
        %v2480 = vmax.f32 %v2452, 0.0
        %v2481 = vmax.f32 %v2453, 0.0
        %v2482 = vmax.f32 %v2454, 0.0
        %v2483 = vmax.f32 %v2455, 0.0
        %v2484 = vmax.f32 %v2456, 0.0
        %v2485 = vmax.f32 %v2457, 0.0
        %v2486 = vmax.f32 %v2458, %v2459
        %v2487 = vmax.f32 %v2460, %v2461
        %v2488 = vmax.f32 %v2462, %v2463
        %v2489 = vmax.f32 %v2464, %v2465
        %v2490 = vmax.f32 %v2466, %v2467
        %v2491 = vmax.f32 %v2468, %v2469
        %v2492 = vmax.f32 %v2470, %v2471
        %v2493 = vmax.f32 %v2472, %v2473
        %v2494 = vmax.f32 %v2474, %v2475
        %v2495 = vmax.f32 %v2476, %v2477
        %v2496 = vmax.f32 %v2478, %v2479
        %v2497 = vmax.f32 %v2480, %v2481
        %v2498 = vmax.f32 %v2482, %v2483
        %v2499 = vmax.f32 %v2484, %v2485
        %v2500 = vmax.f32 %v2486, %v2487
        %v2501 = vmax.f32 %v2488, %v2489
        %v2502 = vmax.f32 %v2490, %v2491
        %v2503 = vmax.f32 %v2492, %v2493
        %v2504 = vmax.f32 %v2494, %v2495
        %v2505 = vmax.f32 %v2496, %v2497
        %v2506 = vmax.f32 %v2498, %v2499
        %v2507 = vld [vmem:[%s5] sm:$0xff]
        %v2508 = vld [vmem:[%s5 + $0x8] sm:$0xff]
        %v2509 = vld [vmem:[%s5 + $0x10] sm:$0xff]
        %v2510 = vld [vmem:[%s5 + $0x18] sm:$0xff]
        %v2511 = vld [vmem:[%s5 + $0x20] sm:$0xff]
        %v2512 = vld [vmem:[%s5 + $0x28] sm:$0xff]
        %v2513 = vld [vmem:[%s5 + $0x30] sm:$0xff]
        %v2514 = vld [vmem:[%s5 + $0x38] sm:$0xff]
        %v2515 = vld [vmem:[%s5 + $0x40] sm:$0xff]
        %v2516 = vld [vmem:[%s5 + $0x48] sm:$0xff]
        %v2517 = vld [vmem:[%s5 + $0x50] sm:$0xff]
        %v2518 = vld [vmem:[%s5 + $0x58] sm:$0xff]
        %v2519 = vld [vmem:[%s5 + $0x60] sm:$0xff]
        %v2520 = vld [vmem:[%s5 + $0x68] sm:$0xff]
        %v2521 = vld [vmem:[%s5 + $0x70] sm:$0xff]
        %v2522 = vld [vmem:[%s5 + $0x78] sm:$0xff]
        %s2523 = scalar_lea.vmem %s5, 128
        %v2524 = vld [vmem:[%s2523] sm:$0xff]
        %v2525 = vld [vmem:[%s2523 + $0x8] sm:$0xff]
        %v2526 = vld [vmem:[%s2523 + $0x10] sm:$0xff]
        %v2527 = vld [vmem:[%s2523 + $0x18] sm:$0xff]
        %v2528 = vld [vmem:[%s2523 + $0x20] sm:$0xff]
        %v2529 = vld [vmem:[%s2523 + $0x28] sm:$0xff]
        %v2530 = vld [vmem:[%s2523 + $0x30] sm:$0xff]
        %v2531 = vld [vmem:[%s2523 + $0x38] sm:$0xff]
        %v2532 = vld [vmem:[%s2523 + $0x40] sm:$0xff]
        %v2533 = vld [vmem:[%s2523 + $0x48] sm:$0xff]
        %v2534 = vld [vmem:[%s2523 + $0x50] sm:$0xff]
        %v2535 = vld [vmem:[%s2523 + $0x58] sm:$0xff]
        %v2536 = vld [vmem:[%s2523 + $0x60] sm:$0xff]
        %v2537 = vld [vmem:[%s2523 + $0x68] sm:$0xff]
        %v2538 = vld [vmem:[%s2523 + $0x70] sm:$0xff]
        %v2539 = vld [vmem:[%s2523 + $0x78] sm:$0xff]
        %2540 = vmatprep.subr.mxu0 0.0
        %2541 = vmatpush1.msra.mxu0 %v2539
        %2542 = vmatprep.subr.mxu0 0.0
        %2543 = vmatpush1.msra.mxu0 %v2538
        %2544 = vmatprep.subr.mxu0 0.0
        %2545 = vmatpush1.msra.mxu0 %v2537
        %2546 = vmatprep.subr.mxu0 0.0
        %2547 = vmatpush1.msra.mxu0 %v2536
        %2548 = vmatprep.subr.mxu0 0.0
        %2549 = vmatpush1.msra.mxu0 %v2535
        %2550 = vmatprep.subr.mxu0 0.0
        %2551 = vmatpush1.msra.mxu0 %v2534
        %2552 = vmatprep.subr.mxu0 0.0
        %2553 = vmatpush1.msra.mxu0 %v2533
        %2554 = vmatprep.subr.mxu0 0.0
        %2555 = vmatpush1.msra.mxu0 %v2532
        %2556 = vmatprep.subr.mxu0 0.0
        %2557 = vmatpush1.msra.mxu0 %v2531
        %2558 = vmatprep.subr.mxu0 0.0
        %2559 = vmatpush1.msra.mxu0 %v2530
        %2560 = vmatprep.subr.mxu0 0.0
        %2561 = vmatpush1.msra.mxu0 %v2529
        %2562 = vmatprep.subr.mxu0 0.0
        %2563 = vmatpush1.msra.mxu0 %v2528
        %2564 = vmatprep.subr.mxu0 0.0
        %2565 = vmatpush1.msra.mxu0 %v2527
        %2566 = vmatprep.subr.mxu0 0.0
        %2567 = vmatpush1.msra.mxu0 %v2526
        %2568 = vmatprep.subr.mxu0 0.0
        %2569 = vmatpush1.msra.mxu0 %v2525
        %2570 = vmatprep.subr.mxu0 0.0
        %2571 = vmatpush1.msra.mxu0 %v2524
        %2572 = vmatprep.subr.mxu0 0.0
        %2573 = vmatpush2.msra.mxu0 0.0
        %2574 = vmatprep.subr.mxu0 0.0
        %2575 = vmatpush2.msra.mxu0 0.0
        %2576 = vmatprep.subr.mxu0 0.0
        %2577 = vmatpush2.msra.mxu0 0.0
        %2578 = vmatprep.subr.mxu0 0.0
        %2579 = vmatpush2.msra.mxu0 0.0
        %2580 = vmatprep.subr.mxu0 0.0
        %2581 = vmatpush2.msra.mxu0 0.0
        %2582 = vmatprep.subr.mxu0 0.0
        %2583 = vmatpush2.msra.mxu0 0.0
        %2584 = vmatprep.subr.mxu0 0.0
        %2585 = vmatpush2.msra.mxu0 0.0
        %2586 = vmatprep.subr.mxu0 0.0
        %2587 = vmatpush2.msra.mxu0 0.0
        %2588 = vmatprep.subr.mxu0 0.0
        %2589 = vmatpush2.msra.mxu0 0.0
        %2590 = vmatprep.subr.mxu0 0.0
        %2591 = vmatpush2.msra.mxu0 0.0
        %2592 = vmatprep.subr.mxu0 0.0
        %2593 = vmatpush2.msra.mxu0 0.0
        %2594 = vmatprep.subr.mxu0 0.0
        %2595 = vmatpush2.msra.mxu0 0.0
        %2596 = vmatprep.subr.mxu0 0.0
        %2597 = vmatpush2.msra.mxu0 0.0
        %2598 = vmatprep.subr.mxu0 0.0
        %2599 = vmatpush2.msra.mxu0 0.0
        %2600 = vmatprep.subr.mxu0 0.0
        %2601 = vmatpush2.msra.mxu0 0.0
        %2602 = vmatprep.subr.mxu0 0.0
        %2603 = vmatpush2.msra.mxu0 0.0
        %2604 = vmatprep.mubr.f32.mxu0 0.0
        %2605 = vmatmul.mubr.f32.gmra.mxu0 %v2501
        %v2606 = vpop.f32.mrf.mxu0
        %v2607 = vadd.f32 0.0, %v2606
        %v2608 = vpop.f32.mrf.mxu0
        %2609 = vdwg.mxu0
        %2610 = vmatprep.subr.mxu0 0.0
        %2611 = vmatpush1.msra.mxu0 %v2522
        %2612 = vmatprep.subr.mxu0 0.0
        %2613 = vmatpush1.msra.mxu0 %v2521
        %2614 = vmatprep.subr.mxu0 0.0
        %2615 = vmatpush1.msra.mxu0 %v2520
        %2616 = vmatprep.subr.mxu0 0.0
        %2617 = vmatpush1.msra.mxu0 %v2519
        %2618 = vmatprep.subr.mxu0 0.0
        %2619 = vmatpush1.msra.mxu0 %v2518
        %2620 = vmatprep.subr.mxu0 0.0
        %2621 = vmatpush1.msra.mxu0 %v2517
        %2622 = vmatprep.subr.mxu0 0.0
        %2623 = vmatpush1.msra.mxu0 %v2516
        %2624 = vmatprep.subr.mxu0 0.0
        %2625 = vmatpush1.msra.mxu0 %v2515
        %2626 = vmatprep.subr.mxu0 0.0
        %2627 = vmatpush1.msra.mxu0 %v2514
        %2628 = vmatprep.subr.mxu0 0.0
        %2629 = vmatpush1.msra.mxu0 %v2513
        %2630 = vmatprep.subr.mxu0 0.0
        %2631 = vmatpush1.msra.mxu0 %v2512
        %2632 = vmatprep.subr.mxu0 0.0
        %2633 = vmatpush1.msra.mxu0 %v2511
        %2634 = vmatprep.subr.mxu0 0.0
        %2635 = vmatpush1.msra.mxu0 %v2510
        %2636 = vmatprep.subr.mxu0 0.0
        %2637 = vmatpush1.msra.mxu0 %v2509
        %2638 = vmatprep.subr.mxu0 0.0
        %2639 = vmatpush1.msra.mxu0 %v2508
        %2640 = vmatprep.subr.mxu0 0.0
        %2641 = vmatpush1.msra.mxu0 %v2507
        %2642 = vmatprep.subr.mxu0 0.0
        %2643 = vmatpush2.msra.mxu0 0.0
        %2644 = vmatprep.subr.mxu0 0.0
        %2645 = vmatpush2.msra.mxu0 0.0
        %2646 = vmatprep.subr.mxu0 0.0
        %2647 = vmatpush2.msra.mxu0 0.0
        %2648 = vmatprep.subr.mxu0 0.0
        %2649 = vmatpush2.msra.mxu0 0.0
        %2650 = vmatprep.subr.mxu0 0.0
        %2651 = vmatpush2.msra.mxu0 0.0
        %2652 = vmatprep.subr.mxu0 0.0
        %2653 = vmatpush2.msra.mxu0 0.0
        %2654 = vmatprep.subr.mxu0 0.0
        %2655 = vmatpush2.msra.mxu0 0.0
        %2656 = vmatprep.subr.mxu0 0.0
        %2657 = vmatpush2.msra.mxu0 0.0
        %2658 = vmatprep.subr.mxu0 0.0
        %2659 = vmatpush2.msra.mxu0 0.0
        %2660 = vmatprep.subr.mxu0 0.0
        %2661 = vmatpush2.msra.mxu0 0.0
        %2662 = vmatprep.subr.mxu0 0.0
        %2663 = vmatpush2.msra.mxu0 0.0
        %2664 = vmatprep.subr.mxu0 0.0
        %2665 = vmatpush2.msra.mxu0 0.0
        %2666 = vmatprep.subr.mxu0 0.0
        %2667 = vmatpush2.msra.mxu0 0.0
        %2668 = vmatprep.subr.mxu0 0.0
        %2669 = vmatpush2.msra.mxu0 0.0
        %2670 = vmatprep.subr.mxu0 0.0
        %2671 = vmatpush2.msra.mxu0 0.0
        %2672 = vmatprep.subr.mxu0 0.0
        %2673 = vmatpush2.msra.mxu0 0.0
        %2674 = vmatprep.mubr.f32.mxu0 0.0
        %2675 = vmatmul.mubr.f32.gmra.mxu0 %v2500
        %v2676 = vpop.f32.mrf.mxu0
        %v2677 = vadd.f32 %v2607, %v2676
        %v2678 = vpop.f32.mrf.mxu0
        %2679 = vdwg.mxu0
        %s2680 = scalar_lea.vmem %s5, 256
        %v2681 = vld [vmem:[%s2680] sm:$0xff]
        %v2682 = vld [vmem:[%s2680 + $0x8] sm:$0xff]
        %v2683 = vld [vmem:[%s2680 + $0x10] sm:$0xff]
        %v2684 = vld [vmem:[%s2680 + $0x18] sm:$0xff]
        %v2685 = vld [vmem:[%s2680 + $0x20] sm:$0xff]
        %v2686 = vld [vmem:[%s2680 + $0x28] sm:$0xff]
        %v2687 = vld [vmem:[%s2680 + $0x30] sm:$0xff]
        %v2688 = vld [vmem:[%s2680 + $0x38] sm:$0xff]
        %v2689 = vld [vmem:[%s2680 + $0x40] sm:$0xff]
        %v2690 = vld [vmem:[%s2680 + $0x48] sm:$0xff]
        %v2691 = vld [vmem:[%s2680 + $0x50] sm:$0xff]
        %v2692 = vld [vmem:[%s2680 + $0x58] sm:$0xff]
        %v2693 = vld [vmem:[%s2680 + $0x60] sm:$0xff]
        %v2694 = vld [vmem:[%s2680 + $0x68] sm:$0xff]
        %v2695 = vld [vmem:[%s2680 + $0x70] sm:$0xff]
        %v2696 = vld [vmem:[%s2680 + $0x78] sm:$0xff]
        %2697 = vmatprep.subr.mxu0 0.0
        %2698 = vmatpush1.msra.mxu0 %v2696
        %2699 = vmatprep.subr.mxu0 0.0
        %2700 = vmatpush1.msra.mxu0 %v2695
        %2701 = vmatprep.subr.mxu0 0.0
        %2702 = vmatpush1.msra.mxu0 %v2694
        %2703 = vmatprep.subr.mxu0 0.0
        %2704 = vmatpush1.msra.mxu0 %v2693
        %2705 = vmatprep.subr.mxu0 0.0
        %2706 = vmatpush1.msra.mxu0 %v2692
        %2707 = vmatprep.subr.mxu0 0.0
        %2708 = vmatpush1.msra.mxu0 %v2691
        %2709 = vmatprep.subr.mxu0 0.0
        %2710 = vmatpush1.msra.mxu0 %v2690
        %2711 = vmatprep.subr.mxu0 0.0
        %2712 = vmatpush1.msra.mxu0 %v2689
        %2713 = vmatprep.subr.mxu0 0.0
        %2714 = vmatpush1.msra.mxu0 %v2688
        %2715 = vmatprep.subr.mxu0 0.0
        %2716 = vmatpush1.msra.mxu0 %v2687
        %2717 = vmatprep.subr.mxu0 0.0
        %2718 = vmatpush1.msra.mxu0 %v2686
        %2719 = vmatprep.subr.mxu0 0.0
        %2720 = vmatpush1.msra.mxu0 %v2685
        %2721 = vmatprep.subr.mxu0 0.0
        %2722 = vmatpush1.msra.mxu0 %v2684
        %2723 = vmatprep.subr.mxu0 0.0
        %2724 = vmatpush1.msra.mxu0 %v2683
        %2725 = vmatprep.subr.mxu0 0.0
        %2726 = vmatpush1.msra.mxu0 %v2682
        %2727 = vmatprep.subr.mxu0 0.0
        %2728 = vmatpush1.msra.mxu0 %v2681
        %2729 = vmatprep.subr.mxu0 0.0
        %2730 = vmatpush2.msra.mxu0 0.0
        %2731 = vmatprep.subr.mxu0 0.0
        %2732 = vmatpush2.msra.mxu0 0.0
        %2733 = vmatprep.subr.mxu0 0.0
        %2734 = vmatpush2.msra.mxu0 0.0
        %2735 = vmatprep.subr.mxu0 0.0
        %2736 = vmatpush2.msra.mxu0 0.0
        %2737 = vmatprep.subr.mxu0 0.0
        %2738 = vmatpush2.msra.mxu0 0.0
        %2739 = vmatprep.subr.mxu0 0.0
        %2740 = vmatpush2.msra.mxu0 0.0
        %2741 = vmatprep.subr.mxu0 0.0
        %2742 = vmatpush2.msra.mxu0 0.0
        %2743 = vmatprep.subr.mxu0 0.0
        %2744 = vmatpush2.msra.mxu0 0.0
        %2745 = vmatprep.subr.mxu0 0.0
        %2746 = vmatpush2.msra.mxu0 0.0
        %2747 = vmatprep.subr.mxu0 0.0
        %2748 = vmatpush2.msra.mxu0 0.0
        %2749 = vmatprep.subr.mxu0 0.0
        %2750 = vmatpush2.msra.mxu0 0.0
        %2751 = vmatprep.subr.mxu0 0.0
        %2752 = vmatpush2.msra.mxu0 0.0
        %2753 = vmatprep.subr.mxu0 0.0
        %2754 = vmatpush2.msra.mxu0 0.0
        %2755 = vmatprep.subr.mxu0 0.0
        %2756 = vmatpush2.msra.mxu0 0.0
        %2757 = vmatprep.subr.mxu0 0.0
        %2758 = vmatpush2.msra.mxu0 0.0
        %2759 = vmatprep.subr.mxu0 0.0
        %2760 = vmatpush2.msra.mxu0 0.0
        %2761 = vmatprep.mubr.f32.mxu0 0.0
        %2762 = vmatmul.mubr.f32.gmra.mxu0 %v2502
        %v2763 = vpop.f32.mrf.mxu0
        %v2764 = vadd.f32 0.0, %v2763
        %v2765 = vpop.f32.mrf.mxu0
        %2766 = vdwg.mxu0
        %v2767 = vadd.f32 %v2677, %v2764
        %s2768 = scalar_lea.vmem %s5, 384
        %v2769 = vld [vmem:[%s2768] sm:$0xff]
        %v2770 = vld [vmem:[%s2768 + $0x8] sm:$0xff]
        %v2771 = vld [vmem:[%s2768 + $0x10] sm:$0xff]
        %v2772 = vld [vmem:[%s2768 + $0x18] sm:$0xff]
        %v2773 = vld [vmem:[%s2768 + $0x20] sm:$0xff]
        %v2774 = vld [vmem:[%s2768 + $0x28] sm:$0xff]
        %v2775 = vld [vmem:[%s2768 + $0x30] sm:$0xff]
        %v2776 = vld [vmem:[%s2768 + $0x38] sm:$0xff]
        %v2777 = vld [vmem:[%s2768 + $0x40] sm:$0xff]
        %v2778 = vld [vmem:[%s2768 + $0x48] sm:$0xff]
        %v2779 = vld [vmem:[%s2768 + $0x50] sm:$0xff]
        %v2780 = vld [vmem:[%s2768 + $0x58] sm:$0xff]
        %v2781 = vld [vmem:[%s2768 + $0x60] sm:$0xff]
        %v2782 = vld [vmem:[%s2768 + $0x68] sm:$0xff]
        %v2783 = vld [vmem:[%s2768 + $0x70] sm:$0xff]
        %v2784 = vld [vmem:[%s2768 + $0x78] sm:$0xff]
        %2785 = vmatprep.subr.mxu0 0.0
        %2786 = vmatpush1.msra.mxu0 %v2784
        %2787 = vmatprep.subr.mxu0 0.0
        %2788 = vmatpush1.msra.mxu0 %v2783
        %2789 = vmatprep.subr.mxu0 0.0
        %2790 = vmatpush1.msra.mxu0 %v2782
        %2791 = vmatprep.subr.mxu0 0.0
        %2792 = vmatpush1.msra.mxu0 %v2781
        %2793 = vmatprep.subr.mxu0 0.0
        %2794 = vmatpush1.msra.mxu0 %v2780
        %2795 = vmatprep.subr.mxu0 0.0
        %2796 = vmatpush1.msra.mxu0 %v2779
        %2797 = vmatprep.subr.mxu0 0.0
        %2798 = vmatpush1.msra.mxu0 %v2778
        %2799 = vmatprep.subr.mxu0 0.0
        %2800 = vmatpush1.msra.mxu0 %v2777
        %2801 = vmatprep.subr.mxu0 0.0
        %2802 = vmatpush1.msra.mxu0 %v2776
        %2803 = vmatprep.subr.mxu0 0.0
        %2804 = vmatpush1.msra.mxu0 %v2775
        %2805 = vmatprep.subr.mxu0 0.0
        %2806 = vmatpush1.msra.mxu0 %v2774
        %2807 = vmatprep.subr.mxu0 0.0
        %2808 = vmatpush1.msra.mxu0 %v2773
        %2809 = vmatprep.subr.mxu0 0.0
        %2810 = vmatpush1.msra.mxu0 %v2772
        %2811 = vmatprep.subr.mxu0 0.0
        %2812 = vmatpush1.msra.mxu0 %v2771
        %2813 = vmatprep.subr.mxu0 0.0
        %2814 = vmatpush1.msra.mxu0 %v2770
        %2815 = vmatprep.subr.mxu0 0.0
        %2816 = vmatpush1.msra.mxu0 %v2769
        %2817 = vmatprep.subr.mxu0 0.0
        %2818 = vmatpush2.msra.mxu0 0.0
        %2819 = vmatprep.subr.mxu0 0.0
        %2820 = vmatpush2.msra.mxu0 0.0
        %2821 = vmatprep.subr.mxu0 0.0
        %2822 = vmatpush2.msra.mxu0 0.0
        %2823 = vmatprep.subr.mxu0 0.0
        %2824 = vmatpush2.msra.mxu0 0.0
        %2825 = vmatprep.subr.mxu0 0.0
        %2826 = vmatpush2.msra.mxu0 0.0
        %2827 = vmatprep.subr.mxu0 0.0
        %2828 = vmatpush2.msra.mxu0 0.0
        %2829 = vmatprep.subr.mxu0 0.0
        %2830 = vmatpush2.msra.mxu0 0.0
        %2831 = vmatprep.subr.mxu0 0.0
        %2832 = vmatpush2.msra.mxu0 0.0
        %2833 = vmatprep.subr.mxu0 0.0
        %2834 = vmatpush2.msra.mxu0 0.0
        %2835 = vmatprep.subr.mxu0 0.0
        %2836 = vmatpush2.msra.mxu0 0.0
        %2837 = vmatprep.subr.mxu0 0.0
        %2838 = vmatpush2.msra.mxu0 0.0
        %2839 = vmatprep.subr.mxu0 0.0
        %2840 = vmatpush2.msra.mxu0 0.0
        %2841 = vmatprep.subr.mxu0 0.0
        %2842 = vmatpush2.msra.mxu0 0.0
        %2843 = vmatprep.subr.mxu0 0.0
        %2844 = vmatpush2.msra.mxu0 0.0
        %2845 = vmatprep.subr.mxu0 0.0
        %2846 = vmatpush2.msra.mxu0 0.0
        %2847 = vmatprep.subr.mxu0 0.0
        %2848 = vmatpush2.msra.mxu0 0.0
        %2849 = vmatprep.mubr.f32.mxu0 0.0
        %2850 = vmatmul.mubr.f32.gmra.mxu0 %v2503
        %v2851 = vpop.f32.mrf.mxu0
        %v2852 = vadd.f32 0.0, %v2851
        %v2853 = vpop.f32.mrf.mxu0
        %2854 = vdwg.mxu0
        %v2855 = vadd.f32 %v2767, %v2852
        %s2856 = scalar_lea.vmem %s5, 512
        %v2857 = vld [vmem:[%s2856] sm:$0xff]
        %v2858 = vld [vmem:[%s2856 + $0x8] sm:$0xff]
        %v2859 = vld [vmem:[%s2856 + $0x10] sm:$0xff]
        %v2860 = vld [vmem:[%s2856 + $0x18] sm:$0xff]
        %v2861 = vld [vmem:[%s2856 + $0x20] sm:$0xff]
        %v2862 = vld [vmem:[%s2856 + $0x28] sm:$0xff]
        %v2863 = vld [vmem:[%s2856 + $0x30] sm:$0xff]
        %v2864 = vld [vmem:[%s2856 + $0x38] sm:$0xff]
        %v2865 = vld [vmem:[%s2856 + $0x40] sm:$0xff]
        %v2866 = vld [vmem:[%s2856 + $0x48] sm:$0xff]
        %v2867 = vld [vmem:[%s2856 + $0x50] sm:$0xff]
        %v2868 = vld [vmem:[%s2856 + $0x58] sm:$0xff]
        %v2869 = vld [vmem:[%s2856 + $0x60] sm:$0xff]
        %v2870 = vld [vmem:[%s2856 + $0x68] sm:$0xff]
        %v2871 = vld [vmem:[%s2856 + $0x70] sm:$0xff]
        %v2872 = vld [vmem:[%s2856 + $0x78] sm:$0xff]
        %2873 = vmatprep.subr.mxu0 0.0
        %2874 = vmatpush1.msra.mxu0 %v2872
        %2875 = vmatprep.subr.mxu0 0.0
        %2876 = vmatpush1.msra.mxu0 %v2871
        %2877 = vmatprep.subr.mxu0 0.0
        %2878 = vmatpush1.msra.mxu0 %v2870
        %2879 = vmatprep.subr.mxu0 0.0
        %2880 = vmatpush1.msra.mxu0 %v2869
        %2881 = vmatprep.subr.mxu0 0.0
        %2882 = vmatpush1.msra.mxu0 %v2868
        %2883 = vmatprep.subr.mxu0 0.0
        %2884 = vmatpush1.msra.mxu0 %v2867
        %2885 = vmatprep.subr.mxu0 0.0
        %2886 = vmatpush1.msra.mxu0 %v2866
        %2887 = vmatprep.subr.mxu0 0.0
        %2888 = vmatpush1.msra.mxu0 %v2865
        %2889 = vmatprep.subr.mxu0 0.0
        %2890 = vmatpush1.msra.mxu0 %v2864
        %2891 = vmatprep.subr.mxu0 0.0
        %2892 = vmatpush1.msra.mxu0 %v2863
        %2893 = vmatprep.subr.mxu0 0.0
        %2894 = vmatpush1.msra.mxu0 %v2862
        %2895 = vmatprep.subr.mxu0 0.0
        %2896 = vmatpush1.msra.mxu0 %v2861
        %2897 = vmatprep.subr.mxu0 0.0
        %2898 = vmatpush1.msra.mxu0 %v2860
        %2899 = vmatprep.subr.mxu0 0.0
        %2900 = vmatpush1.msra.mxu0 %v2859
        %2901 = vmatprep.subr.mxu0 0.0
        %2902 = vmatpush1.msra.mxu0 %v2858
        %2903 = vmatprep.subr.mxu0 0.0
        %2904 = vmatpush1.msra.mxu0 %v2857
        %2905 = vmatprep.subr.mxu0 0.0
        %2906 = vmatpush2.msra.mxu0 0.0
        %2907 = vmatprep.subr.mxu0 0.0
        %2908 = vmatpush2.msra.mxu0 0.0
        %2909 = vmatprep.subr.mxu0 0.0
        %2910 = vmatpush2.msra.mxu0 0.0
        %2911 = vmatprep.subr.mxu0 0.0
        %2912 = vmatpush2.msra.mxu0 0.0
        %2913 = vmatprep.subr.mxu0 0.0
        %2914 = vmatpush2.msra.mxu0 0.0
        %2915 = vmatprep.subr.mxu0 0.0
        %2916 = vmatpush2.msra.mxu0 0.0
        %2917 = vmatprep.subr.mxu0 0.0
        %2918 = vmatpush2.msra.mxu0 0.0
        %2919 = vmatprep.subr.mxu0 0.0
        %2920 = vmatpush2.msra.mxu0 0.0
        %2921 = vmatprep.subr.mxu0 0.0
        %2922 = vmatpush2.msra.mxu0 0.0
        %2923 = vmatprep.subr.mxu0 0.0
        %2924 = vmatpush2.msra.mxu0 0.0
        %2925 = vmatprep.subr.mxu0 0.0
        %2926 = vmatpush2.msra.mxu0 0.0
        %2927 = vmatprep.subr.mxu0 0.0
        %2928 = vmatpush2.msra.mxu0 0.0
        %2929 = vmatprep.subr.mxu0 0.0
        %2930 = vmatpush2.msra.mxu0 0.0
        %2931 = vmatprep.subr.mxu0 0.0
        %2932 = vmatpush2.msra.mxu0 0.0
        %2933 = vmatprep.subr.mxu0 0.0
        %2934 = vmatpush2.msra.mxu0 0.0
        %2935 = vmatprep.subr.mxu0 0.0
        %2936 = vmatpush2.msra.mxu0 0.0
        %2937 = vmatprep.mubr.f32.mxu0 0.0
        %2938 = vmatmul.mubr.f32.gmra.mxu0 %v2504
        %v2939 = vpop.f32.mrf.mxu0
        %v2940 = vadd.f32 0.0, %v2939
        %v2941 = vpop.f32.mrf.mxu0
        %2942 = vdwg.mxu0
        %v2943 = vadd.f32 %v2855, %v2940
        %s2944 = scalar_lea.vmem %s5, 640
        %v2945 = vld [vmem:[%s2944] sm:$0xff]
        %v2946 = vld [vmem:[%s2944 + $0x8] sm:$0xff]
        %v2947 = vld [vmem:[%s2944 + $0x10] sm:$0xff]
        %v2948 = vld [vmem:[%s2944 + $0x18] sm:$0xff]
        %v2949 = vld [vmem:[%s2944 + $0x20] sm:$0xff]
        %v2950 = vld [vmem:[%s2944 + $0x28] sm:$0xff]
        %v2951 = vld [vmem:[%s2944 + $0x30] sm:$0xff]
        %v2952 = vld [vmem:[%s2944 + $0x38] sm:$0xff]
        %v2953 = vld [vmem:[%s2944 + $0x40] sm:$0xff]
        %v2954 = vld [vmem:[%s2944 + $0x48] sm:$0xff]
        %v2955 = vld [vmem:[%s2944 + $0x50] sm:$0xff]
        %v2956 = vld [vmem:[%s2944 + $0x58] sm:$0xff]
        %v2957 = vld [vmem:[%s2944 + $0x60] sm:$0xff]
        %v2958 = vld [vmem:[%s2944 + $0x68] sm:$0xff]
        %v2959 = vld [vmem:[%s2944 + $0x70] sm:$0xff]
        %v2960 = vld [vmem:[%s2944 + $0x78] sm:$0xff]
        %2961 = vmatprep.subr.mxu0 0.0
        %2962 = vmatpush1.msra.mxu0 %v2960
        %2963 = vmatprep.subr.mxu0 0.0
        %2964 = vmatpush1.msra.mxu0 %v2959
        %2965 = vmatprep.subr.mxu0 0.0
        %2966 = vmatpush1.msra.mxu0 %v2958
        %2967 = vmatprep.subr.mxu0 0.0
        %2968 = vmatpush1.msra.mxu0 %v2957
        %2969 = vmatprep.subr.mxu0 0.0
        %2970 = vmatpush1.msra.mxu0 %v2956
        %2971 = vmatprep.subr.mxu0 0.0
        %2972 = vmatpush1.msra.mxu0 %v2955
        %2973 = vmatprep.subr.mxu0 0.0
        %2974 = vmatpush1.msra.mxu0 %v2954
        %2975 = vmatprep.subr.mxu0 0.0
        %2976 = vmatpush1.msra.mxu0 %v2953
        %2977 = vmatprep.subr.mxu0 0.0
        %2978 = vmatpush1.msra.mxu0 %v2952
        %2979 = vmatprep.subr.mxu0 0.0
        %2980 = vmatpush1.msra.mxu0 %v2951
        %2981 = vmatprep.subr.mxu0 0.0
        %2982 = vmatpush1.msra.mxu0 %v2950
        %2983 = vmatprep.subr.mxu0 0.0
        %2984 = vmatpush1.msra.mxu0 %v2949
        %2985 = vmatprep.subr.mxu0 0.0
        %2986 = vmatpush1.msra.mxu0 %v2948
        %2987 = vmatprep.subr.mxu0 0.0
        %2988 = vmatpush1.msra.mxu0 %v2947
        %2989 = vmatprep.subr.mxu0 0.0
        %2990 = vmatpush1.msra.mxu0 %v2946
        %2991 = vmatprep.subr.mxu0 0.0
        %2992 = vmatpush1.msra.mxu0 %v2945
        %2993 = vmatprep.subr.mxu0 0.0
        %2994 = vmatpush2.msra.mxu0 0.0
        %2995 = vmatprep.subr.mxu0 0.0
        %2996 = vmatpush2.msra.mxu0 0.0
        %2997 = vmatprep.subr.mxu0 0.0
        %2998 = vmatpush2.msra.mxu0 0.0
        %2999 = vmatprep.subr.mxu0 0.0
        %3000 = vmatpush2.msra.mxu0 0.0
        %3001 = vmatprep.subr.mxu0 0.0
        %3002 = vmatpush2.msra.mxu0 0.0
        %3003 = vmatprep.subr.mxu0 0.0
        %3004 = vmatpush2.msra.mxu0 0.0
        %3005 = vmatprep.subr.mxu0 0.0
        %3006 = vmatpush2.msra.mxu0 0.0
        %3007 = vmatprep.subr.mxu0 0.0
        %3008 = vmatpush2.msra.mxu0 0.0
        %3009 = vmatprep.subr.mxu0 0.0
        %3010 = vmatpush2.msra.mxu0 0.0
        %3011 = vmatprep.subr.mxu0 0.0
        %3012 = vmatpush2.msra.mxu0 0.0
        %3013 = vmatprep.subr.mxu0 0.0
        %3014 = vmatpush2.msra.mxu0 0.0
        %3015 = vmatprep.subr.mxu0 0.0
        %3016 = vmatpush2.msra.mxu0 0.0
        %3017 = vmatprep.subr.mxu0 0.0
        %3018 = vmatpush2.msra.mxu0 0.0
        %3019 = vmatprep.subr.mxu0 0.0
        %3020 = vmatpush2.msra.mxu0 0.0
        %3021 = vmatprep.subr.mxu0 0.0
        %3022 = vmatpush2.msra.mxu0 0.0
        %3023 = vmatprep.subr.mxu0 0.0
        %3024 = vmatpush2.msra.mxu0 0.0
        %3025 = vmatprep.mubr.f32.mxu0 0.0
        %3026 = vmatmul.mubr.f32.gmra.mxu0 %v2505
        %v3027 = vpop.f32.mrf.mxu0
        %v3028 = vadd.f32 0.0, %v3027
        %v3029 = vpop.f32.mrf.mxu0
        %3030 = vdwg.mxu0
        %v3031 = vadd.f32 %v2943, %v3028
        %s3032 = scalar_lea.vmem %s5, 768
        %v3033 = vld [vmem:[%s3032] sm:$0xff]
        %v3034 = vld [vmem:[%s3032 + $0x8] sm:$0xff]
        %v3035 = vld [vmem:[%s3032 + $0x10] sm:$0xff]
        %v3036 = vld [vmem:[%s3032 + $0x18] sm:$0xff]
        %v3037 = vld [vmem:[%s3032 + $0x20] sm:$0xff]
        %v3038 = vld [vmem:[%s3032 + $0x28] sm:$0xff]
        %v3039 = vld [vmem:[%s3032 + $0x30] sm:$0xff]
        %v3040 = vld [vmem:[%s3032 + $0x38] sm:$0xff]
        %v3041 = vld [vmem:[%s3032 + $0x40] sm:$0xff]
        %v3042 = vld [vmem:[%s3032 + $0x48] sm:$0xff]
        %v3043 = vld [vmem:[%s3032 + $0x50] sm:$0xff]
        %v3044 = vld [vmem:[%s3032 + $0x58] sm:$0xff]
        %v3045 = vld [vmem:[%s3032 + $0x60] sm:$0xff]
        %v3046 = vld [vmem:[%s3032 + $0x68] sm:$0xff]
        %v3047 = vld [vmem:[%s3032 + $0x70] sm:$0xff]
        %v3048 = vld [vmem:[%s3032 + $0x78] sm:$0xff]
        %3049 = vmatprep.subr.mxu0 0.0
        %3050 = vmatpush1.msra.mxu0 %v3048
        %3051 = vmatprep.subr.mxu0 0.0
        %3052 = vmatpush1.msra.mxu0 %v3047
        %3053 = vmatprep.subr.mxu0 0.0
        %3054 = vmatpush1.msra.mxu0 %v3046
        %3055 = vmatprep.subr.mxu0 0.0
        %3056 = vmatpush1.msra.mxu0 %v3045
        %3057 = vmatprep.subr.mxu0 0.0
        %3058 = vmatpush1.msra.mxu0 %v3044
        %3059 = vmatprep.subr.mxu0 0.0
        %3060 = vmatpush1.msra.mxu0 %v3043
        %3061 = vmatprep.subr.mxu0 0.0
        %3062 = vmatpush1.msra.mxu0 %v3042
        %3063 = vmatprep.subr.mxu0 0.0
        %3064 = vmatpush1.msra.mxu0 %v3041
        %3065 = vmatprep.subr.mxu0 0.0
        %3066 = vmatpush1.msra.mxu0 %v3040
        %3067 = vmatprep.subr.mxu0 0.0
        %3068 = vmatpush1.msra.mxu0 %v3039
        %3069 = vmatprep.subr.mxu0 0.0
        %3070 = vmatpush1.msra.mxu0 %v3038
        %3071 = vmatprep.subr.mxu0 0.0
        %3072 = vmatpush1.msra.mxu0 %v3037
        %3073 = vmatprep.subr.mxu0 0.0
        %3074 = vmatpush1.msra.mxu0 %v3036
        %3075 = vmatprep.subr.mxu0 0.0
        %3076 = vmatpush1.msra.mxu0 %v3035
        %3077 = vmatprep.subr.mxu0 0.0
        %3078 = vmatpush1.msra.mxu0 %v3034
        %3079 = vmatprep.subr.mxu0 0.0
        %3080 = vmatpush1.msra.mxu0 %v3033
        %3081 = vmatprep.subr.mxu0 0.0
        %3082 = vmatpush2.msra.mxu0 0.0
        %3083 = vmatprep.subr.mxu0 0.0
        %3084 = vmatpush2.msra.mxu0 0.0
        %3085 = vmatprep.subr.mxu0 0.0
        %3086 = vmatpush2.msra.mxu0 0.0
        %3087 = vmatprep.subr.mxu0 0.0
        %3088 = vmatpush2.msra.mxu0 0.0
        %3089 = vmatprep.subr.mxu0 0.0
        %3090 = vmatpush2.msra.mxu0 0.0
        %3091 = vmatprep.subr.mxu0 0.0
        %3092 = vmatpush2.msra.mxu0 0.0
        %3093 = vmatprep.subr.mxu0 0.0
        %3094 = vmatpush2.msra.mxu0 0.0
        %3095 = vmatprep.subr.mxu0 0.0
        %3096 = vmatpush2.msra.mxu0 0.0
        %3097 = vmatprep.subr.mxu0 0.0
        %3098 = vmatpush2.msra.mxu0 0.0
        %3099 = vmatprep.subr.mxu0 0.0
        %3100 = vmatpush2.msra.mxu0 0.0
        %3101 = vmatprep.subr.mxu0 0.0
        %3102 = vmatpush2.msra.mxu0 0.0
        %3103 = vmatprep.subr.mxu0 0.0
        %3104 = vmatpush2.msra.mxu0 0.0
        %3105 = vmatprep.subr.mxu0 0.0
        %3106 = vmatpush2.msra.mxu0 0.0
        %3107 = vmatprep.subr.mxu0 0.0
        %3108 = vmatpush2.msra.mxu0 0.0
        %3109 = vmatprep.subr.mxu0 0.0
        %3110 = vmatpush2.msra.mxu0 0.0
        %3111 = vmatprep.subr.mxu0 0.0
        %3112 = vmatpush2.msra.mxu0 0.0
        %3113 = vmatprep.mubr.f32.mxu0 0.0
        %3114 = vmatmul.mubr.f32.gmra.mxu0 %v2506
        %v3115 = vpop.f32.mrf.mxu0
        %v3116 = vadd.f32 0.0, %v3115
        %v3117 = vpop.f32.mrf.mxu0
        %3118 = vdwg.mxu0
        %v3119 = vadd.f32 %v3031, %v3116
        %v3120 = vld [vmem:[%s6] sm:$0x1]
        %v3122 = vlaneseq
        %v3123 = vshrl.u32 %v3122, 7
        %v3124 = vsub.s32 0, %v3123
        %v3125 = vrot.slane %v3120, %v3124
        %v3127 = vadd.f32 %v3119, %v3125
        %vm3128 = vcmask 80896
        %3129 = vst.msk [vmem:[%s419] sm:$0xff] %vm3128, %v3127
        %p3130 = scmp.lt.s32.totalorder %s18, 3
        %s3131 = scalar_select %p3130, %s18, 3
        %s3132 = smul.addr %s3131, 8
        %s3133 = scalar_lea.vmem %s7, %s3132
        // Predicated region
        $region87: #{cnn_forward.1} parent=81 // pred_check
          %p3134 = pneg %p188
        $region88: #{cnn_forward.1} parent=81 // pred_check_branch
          %3136 = sbr.rel (%p3134) target = $region90
        $region89: #{cnn_forward.1} parent=81 // pred_region
          _
        $region90: #{cnn_forward.1} parent=81 // pred_fallthru
          _
      $region82: #{cnn_forward.1} parent=5 // pred_fallthru
        _
      %p3137 = scmp.le.s32.totalorder 2, %s13
      // Predicated region
      $region91: #{cnn_forward.1} parent=5 // pred_check
        %p3138 = pneg %p3137
      $region92: #{cnn_forward.1} parent=5 // pred_check_branch
        %3140 = sbr.rel (%p3138) target = $region94
      $region93: #{cnn_forward.1} parent=5 // pred_region
        %s3141 = ssub.s32 %s13, 2
        // Predicated region
        $region95: #{cnn_forward.1} parent=93 // pred_check
          %p3142 = pneg %p194
        $region96: #{cnn_forward.1} parent=93 // pred_check_branch
          %3144 = sbr.rel (%p3142) target = $region98
        $region97: #{cnn_forward.1} parent=93 // pred_region
          %p3145 = scmp.lt.s32.totalorder %s19, 3
          %s3146 = scalar_select %p3145, %s19, 3
          %s3147 = smul.addr %s3146, 8
          %s3148 = scalar_lea.vmem %s7, %s3147
        $region98: #{cnn_forward.1} parent=93 // pred_fallthru
          _
      $region94: #{cnn_forward.1} parent=5 // pred_fallthru
        _
    $region6: #{cnn_forward.1} parent=1 // loop_footer
      %s17 = sadd.s32 1, %s13
    $region7: #{cnn_forward.1} parent=1 // loop_footer_branch
      %12 = sbr.rel target = $region3
    $region8: #{cnn_forward.1} parent=1 // loop_exit
      _

</llo_original>
